<compile_context>
chip_gen: v5e
topology: v5e:2x2
jax: 0.10.0
libtpu: 0.0.40
codegen_flags: <defaults>
</compile_context>

<pallas_src>
import functools

import jax
import jax.numpy as jnp
from jax.experimental import pallas as pl
from jax.experimental.pallas import tpu as pltpu

LANE = 128


def _round_up(x, m):
    return ((x + m - 1) // m) * m


# ---------------------------------------------------------------------------
# Fused two-phase kernel:  phase 0 = conv1 + ReLU -> H scratch,  phase 1 = conv2
# ---------------------------------------------------------------------------
def _rgcn_kernel(a_ref, x_ref, w1_ref, w1root_ref, b1_ref,
                 w2_ref, w2root_ref, b2_ref, o_ref,
                 proj_ref, h_ref, *,
                 n_pad: int, tile_n: int, num_rels: int, hp: int, op: int):
    phase = pl.program_id(0)                       # 0: layer 1 (+ReLU), 1: layer 2
    tile = pl.program_id(1)                        # output-row tile
    row0 = pl.multiple_of(tile * tile_n, tile_n)

    # ---- once per phase (tile 0): build stacked per-relation projections -------
    # proj_ref rows r*n_pad:(r+1)*n_pad = X @ W1_r (phase 0)  /  H @ W2_r (phase 1)
    @pl.when(jnp.logical_and(phase == 0, tile == 0))
    def _():
        x = x_ref[...]                                          # [n_pad, Fin_p] bf16
        for r in range(num_rels):                               # static unroll (R small)
            xw = jnp.dot(x, w1_ref[r], preferred_element_type=jnp.float32)
            proj_ref[r * n_pad:(r + 1) * n_pad, :hp] = xw.astype(proj_ref.dtype)

    @pl.when(jnp.logical_and(phase == 1, tile == 0))
    def _():
        h_all = h_ref[...]                                      # [n_pad, HP] bf16
        for r in range(num_rels):
            hw = jnp.dot(h_all, w2_ref[r], preferred_element_type=jnp.float32)
            proj_ref[r * n_pad:(r + 1) * n_pad, :op] = hw.astype(proj_ref.dtype)

    a_tile = a_ref[...]                                         # [tile_n, R*n_pad] bf16

    # ---- phase 0: layer 1 for this row tile -> H scratch ------------------------
    @pl.when(phase == 0)
    def _():
        agg = jnp.dot(a_tile, proj_ref[:, :hp],
                      preferred_element_type=jnp.float32)       # [tile_n, HP] f32
        x_t = x_ref[pl.ds(row0, tile_n), :]
        root = jnp.dot(x_t, w1root_ref[...], preferred_element_type=jnp.float32)
        h = jnp.maximum(agg + root + b1_ref[...], 0.0)          # ReLU (padded lanes stay 0)
        h_ref[pl.ds(row0, tile_n), :] = h.astype(h_ref.dtype)
        o_ref[...] = jnp.zeros_like(o_ref)                      # phase-0 slab, sliced off

    # ---- phase 1: layer 2 for this row tile -> output ----------------------------
    @pl.when(phase == 1)
    def _():
        agg = jnp.dot(a_tile, proj_ref[:, :op],
                      preferred_element_type=jnp.float32)       # [tile_n, OP] f32
        h_t = h_ref[pl.ds(row0, tile_n), :]
        root = jnp.dot(h_t, w2root_ref[...], preferred_element_type=jnp.float32)
        o_ref[...] = agg + root + b2_ref[...]


# ---------------------------------------------------------------------------
# VMEM budgeting / tile selection
# ---------------------------------------------------------------------------
def _vmem_bytes(n_pad, tile_n, num_rels, fin_p, hp, op, pw):
    bf2, f4 = 2, 4
    blocks = (
        2 * tile_n * num_rels * n_pad * bf2        # A_cat row tile (double-buffered)
        + 2 * n_pad * fin_p * bf2                  # X (constant block)
        + 2 * num_rels * fin_p * hp * bf2          # W1
        + 2 * fin_p * hp * bf2                     # W1_root
        + 2 * num_rels * hp * op * bf2             # W2
        + 2 * hp * op * bf2                        # W2_root
        + 2 * (hp + op) * f4                       # biases
        + 2 * tile_n * op * f4                     # output tile
    )
    scratch = num_rels * n_pad * pw * bf2 + n_pad * hp * bf2   # proj_stack + H
    return blocks + scratch


def _choose_tiling(n, num_rels, fin_p, hp, op, vmem_budget=48 << 20):
    # 48 MiB budget keeps the working set safe even on v7x's 64 MiB VMEM per TC.
    n_pad = _round_up(n, LANE)
    pw = max(hp, op)
    tile_n = LANE
    for cand in (512, 256, 128):
        if n_pad % cand:
            continue
        if _vmem_bytes(n_pad, cand, num_rels, fin_p, hp, op, pw) <= vmem_budget or cand == LANE:
            tile_n = cand
            break
    return n_pad, tile_n


# ---------------------------------------------------------------------------
# Wrapper: padding / relation stacking / pallas_call
# ---------------------------------------------------------------------------
def rgcn_forward_pallas(params, x, adj):
    """x: [N, Fin] f32, adj: [R, N, N] f32 (row-mean-normalized) -> [N, out_feat] f32."""
    n, f_in = x.shape
    num_rels = adj.shape[0]
    hid = params["w_rel1"].shape[-1]
    out_feat = params["w_rel2"].shape[-1]

    fin_p = _round_up(f_in, LANE)
    hp = _round_up(hid, LANE)
    op = _round_up(out_feat, LANE)
    pw = max(hp, op)
    n_pad, tile_n = _choose_tiling(n, num_rels, fin_p, hp, op)
    n_tiles = n_pad // tile_n
    bf16 = jnp.bfloat16

    # Zero-padding keeps the math exact: padded lanes/rows stay zero through both layers.
    x_p = jnp.pad(x, ((0, n_pad - n), (0, fin_p - f_in))).astype(bf16)
    adj_p = jnp.pad(adj, ((0, 0), (0, n_pad - n), (0, n_pad - n)))
    # A_cat[i, r*n_pad + j] = A_r[i, j]  -> relation sum folds into one MXU contraction.
    a_cat = jnp.transpose(adj_p, (1, 0, 2)).reshape(n_pad, num_rels * n_pad).astype(bf16)

    w1 = jnp.pad(params["w_rel1"], ((0, 0), (0, fin_p - f_in), (0, hp - hid))).astype(bf16)
    w1root = jnp.pad(params["w_root1"], ((0, fin_p - f_in), (0, hp - hid))).astype(bf16)
    b1 = jnp.pad(params["b1"], ((0, 0), (0, hp - hid))).astype(jnp.float32)
    w2 = jnp.pad(params["w_rel2"], ((0, 0), (0, hp - hid), (0, op - out_feat))).astype(bf16)
    w2root = jnp.pad(params["w_root2"], ((0, hp - hid), (0, op - out_feat))).astype(bf16)
    b2 = jnp.pad(params["b2"], ((0, 0), (0, op - out_feat))).astype(jnp.float32)

    kernel = functools.partial(_rgcn_kernel, n_pad=n_pad, tile_n=tile_n,
                               num_rels=num_rels, hp=hp, op=op)

    flops = int(2 * (num_rels * n_pad * fin_p * hp        # build X @ W1_r
                     + n_pad * num_rels * n_pad * hp      # layer-1 aggregation
                     + n_pad * fin_p * hp                 # layer-1 root
                     + num_rels * n_pad * hp * op         # build H @ W2_r
                     + n_pad * num_rels * n_pad * op      # layer-2 aggregation
                     + n_pad * hp * op))                  # layer-2 root
    bytes_accessed = int(2 * 2 * a_cat.size               # A_cat streamed once per phase (bf16)
                         + 2 * (x_p.size + w1.size + w1root.size + w2.size + w2root.size)
                         + 4 * (b1.size + b2.size + 2 * n_pad * op))

    vmem_bytes = _vmem_bytes(n_pad, tile_n, num_rels, fin_p, hp, op, pw)
    vmem_limit = int(min(100 << 20, max(32 << 20, vmem_bytes + (8 << 20))))

    out_padded = pl.pallas_call(
        kernel,
        out_shape=jax.ShapeDtypeStruct((2, n_pad, op), jnp.float32),
        grid=(2, n_tiles),                                 # (phase, row tile)
        in_specs=[
            pl.BlockSpec((tile_n, num_rels * n_pad), lambda p, i: (i, 0)),   # A_cat row tile
            pl.BlockSpec((n_pad, fin_p), lambda p, i: (0, 0)),               # X (full)
            pl.BlockSpec((num_rels, fin_p, hp), lambda p, i: (0, 0, 0)),     # W1_r
            pl.BlockSpec((fin_p, hp), lambda p, i: (0, 0)),                  # W1_root
            pl.BlockSpec((1, hp), lambda p, i: (0, 0)),                      # b1
            pl.BlockSpec((num_rels, hp, op), lambda p, i: (0, 0, 0)),        # W2_r
            pl.BlockSpec((hp, op), lambda p, i: (0, 0)),                     # W2_root
            pl.BlockSpec((1, op), lambda p, i: (0, 0)),                      # b2
        ],
        # Leading output dim indexed by phase: every output block is written exactly
        # once (phase-0 slab holds zeros and is sliced away) -> no revisit hazards.
        out_specs=pl.BlockSpec((None, tile_n, op), lambda p, i: (p, i, 0)),
        scratch_shapes=[
            pltpu.VMEM((num_rels * n_pad, pw), bf16),      # proj_stack (X@W1_r / H@W2_r)
            pltpu.VMEM((n_pad, hp), bf16),                 # hidden activations H
        ],
        compiler_params=pltpu.CompilerParams(
            # TODO(synk): row axis could become "parallel" on v7x once H/proj_stack
            # are no longer cross-tile dependencies (per-core replication / core_map).
            dimension_semantics=("arbitrary", "arbitrary"),
            vmem_limit_bytes=vmem_limit),
        cost_estimate=pl.CostEstimate(flops=flops, transcendentals=0,
                                      bytes_accessed=bytes_accessed),
    )(a_cat, x_p, w1, w1root, b1, w2, w2root, b2)

    return out_padded[1, :n, :out_feat]


# ---------------------------------------------------------------------------
# Glue: densify the graph into per-relation mean-normalized adjacencies
# ---------------------------------------------------------------------------
def build_norm_adj(edge_index, edge_type, num_nodes, num_rels):
    src = edge_index[0]
    dst = edge_index[1]
    adj = jnp.zeros((num_rels, num_nodes, num_nodes), jnp.float32)
    adj = adj.at[edge_type, dst, src].add(1.0)
    deg = adj.sum(axis=2, keepdims=True)            # per-(node, relation) in-degree
    adj = adj / jnp.where(deg > 0, deg, 1.0)        # 'mean' aggregation
    return adj


# ---------------------------------------------------------------------------
# Params (deterministic) and pure-JAX references
# ---------------------------------------------------------------------------
def init_rgcn_params(key, in_feat, hidden_feat, out_feat, num_rels):
    ks = jax.random.split(key, 6)
    s1 = 1.0 / jnp.sqrt(jnp.float32(in_feat))
    s2 = 1.0 / jnp.sqrt(jnp.float32(hidden_feat))
    return {
        "w_rel1": jax.random.normal(ks[0], (num_rels, in_feat, hidden_feat), jnp.float32) * s1,
        "w_root1": jax.random.normal(ks[1], (in_feat, hidden_feat), jnp.float32) * s1,
        "b1": jax.random.normal(ks[2], (1, hidden_feat), jnp.float32) * 0.01,
        "w_rel2": jax.random.normal(ks[3], (num_rels, hidden_feat, out_feat), jnp.float32) * s2,
        "w_root2": jax.random.normal(ks[4], (hidden_feat, out_feat), jnp.float32) * s2,
        "b2": jax.random.normal(ks[5], (1, out_feat), jnp.float32) * 0.01,
    }


def rgcn_conv_ref(x, adj, w_rel, w_root, bias, apply_relu):
    out = x @ w_root + bias
    out = out + jnp.einsum("rij,jf,rfo->io", adj, x, w_rel)
    return jnp.maximum(out, 0.0) if apply_relu else out


def rgcn_forward_ref(params, x, adj):
    h = rgcn_conv_ref(x, adj, params["w_rel1"], params["w_root1"], params["b1"], True)
    return rgcn_conv_ref(h, adj, params["w_rel2"], params["w_root2"], params["b2"], False)


def _bf16_roundtrip(t):
    return t.astype(jnp.bfloat16).astype(jnp.float32)


if __name__ == "__main__":
    # Small synthetic graph consistent with RGCN(in_feat, hidden_feat, out_feat, num_rels).
    num_nodes = 16
    in_feat, hidden_feat, out_feat = 16, 32, 8
    num_rels = 4
    num_edges = 40

    key = jax.random.PRNGKey(0)
    k_x, k_src, k_dst, k_rel, k_par = jax.random.split(key, 5)

    x = jax.random.normal(k_x, (num_nodes, in_feat), jnp.float32)
    edge_index = jnp.stack([
        jax.random.randint(k_src, (num_edges,), 0, num_nodes),
        jax.random.randint(k_dst, (num_edges,), 0, num_nodes),
    ])                                                                # [2, E] (src, dst)
    edge_type = jax.random.randint(k_rel, (num_edges,), 0, num_rels)  # [E]

    adj = build_norm_adj(edge_index, edge_type, num_nodes, num_rels)  # [R, N, N]
    params = init_rgcn_params(k_par, in_feat, hidden_feat, out_feat, num_rels)

    fwd = jax.jit(rgcn_forward_pallas)
    out = jax.block_until_ready(fwd(params, x, adj))

    ref_f32 = rgcn_forward_ref(params, x, adj)
    ref_bf16 = rgcn_forward_ref(jax.tree_util.tree_map(_bf16_roundtrip, params),
                                _bf16_roundtrip(x), _bf16_roundtrip(adj))

    assert out.shape == (num_nodes, out_feat)
    # Kernel uses bf16 MXU operands with f32 accumulation: tight check against a
    # bf16-rounded-input reference, loose sanity check against the pure-f32 one.
    assert jnp.allclose(out, ref_bf16, atol=5e-2, rtol=5e-2), "mismatch vs bf16-input reference"
    assert jnp.allclose(out, ref_f32, atol=3e-1, rtol=5e-2), "mismatch vs f32 reference"
    print("KERNEL_OK")
</pallas_src>

<mosaic_0001>
module attributes {stable_mosaic.version = 11 : i64} {
  func.func @_rgcn_kernel(%arg0: i32, %arg1: i32, %arg2: memref<128x512xbf16, #tpu.memory_space<vmem>>, %arg3: memref<128x128xbf16, #tpu.memory_space<vmem>>, %arg4: memref<4x128x128xbf16, #tpu.memory_space<vmem>>, %arg5: memref<128x128xbf16, #tpu.memory_space<vmem>>, %arg6: memref<1x128xf32, #tpu.memory_space<vmem>>, %arg7: memref<4x128x128xbf16, #tpu.memory_space<vmem>>, %arg8: memref<128x128xbf16, #tpu.memory_space<vmem>>, %arg9: memref<1x128xf32, #tpu.memory_space<vmem>>, %arg10: memref<1x128x128xf32, #tpu.memory_space<vmem>>, %arg11: memref<512x128xbf16, #tpu.memory_space<vmem>>, %arg12: memref<128x128xbf16, #tpu.memory_space<vmem>>) attributes {dimension_semantics = [#tpu.dimension_semantics<arbitrary>, #tpu.dimension_semantics<arbitrary>], iteration_bounds = array<i64: 2, 1>, scalar_prefetch = 0 : i64, scratch_operands = 2 : i64, tpu.core_type = #tpu.core_type<tc>, window_params = [{transform_indices = @transform_0, window_bounds = array<i64: 128, 512>}, {pipeline_mode = #tpu.pipeline_mode<synchronous>, transform_indices = @transform_1, window_bounds = array<i64: 128, 128>}, {pipeline_mode = #tpu.pipeline_mode<synchronous>, transform_indices = @transform_2, window_bounds = array<i64: 4, 128, 128>}, {pipeline_mode = #tpu.pipeline_mode<synchronous>, transform_indices = @transform_3, window_bounds = array<i64: 128, 128>}, {pipeline_mode = #tpu.pipeline_mode<synchronous>, transform_indices = @transform_4, window_bounds = array<i64: 1, 128>}, {pipeline_mode = #tpu.pipeline_mode<synchronous>, transform_indices = @transform_5, window_bounds = array<i64: 4, 128, 128>}, {pipeline_mode = #tpu.pipeline_mode<synchronous>, transform_indices = @transform_6, window_bounds = array<i64: 128, 128>}, {pipeline_mode = #tpu.pipeline_mode<synchronous>, transform_indices = @transform_7, window_bounds = array<i64: 1, 128>}, {transform_indices = @transform_8, window_bounds = array<i64: 1, 128, 128>}]} {
    %c128_i32 = arith.constant 128 : i32
    %0 = arith.muli %arg1, %c128_i32 : i32
    %1 = tpu.assume_multiple %0, 128 : i32
    %c0_i32 = arith.constant 0 : i32
    %2 = arith.cmpi eq, %arg0, %c0_i32 : i32
    %c0_i32_0 = arith.constant 0 : i32
    %3 = arith.cmpi eq, %arg1, %c0_i32_0 : i32
    %4 = arith.andi %2, %3 : i1
    %5 = arith.extui %4 : i1 to i32
    %c0_i32_1 = arith.constant 0 : i32
    %6 = arith.cmpi ne, %5, %c0_i32_1 : i32
    scf.if %6 {
      %c0_9 = arith.constant 0 : index
      %c0_10 = arith.constant 0 : index
      %19 = vector.load %arg3[%c0_9, %c0_10] : memref<128x128xbf16, #tpu.memory_space<vmem>>, vector<128x128xbf16>
      %c0_11 = arith.constant 0 : index
      %c0_12 = arith.constant 0 : index
      %c0_13 = arith.constant 0 : index
      %20 = vector.load %arg4[%c0_11, %c0_12, %c0_13] : memref<4x128x128xbf16, #tpu.memory_space<vmem>>, vector<1x128x128xbf16>
      %21 = vector.shape_cast %20 : vector<1x128x128xbf16> to vector<128x128xbf16>
      %cst = arith.constant dense<0.000000e+00> : vector<128x128xf32>
      %22 = tpu.matmul %19, %21, %cst {dimension_numbers = #tpu.dot_dimension_numbers<[1], [0], [0], [1], [0, 0, 1, 1], [], []>} : vector<128x128xbf16>, vector<128x128xbf16>, vector<128x128xf32> -> vector<128x128xf32>
      %23 = arith.truncf %22 : vector<128x128xf32> to vector<128x128xbf16>
      %c0_14 = arith.constant 0 : index
      %c0_15 = arith.constant 0 : index
      %24 = vector.load %arg11[%c0_14, %c0_15] : memref<512x128xbf16, #tpu.memory_space<vmem>>, vector<128x128xbf16>
      tpu.vector_store %arg11[%c0_14, %c0_15], %23 {strides = array<i32>} : memref<512x128xbf16, #tpu.memory_space<vmem>>, vector<128x128xbf16>,
      %c1 = arith.constant 1 : index
      %c0_16 = arith.constant 0 : index
      %c0_17 = arith.constant 0 : index
      %25 = vector.load %arg4[%c1, %c0_16, %c0_17] : memref<4x128x128xbf16, #tpu.memory_space<vmem>>, vector<1x128x128xbf16>
      %26 = vector.shape_cast %25 : vector<1x128x128xbf16> to vector<128x128xbf16>
      %cst_18 = arith.constant dense<0.000000e+00> : vector<128x128xf32>
      %27 = tpu.matmul %19, %26, %cst_18 {dimension_numbers = #tpu.dot_dimension_numbers<[1], [0], [0], [1], [0, 0, 1, 1], [], []>} : vector<128x128xbf16>, vector<128x128xbf16>, vector<128x128xf32> -> vector<128x128xf32>
      %28 = arith.truncf %27 : vector<128x128xf32> to vector<128x128xbf16>
      %c128 = arith.constant 128 : index
      %c0_19 = arith.constant 0 : index
      %29 = vector.load %arg11[%c128, %c0_19] : memref<512x128xbf16, #tpu.memory_space<vmem>>, vector<128x128xbf16>
      tpu.vector_store %arg11[%c128, %c0_19], %28 {strides = array<i32>} : memref<512x128xbf16, #tpu.memory_space<vmem>>, vector<128x128xbf16>,
      %c2 = arith.constant 2 : index
      %c0_20 = arith.constant 0 : index
      %c0_21 = arith.constant 0 : index
      %30 = vector.load %arg4[%c2, %c0_20, %c0_21] : memref<4x128x128xbf16, #tpu.memory_space<vmem>>, vector<1x128x128xbf16>
      %31 = vector.shape_cast %30 : vector<1x128x128xbf16> to vector<128x128xbf16>
      %cst_22 = arith.constant dense<0.000000e+00> : vector<128x128xf32>
      %32 = tpu.matmul %19, %31, %cst_22 {dimension_numbers = #tpu.dot_dimension_numbers<[1], [0], [0], [1], [0, 0, 1, 1], [], []>} : vector<128x128xbf16>, vector<128x128xbf16>, vector<128x128xf32> -> vector<128x128xf32>
      %33 = arith.truncf %32 : vector<128x128xf32> to vector<128x128xbf16>
      %c256 = arith.constant 256 : index
      %c0_23 = arith.constant 0 : index
      %34 = vector.load %arg11[%c256, %c0_23] : memref<512x128xbf16, #tpu.memory_space<vmem>>, vector<128x128xbf16>
      tpu.vector_store %arg11[%c256, %c0_23], %33 {strides = array<i32>} : memref<512x128xbf16, #tpu.memory_space<vmem>>, vector<128x128xbf16>,
      %c3 = arith.constant 3 : index
      %c0_24 = arith.constant 0 : index
      %c0_25 = arith.constant 0 : index
      %35 = vector.load %arg4[%c3, %c0_24, %c0_25] : memref<4x128x128xbf16, #tpu.memory_space<vmem>>, vector<1x128x128xbf16>
      %36 = vector.shape_cast %35 : vector<1x128x128xbf16> to vector<128x128xbf16>
      %cst_26 = arith.constant dense<0.000000e+00> : vector<128x128xf32>
      %37 = tpu.matmul %19, %36, %cst_26 {dimension_numbers = #tpu.dot_dimension_numbers<[1], [0], [0], [1], [0, 0, 1, 1], [], []>} : vector<128x128xbf16>, vector<128x128xbf16>, vector<128x128xf32> -> vector<128x128xf32>
      %38 = arith.truncf %37 : vector<128x128xf32> to vector<128x128xbf16>
      %c384 = arith.constant 384 : index
      %c0_27 = arith.constant 0 : index
      %39 = vector.load %arg11[%c384, %c0_27] : memref<512x128xbf16, #tpu.memory_space<vmem>>, vector<128x128xbf16>
      tpu.vector_store %arg11[%c384, %c0_27], %38 {strides = array<i32>} : memref<512x128xbf16, #tpu.memory_space<vmem>>, vector<128x128xbf16>,
    } else {
    }
    %c1_i32 = arith.constant 1 : i32
    %7 = arith.cmpi eq, %arg0, %c1_i32 : i32
    %c0_i32_2 = arith.constant 0 : i32
    %8 = arith.cmpi eq, %arg1, %c0_i32_2 : i32
    %9 = arith.andi %7, %8 : i1
    %10 = arith.extui %9 : i1 to i32
    %c0_i32_3 = arith.constant 0 : i32
    %11 = arith.cmpi ne, %10, %c0_i32_3 : i32
    scf.if %11 {
      %c0_9 = arith.constant 0 : index
      %c0_10 = arith.constant 0 : index
      %19 = vector.load %arg12[%c0_9, %c0_10] : memref<128x128xbf16, #tpu.memory_space<vmem>>, vector<128x128xbf16>
      %c0_11 = arith.constant 0 : index
      %c0_12 = arith.constant 0 : index
      %c0_13 = arith.constant 0 : index
      %20 = vector.load %arg7[%c0_11, %c0_12, %c0_13] : memref<4x128x128xbf16, #tpu.memory_space<vmem>>, vector<1x128x128xbf16>
      %21 = vector.shape_cast %20 : vector<1x128x128xbf16> to vector<128x128xbf16>
      %cst = arith.constant dense<0.000000e+00> : vector<128x128xf32>
      %22 = tpu.matmul %19, %21, %cst {dimension_numbers = #tpu.dot_dimension_numbers<[1], [0], [0], [1], [0, 0, 1, 1], [], []>} : vector<128x128xbf16>, vector<128x128xbf16>, vector<128x128xf32> -> vector<128x128xf32>
      %23 = arith.truncf %22 : vector<128x128xf32> to vector<128x128xbf16>
      %c0_14 = arith.constant 0 : index
      %c0_15 = arith.constant 0 : index
      %24 = vector.load %arg11[%c0_14, %c0_15] : memref<512x128xbf16, #tpu.memory_space<vmem>>, vector<128x128xbf16>
      tpu.vector_store %arg11[%c0_14, %c0_15], %23 {strides = array<i32>} : memref<512x128xbf16, #tpu.memory_space<vmem>>, vector<128x128xbf16>,
      %c1 = arith.constant 1 : index
      %c0_16 = arith.constant 0 : index
      %c0_17 = arith.constant 0 : index
      %25 = vector.load %arg7[%c1, %c0_16, %c0_17] : memref<4x128x128xbf16, #tpu.memory_space<vmem>>, vector<1x128x128xbf16>
      %26 = vector.shape_cast %25 : vector<1x128x128xbf16> to vector<128x128xbf16>
      %cst_18 = arith.constant dense<0.000000e+00> : vector<128x128xf32>
      %27 = tpu.matmul %19, %26, %cst_18 {dimension_numbers = #tpu.dot_dimension_numbers<[1], [0], [0], [1], [0, 0, 1, 1], [], []>} : vector<128x128xbf16>, vector<128x128xbf16>, vector<128x128xf32> -> vector<128x128xf32>
      %28 = arith.truncf %27 : vector<128x128xf32> to vector<128x128xbf16>
      %c128 = arith.constant 128 : index
      %c0_19 = arith.constant 0 : index
      %29 = vector.load %arg11[%c128, %c0_19] : memref<512x128xbf16, #tpu.memory_space<vmem>>, vector<128x128xbf16>
      tpu.vector_store %arg11[%c128, %c0_19], %28 {strides = array<i32>} : memref<512x128xbf16, #tpu.memory_space<vmem>>, vector<128x128xbf16>,
      %c2 = arith.constant 2 : index
      %c0_20 = arith.constant 0 : index
      %c0_21 = arith.constant 0 : index
      %30 = vector.load %arg7[%c2, %c0_20, %c0_21] : memref<4x128x128xbf16, #tpu.memory_space<vmem>>, vector<1x128x128xbf16>
      %31 = vector.shape_cast %30 : vector<1x128x128xbf16> to vector<128x128xbf16>
      %cst_22 = arith.constant dense<0.000000e+00> : vector<128x128xf32>
      %32 = tpu.matmul %19, %31, %cst_22 {dimension_numbers = #tpu.dot_dimension_numbers<[1], [0], [0], [1], [0, 0, 1, 1], [], []>} : vector<128x128xbf16>, vector<128x128xbf16>, vector<128x128xf32> -> vector<128x128xf32>
      %33 = arith.truncf %32 : vector<128x128xf32> to vector<128x128xbf16>
      %c256 = arith.constant 256 : index
      %c0_23 = arith.constant 0 : index
      %34 = vector.load %arg11[%c256, %c0_23] : memref<512x128xbf16, #tpu.memory_space<vmem>>, vector<128x128xbf16>
      tpu.vector_store %arg11[%c256, %c0_23], %33 {strides = array<i32>} : memref<512x128xbf16, #tpu.memory_space<vmem>>, vector<128x128xbf16>,
      %c3 = arith.constant 3 : index
      %c0_24 = arith.constant 0 : index
      %c0_25 = arith.constant 0 : index
      %35 = vector.load %arg7[%c3, %c0_24, %c0_25] : memref<4x128x128xbf16, #tpu.memory_space<vmem>>, vector<1x128x128xbf16>
      %36 = vector.shape_cast %35 : vector<1x128x128xbf16> to vector<128x128xbf16>
      %cst_26 = arith.constant dense<0.000000e+00> : vector<128x128xf32>
      %37 = tpu.matmul %19, %36, %cst_26 {dimension_numbers = #tpu.dot_dimension_numbers<[1], [0], [0], [1], [0, 0, 1, 1], [], []>} : vector<128x128xbf16>, vector<128x128xbf16>, vector<128x128xf32> -> vector<128x128xf32>
      %38 = arith.truncf %37 : vector<128x128xf32> to vector<128x128xbf16>
      %c384 = arith.constant 384 : index
      %c0_27 = arith.constant 0 : index
      %39 = vector.load %arg11[%c384, %c0_27] : memref<512x128xbf16, #tpu.memory_space<vmem>>, vector<128x128xbf16>
      tpu.vector_store %arg11[%c384, %c0_27], %38 {strides = array<i32>} : memref<512x128xbf16, #tpu.memory_space<vmem>>, vector<128x128xbf16>,
    } else {
    }
    %c0 = arith.constant 0 : index
    %c0_4 = arith.constant 0 : index
    %12 = vector.load %arg2[%c0, %c0_4] : memref<128x512xbf16, #tpu.memory_space<vmem>>, vector<128x512xbf16>
    %c0_i32_5 = arith.constant 0 : i32
    %13 = arith.cmpi eq, %arg0, %c0_i32_5 : i32
    %14 = arith.extui %13 : i1 to i32
    %c0_i32_6 = arith.constant 0 : i32
    %15 = arith.cmpi ne, %14, %c0_i32_6 : i32
    scf.if %15 {
      %c0_9 = arith.constant 0 : index
      %c0_10 = arith.constant 0 : index
      %19 = vector.load %arg11[%c0_9, %c0_10] : memref<512x128xbf16, #tpu.memory_space<vmem>>, vector<512x128xbf16>
      %cst = arith.constant dense<0.000000e+00> : vector<128x128xf32>
      %20 = tpu.matmul %12, %19, %cst {dimension_numbers = #tpu.dot_dimension_numbers<[1], [0], [0], [1], [0, 0, 1, 1], [], []>} : vector<128x512xbf16>, vector<512x128xbf16>, vector<128x128xf32> -> vector<128x128xf32>
      %21 = arith.index_cast %1 : i32 to index
      %c0_11 = arith.constant 0 : index
      %22 = vector.load %arg3[%21, %c0_11] : memref<128x128xbf16, #tpu.memory_space<vmem>>, vector<128x128xbf16>
      %c0_12 = arith.constant 0 : index
      %c0_13 = arith.constant 0 : index
      %23 = vector.load %arg5[%c0_12, %c0_13] : memref<128x128xbf16, #tpu.memory_space<vmem>>, vector<128x128xbf16>
      %cst_14 = arith.constant dense<0.000000e+00> : vector<128x128xf32>
      %24 = tpu.matmul %22, %23, %cst_14 {dimension_numbers = #tpu.dot_dimension_numbers<[1], [0], [0], [1], [0, 0, 1, 1], [], []>} : vector<128x128xbf16>, vector<128x128xbf16>, vector<128x128xf32> -> vector<128x128xf32>
      %25 = arith.addf %20, %24 : vector<128x128xf32>
      %c0_15 = arith.constant 0 : index
      %c0_16 = arith.constant 0 : index
      %26 = vector.load %arg6[%c0_15, %c0_16] : memref<1x128xf32, #tpu.memory_space<vmem>>, vector<1x128xf32>
      %27 = vector.broadcast %26 : vector<1x128xf32> to vector<128x128xf32>
      %28 = arith.addf %25, %27 : vector<128x128xf32>
      %cst_17 = arith.constant 0.000000e+00 : f32
      %29 = vector.broadcast %cst_17 : f32 to vector<128x128xf32>
      %30 = arith.maximumf %28, %29 : vector<128x128xf32>
      %31 = arith.truncf %30 : vector<128x128xf32> to vector<128x128xbf16>
      %32 = arith.index_cast %1 : i32 to index
      %c0_18 = arith.constant 0 : index
      %33 = vector.load %arg12[%32, %c0_18] : memref<128x128xbf16, #tpu.memory_space<vmem>>, vector<128x128xbf16>
      tpu.vector_store %arg12[%32, %c0_18], %31 {strides = array<i32>} : memref<128x128xbf16, #tpu.memory_space<vmem>>, vector<128x128xbf16>,
      %cst_19 = arith.constant 0.000000e+00 : f32
      %34 = vector.broadcast %cst_19 : f32 to vector<128x128xf32>
      %c0_20 = arith.constant 0 : index
      %c0_21 = arith.constant 0 : index
      %c0_22 = arith.constant 0 : index
      %35 = vector.load %arg10[%c0_20, %c0_21, %c0_22] : memref<1x128x128xf32, #tpu.memory_space<vmem>>, vector<1x128x128xf32>
      %36 = vector.shape_cast %35 : vector<1x128x128xf32> to vector<128x128xf32>
      %37 = vector.shape_cast %34 : vector<128x128xf32> to vector<1x128x128xf32>
      tpu.vector_store %arg10[%c0_20, %c0_21, %c0_22], %37 {strides = array<i32>} : memref<1x128x128xf32, #tpu.memory_space<vmem>>, vector<1x128x128xf32>,
    } else {
    }
    %c1_i32_7 = arith.constant 1 : i32
    %16 = arith.cmpi eq, %arg0, %c1_i32_7 : i32
    %17 = arith.extui %16 : i1 to i32
    %c0_i32_8 = arith.constant 0 : i32
    %18 = arith.cmpi ne, %17, %c0_i32_8 : i32
    scf.if %18 {
      %c0_9 = arith.constant 0 : index
      %c0_10 = arith.constant 0 : index
      %19 = vector.load %arg11[%c0_9, %c0_10] : memref<512x128xbf16, #tpu.memory_space<vmem>>, vector<512x128xbf16>
      %cst = arith.constant dense<0.000000e+00> : vector<128x128xf32>
      %20 = tpu.matmul %12, %19, %cst {dimension_numbers = #tpu.dot_dimension_numbers<[1], [0], [0], [1], [0, 0, 1, 1], [], []>} : vector<128x512xbf16>, vector<512x128xbf16>, vector<128x128xf32> -> vector<128x128xf32>
      %21 = arith.index_cast %1 : i32 to index
      %c0_11 = arith.constant 0 : index
      %22 = vector.load %arg12[%21, %c0_11] : memref<128x128xbf16, #tpu.memory_space<vmem>>, vector<128x128xbf16>
      %c0_12 = arith.constant 0 : index
      %c0_13 = arith.constant 0 : index
      %23 = vector.load %arg8[%c0_12, %c0_13] : memref<128x128xbf16, #tpu.memory_space<vmem>>, vector<128x128xbf16>
      %cst_14 = arith.constant dense<0.000000e+00> : vector<128x128xf32>
      %24 = tpu.matmul %22, %23, %cst_14 {dimension_numbers = #tpu.dot_dimension_numbers<[1], [0], [0], [1], [0, 0, 1, 1], [], []>} : vector<128x128xbf16>, vector<128x128xbf16>, vector<128x128xf32> -> vector<128x128xf32>
      %25 = arith.addf %20, %24 : vector<128x128xf32>
      %c0_15 = arith.constant 0 : index
      %c0_16 = arith.constant 0 : index
      %26 = vector.load %arg9[%c0_15, %c0_16] : memref<1x128xf32, #tpu.memory_space<vmem>>, vector<1x128xf32>
      %27 = vector.broadcast %26 : vector<1x128xf32> to vector<128x128xf32>
      %28 = arith.addf %25, %27 : vector<128x128xf32>
      %c0_17 = arith.constant 0 : index
      %c0_18 = arith.constant 0 : index
      %c0_19 = arith.constant 0 : index
      %29 = vector.load %arg10[%c0_17, %c0_18, %c0_19] : memref<1x128x128xf32, #tpu.memory_space<vmem>>, vector<1x128x128xf32>
      %30 = vector.shape_cast %29 : vector<1x128x128xf32> to vector<128x128xf32>
      %31 = vector.shape_cast %28 : vector<128x128xf32> to vector<1x128x128xf32>
      tpu.vector_store %arg10[%c0_17, %c0_18, %c0_19], %31 {strides = array<i32>} : memref<1x128x128xf32, #tpu.memory_space<vmem>>, vector<1x128x128xf32>,
    } else {
    }
    return
  }
  func.func @transform_0(%arg0: i32, %arg1: i32) -> (i32, i32) {
    %c0_i32 = arith.constant 0 : i32
    %c0_i32_0 = arith.constant 0 : i32
    return %arg1, %c0_i32 : i32, i32
  }
  func.func @transform_1(%arg0: i32, %arg1: i32) -> (i32, i32) {
    %c0_i32 = arith.constant 0 : i32
    %c0_i32_0 = arith.constant 0 : i32
    %c0_i32_1 = arith.constant 0 : i32
    return %c0_i32, %c0_i32_0 : i32, i32
  }
  func.func @transform_2(%arg0: i32, %arg1: i32) -> (i32, i32, i32) {
    %c0_i32 = arith.constant 0 : i32
    %c0_i32_0 = arith.constant 0 : i32
    %c0_i32_1 = arith.constant 0 : i32
    %c0_i32_2 = arith.constant 0 : i32
    return %c0_i32, %c0_i32_0, %c0_i32_1 : i32, i32, i32
  }
  func.func @transform_3(%arg0: i32, %arg1: i32) -> (i32, i32) {
    %c0_i32 = arith.constant 0 : i32
    %c0_i32_0 = arith.constant 0 : i32
    %c0_i32_1 = arith.constant 0 : i32
    return %c0_i32, %c0_i32_0 : i32, i32
  }
  func.func @transform_4(%arg0: i32, %arg1: i32) -> (i32, i32) {
    %c0_i32 = arith.constant 0 : i32
    %c0_i32_0 = arith.constant 0 : i32
    %c0_i32_1 = arith.constant 0 : i32
    return %c0_i32, %c0_i32_0 : i32, i32
  }
  func.func @transform_5(%arg0: i32, %arg1: i32) -> (i32, i32, i32) {
    %c0_i32 = arith.constant 0 : i32
    %c0_i32_0 = arith.constant 0 : i32
    %c0_i32_1 = arith.constant 0 : i32
    %c0_i32_2 = arith.constant 0 : i32
    return %c0_i32, %c0_i32_0, %c0_i32_1 : i32, i32, i32
  }
  func.func @transform_6(%arg0: i32, %arg1: i32) -> (i32, i32) {
    %c0_i32 = arith.constant 0 : i32
    %c0_i32_0 = arith.constant 0 : i32
    %c0_i32_1 = arith.constant 0 : i32
    return %c0_i32, %c0_i32_0 : i32, i32
  }
  func.func @transform_7(%arg0: i32, %arg1: i32) -> (i32, i32) {
    %c0_i32 = arith.constant 0 : i32
    %c0_i32_0 = arith.constant 0 : i32
    %c0_i32_1 = arith.constant 0 : i32
    return %c0_i32, %c0_i32_0 : i32, i32
  }
  func.func @transform_8(%arg0: i32, %arg1: i32) -> (i32, i32, i32) {
    %c0_i32 = arith.constant 0 : i32
    %c0_i32_0 = arith.constant 0 : i32
    return %arg0, %arg1, %c0_i32 : i32, i32, i32
  }
}

</mosaic_0001>

<llo_original>
// kernel: rgcn_forward_pallas.1
$region0: #{rgcn_forward_pallas.1}
  #allocation0 [shape = 'u32[]', space=smem, size = 0x4, offset = 0x4, fixed_abs, tag = 'smem constant byte address 0x4 - core index']
  #allocation1 [shape = 'u32[72,128]{1,0:T(1,128)}', space=vmem, size = 0x9000, scoped, tag = 'internal scratch']
  #allocation2 [shape = 'bf16[512,128]{1,0:T(8,128)(2,1)}', space=vmem, size = 0x20000, scoped, tag = 'scratch operand']
  #allocation3 [shape = 'bf16[128,128]{1,0:T(8,128)(2,1)}', space=vmem, size = 0x8000, scoped, tag = 'scratch operand']
  %s0 = inlined_call_operand.vmem [shape: bf16[128,512], index: 0, kind: input, shape index: {}]
  %s1 = inlined_call_operand.vmem [shape: bf16[128,128], index: 1, kind: input, shape index: {}]
  %s2 = inlined_call_operand.vmem [shape: bf16[4,128,128], index: 2, kind: input, shape index: {}]
  %s3 = inlined_call_operand.vmem [shape: bf16[128,128], index: 3, kind: input, shape index: {}]
  %s4 = inlined_call_operand.vmem [shape: f32[1,128], index: 4, kind: input, shape index: {}]
  %s5 = inlined_call_operand.vmem [shape: bf16[4,128,128], index: 5, kind: input, shape index: {}]
  %s6 = inlined_call_operand.vmem [shape: bf16[128,128], index: 6, kind: input, shape index: {}]
  %s7 = inlined_call_operand.vmem [shape: f32[1,128], index: 7, kind: input, shape index: {}]
  %s8 = inlined_call_operand.vmem [shape: f32[2,128,128], index: 8, kind: output, shape index: {}]
  %s9 = sld [smem:[#allocation0]]
  $region81: #{rgcn_forward_pallas.1} parent=0
    _
  %s11 = ssub.s32 1, %s9
  %s12 = scalar_select 0, %s11, %s9
  loop: start=0, step=1, limit=4
  $region2: #{rgcn_forward_pallas.1} parent=0 // loop_pre_header
    _
  $region3: #{rgcn_forward_pallas.1} parent=0 // loop_header
    %s14 = sphi 0, %s18
    %p15 = scmp.ge.s32.totalorder %s14, 4
    %s21 = sphi 0, %s33
    %s22 = sphi 0, %s29
    %s23 = sphi 0, %s21
    %s24 = sphi 0, %s22
    %s25 = sphi 0, %s23
    %s26 = sphi 0, %s24
    %s36 = sphi 0, %s38
    %s39 = sphi 0, %s36
    %s40 = sphi 0, %s39
    %s56 = sphi 0, %s40
    %s60 = sphi 0, %s60
    %s62 = sphi 0, %s60
    %s63 = sphi 0, %s62
    %s77 = sphi 0, %s63
    %s81 = sphi 0, %s81
    %s83 = sphi 0, %s81
    %s84 = sphi 0, %s83
    %s98 = sphi 0, %s84
    %s102 = sphi 0, %s102
    %s104 = sphi 0, %s102
    %s105 = sphi 0, %s104
    %s119 = sphi 0, %s105
    %s123 = sphi 0, %s123
    %s125 = sphi 0, %s123
    %s126 = sphi 0, %s125
    %s140 = sphi 0, %s126
    %s144 = sphi 0, %s144
    %s146 = sphi 0, %s144
    %s147 = sphi 0, %s146
    %s161 = sphi 0, %s147
    %s165 = sphi 0, %s165
    %s167 = sphi 0, %s165
    %s168 = sphi 0, %s167
    %s182 = sphi 0, %s168
    %s186 = sphi 0, %s186
    %s188 = sphi 0, %s186
    %s189 = sphi 0, %s188
    %s203 = sphi 0, %s189
    %s211 = sphi 0, %s213
    %s214 = sphi 0, %s211
    %s215 = sphi 0, %s214
    %s231 = sphi 0, %s215
  $region4: #{rgcn_forward_pallas.1} parent=0 // loop_header_branch
    %17 = sbr.rel (%p15) target = $region8
  $region5: #{rgcn_forward_pallas.1} parent=0 // loop_body
    %s19 = ssub.s32 %s14, 1
    %s20 = ssub.s32 %s14, 2
    %s27 = sadd.s32 1, %s22
    %p28 = scmp.ge.s32.totalorder %s27, 1
    %s29 = scalar_select %p28, 0, %s27
    %s30 = sadd.s32 1, %s21
    %s31 = scalar_select %p28, %s30, %s21
    %p32 = scmp.ge.s32.totalorder %s31, 2
    %s33 = scalar_select %p32, 0, %s31
    %s34 = ssub.s32 %s22, %s29
    %p35 = scmp.eq.s32.totalorder %s34, 0
    %s37 = sadd.s32 %s36, 1
    %s38 = scalar_select %p35, %s36, %s37
    %p41 = pneg %p35
    %p42 = scmp.eq.s32.totalorder %s14, 1
    %p43 = por %p41, %p42
    %p44 = scmp.ne.s32.totalorder %s36, %s39
    %p45 = scmp.eq.s32.totalorder %s14, 0
    %p46 = por %p44, %p45
    %p47 = scmp.ne.s32.totalorder %s36, %s39
    %p48 = scmp.eq.s32.totalorder %s19, 1
    %p49 = por %p47, %p48
    %p50 = scmp.ne.s32.totalorder %s39, %s40
    %p51 = scmp.eq.s32.totalorder %s19, 0
    %p52 = por %p50, %p51
    %p53 = scmp.ne.s32.totalorder %s39, %s40
    %p54 = scmp.eq.s32.totalorder %s20, 1
    %p55 = por %p53, %p54
    %p57 = scmp.ne.s32.totalorder %s40, %s56
    %p58 = scmp.eq.s32.totalorder %s20, 0
    %p59 = por %p57, %p58
    %s61 = sadd.s32 %s60, 1
    %p64 = scmp.eq.s32.totalorder %s14, 1
    %p65 = scmp.ne.s32.totalorder %s60, %s62
    %p66 = scmp.eq.s32.totalorder %s14, 0
    %p67 = por %p65, %p66
    %p68 = scmp.ne.s32.totalorder %s60, %s62
    %p69 = scmp.eq.s32.totalorder %s19, 1
    %p70 = por %p68, %p69
    %p71 = scmp.ne.s32.totalorder %s62, %s63
    %p72 = scmp.eq.s32.totalorder %s19, 0
    %p73 = por %p71, %p72
    %p74 = scmp.ne.s32.totalorder %s62, %s63
    %p75 = scmp.eq.s32.totalorder %s20, 1
    %p76 = por %p74, %p75
    %p78 = scmp.ne.s32.totalorder %s63, %s77
    %p79 = scmp.eq.s32.totalorder %s20, 0
    %p80 = por %p78, %p79
    %s82 = sadd.s32 %s81, 1
    %p85 = scmp.eq.s32.totalorder %s14, 1
    %p86 = scmp.ne.s32.totalorder %s81, %s83
    %p87 = scmp.eq.s32.totalorder %s14, 0
    %p88 = por %p86, %p87
    %p89 = scmp.ne.s32.totalorder %s81, %s83
    %p90 = scmp.eq.s32.totalorder %s19, 1
    %p91 = por %p89, %p90
    %p92 = scmp.ne.s32.totalorder %s83, %s84
    %p93 = scmp.eq.s32.totalorder %s19, 0
    %p94 = por %p92, %p93
    %p95 = scmp.ne.s32.totalorder %s83, %s84
    %p96 = scmp.eq.s32.totalorder %s20, 1
    %p97 = por %p95, %p96
    %p99 = scmp.ne.s32.totalorder %s84, %s98
    %p100 = scmp.eq.s32.totalorder %s20, 0
    %p101 = por %p99, %p100
    %s103 = sadd.s32 %s102, 1
    %p106 = scmp.eq.s32.totalorder %s14, 1
    %p107 = scmp.ne.s32.totalorder %s102, %s104
    %p108 = scmp.eq.s32.totalorder %s14, 0
    %p109 = por %p107, %p108
    %p110 = scmp.ne.s32.totalorder %s102, %s104
    %p111 = scmp.eq.s32.totalorder %s19, 1
    %p112 = por %p110, %p111
    %p113 = scmp.ne.s32.totalorder %s104, %s105
    %p114 = scmp.eq.s32.totalorder %s19, 0
    %p115 = por %p113, %p114
    %p116 = scmp.ne.s32.totalorder %s104, %s105
    %p117 = scmp.eq.s32.totalorder %s20, 1
    %p118 = por %p116, %p117
    %p120 = scmp.ne.s32.totalorder %s105, %s119
    %p121 = scmp.eq.s32.totalorder %s20, 0
    %p122 = por %p120, %p121
    %s124 = sadd.s32 %s123, 1
    %p127 = scmp.eq.s32.totalorder %s14, 1
    %p128 = scmp.ne.s32.totalorder %s123, %s125
    %p129 = scmp.eq.s32.totalorder %s14, 0
    %p130 = por %p128, %p129
    %p131 = scmp.ne.s32.totalorder %s123, %s125
    %p132 = scmp.eq.s32.totalorder %s19, 1
    %p133 = por %p131, %p132
    %p134 = scmp.ne.s32.totalorder %s125, %s126
    %p135 = scmp.eq.s32.totalorder %s19, 0
    %p136 = por %p134, %p135
    %p137 = scmp.ne.s32.totalorder %s125, %s126
    %p138 = scmp.eq.s32.totalorder %s20, 1
    %p139 = por %p137, %p138
    %p141 = scmp.ne.s32.totalorder %s126, %s140
    %p142 = scmp.eq.s32.totalorder %s20, 0
    %p143 = por %p141, %p142
    %s145 = sadd.s32 %s144, 1
    %p148 = scmp.eq.s32.totalorder %s14, 1
    %p149 = scmp.ne.s32.totalorder %s144, %s146
    %p150 = scmp.eq.s32.totalorder %s14, 0
    %p151 = por %p149, %p150
    %p152 = scmp.ne.s32.totalorder %s144, %s146
    %p153 = scmp.eq.s32.totalorder %s19, 1
    %p154 = por %p152, %p153
    %p155 = scmp.ne.s32.totalorder %s146, %s147
    %p156 = scmp.eq.s32.totalorder %s19, 0
    %p157 = por %p155, %p156
    %p158 = scmp.ne.s32.totalorder %s146, %s147
    %p159 = scmp.eq.s32.totalorder %s20, 1
    %p160 = por %p158, %p159
    %p162 = scmp.ne.s32.totalorder %s147, %s161
    %p163 = scmp.eq.s32.totalorder %s20, 0
    %p164 = por %p162, %p163
    %s166 = sadd.s32 %s165, 1
    %p169 = scmp.eq.s32.totalorder %s14, 1
    %p170 = scmp.ne.s32.totalorder %s165, %s167
    %p171 = scmp.eq.s32.totalorder %s14, 0
    %p172 = por %p170, %p171
    %p173 = scmp.ne.s32.totalorder %s165, %s167
    %p174 = scmp.eq.s32.totalorder %s19, 1
    %p175 = por %p173, %p174
    %p176 = scmp.ne.s32.totalorder %s167, %s168
    %p177 = scmp.eq.s32.totalorder %s19, 0
    %p178 = por %p176, %p177
    %p179 = scmp.ne.s32.totalorder %s167, %s168
    %p180 = scmp.eq.s32.totalorder %s20, 1
    %p181 = por %p179, %p180
    %p183 = scmp.ne.s32.totalorder %s168, %s182
    %p184 = scmp.eq.s32.totalorder %s20, 0
    %p185 = por %p183, %p184
    %s187 = sadd.s32 %s186, 1
    %p190 = scmp.eq.s32.totalorder %s14, 1
    %p191 = scmp.ne.s32.totalorder %s186, %s188
    %p192 = scmp.eq.s32.totalorder %s14, 0
    %p193 = por %p191, %p192
    %p194 = scmp.ne.s32.totalorder %s186, %s188
    %p195 = scmp.eq.s32.totalorder %s19, 1
    %p196 = por %p194, %p195
    %p197 = scmp.ne.s32.totalorder %s188, %s189
    %p198 = scmp.eq.s32.totalorder %s19, 0
    %p199 = por %p197, %p198
    %p200 = scmp.ne.s32.totalorder %s188, %s189
    %p201 = scmp.eq.s32.totalorder %s20, 1
    %p202 = por %p200, %p201
    %p204 = scmp.ne.s32.totalorder %s189, %s203
    %p205 = scmp.eq.s32.totalorder %s20, 0
    %p206 = por %p204, %p205
    %s207 = ssub.s32 %s21, %s33
    %s208 = ssub.s32 %s22, %s29
    %s209 = sor.u32 %s207, %s208
    %p210 = scmp.eq.s32.totalorder %s209, 0
    %s212 = sadd.s32 %s211, 1
    %s213 = scalar_select %p210, %s211, %s212
    %p216 = pneg %p210
    %p217 = scmp.eq.s32.totalorder %s14, 1
    %p218 = por %p216, %p217
    %p219 = scmp.ne.s32.totalorder %s211, %s214
    %p220 = scmp.eq.s32.totalorder %s14, 0
    %p221 = por %p219, %p220
    %p222 = scmp.ne.s32.totalorder %s211, %s214
    %p223 = scmp.eq.s32.totalorder %s19, 1
    %p224 = por %p222, %p223
    %p225 = scmp.ne.s32.totalorder %s214, %s215
    %p226 = scmp.eq.s32.totalorder %s19, 0
    %p227 = por %p225, %p226
    %p228 = scmp.ne.s32.totalorder %s214, %s215
    %p229 = scmp.eq.s32.totalorder %s20, 1
    %p230 = por %p228, %p229
    %p232 = scmp.ne.s32.totalorder %s215, %s231
    %p233 = scmp.eq.s32.totalorder %s20, 0
    %p234 = por %p232, %p233
    %p235 = scmp.le.s32.totalorder 1, %s14
    %p236 = scmp.lt.s32.totalorder %s14, 3
    %p237 = pnand %p235, %p236
    %p238 = pneg %p237
    // Predicated region
    $region9: #{rgcn_forward_pallas.1} parent=5 // pred_check
      _
    $region10: #{rgcn_forward_pallas.1} parent=5 // pred_check_branch
      %240 = sbr.rel (%p237) target = $region12
    $region11: #{rgcn_forward_pallas.1} parent=5 // pred_region
      %s241 = ssub.s32 %s14, 1
      // Predicated region
      $region13: #{rgcn_forward_pallas.1} parent=11 // pred_check
        %p242 = pneg %p52
      $region14: #{rgcn_forward_pallas.1} parent=11 // pred_check_branch
        %244 = sbr.rel (%p242) target = $region16
      $region15: #{rgcn_forward_pallas.1} parent=11 // pred_region
        %s245 = smul.u32 16, %s24
        %p246 = scmp.lt.s32.totalorder %s245, 15
        %s247 = scalar_select %p246, %s245, 15
        %s248 = smul.addr %s247, 4
        %s249 = smul.addr %s248, 4
        %s250 = scalar_lea.vmem %s0, %s249
        %s251 = smul.u32 16, %s24
      $region16: #{rgcn_forward_pallas.1} parent=11 // pred_fallthru
        _
      // Predicated region
      $region17: #{rgcn_forward_pallas.1} parent=11 // pred_check
        %p252 = pneg %p73
      $region18: #{rgcn_forward_pallas.1} parent=11 // pred_check_branch
        %254 = sbr.rel (%p252) target = $region20
      $region19: #{rgcn_forward_pallas.1} parent=11 // pred_region
        _
      $region20: #{rgcn_forward_pallas.1} parent=11 // pred_fallthru
        _
      // Predicated region
      $region21: #{rgcn_forward_pallas.1} parent=11 // pred_check
        %p255 = pneg %p94
      $region22: #{rgcn_forward_pallas.1} parent=11 // pred_check_branch
        %257 = sbr.rel (%p255) target = $region24
      $region23: #{rgcn_forward_pallas.1} parent=11 // pred_region
        _
      $region24: #{rgcn_forward_pallas.1} parent=11 // pred_fallthru
        _
      // Predicated region
      $region25: #{rgcn_forward_pallas.1} parent=11 // pred_check
        %p258 = pneg %p115
      $region26: #{rgcn_forward_pallas.1} parent=11 // pred_check_branch
        %260 = sbr.rel (%p258) target = $region28
      $region27: #{rgcn_forward_pallas.1} parent=11 // pred_region
        _
      $region28: #{rgcn_forward_pallas.1} parent=11 // pred_fallthru
        _
      // Predicated region
      $region29: #{rgcn_forward_pallas.1} parent=11 // pred_check
        %p261 = pneg %p136
      $region30: #{rgcn_forward_pallas.1} parent=11 // pred_check_branch
        %263 = sbr.rel (%p261) target = $region32
      $region31: #{rgcn_forward_pallas.1} parent=11 // pred_region
        _
      $region32: #{rgcn_forward_pallas.1} parent=11 // pred_fallthru
        _
      // Predicated region
      $region33: #{rgcn_forward_pallas.1} parent=11 // pred_check
        %p264 = pneg %p157
      $region34: #{rgcn_forward_pallas.1} parent=11 // pred_check_branch
        %266 = sbr.rel (%p264) target = $region36
      $region35: #{rgcn_forward_pallas.1} parent=11 // pred_region
        _
      $region36: #{rgcn_forward_pallas.1} parent=11 // pred_fallthru
        _
      // Predicated region
      $region37: #{rgcn_forward_pallas.1} parent=11 // pred_check
        %p267 = pneg %p178
      $region38: #{rgcn_forward_pallas.1} parent=11 // pred_check_branch
        %269 = sbr.rel (%p267) target = $region40
      $region39: #{rgcn_forward_pallas.1} parent=11 // pred_region
        _
      $region40: #{rgcn_forward_pallas.1} parent=11 // pred_fallthru
        _
      // Predicated region
      $region41: #{rgcn_forward_pallas.1} parent=11 // pred_check
        %p270 = pneg %p199
      $region42: #{rgcn_forward_pallas.1} parent=11 // pred_check_branch
        %272 = sbr.rel (%p270) target = $region44
      $region43: #{rgcn_forward_pallas.1} parent=11 // pred_region
        _
      $region44: #{rgcn_forward_pallas.1} parent=11 // pred_fallthru
        _
    $region12: #{rgcn_forward_pallas.1} parent=5 // pred_fallthru
      _
    %p273 = scmp.lt.s32.totalorder %s14, 2
    // Predicated region
    $region45: #{rgcn_forward_pallas.1} parent=5 // pred_check
      %p274 = pneg %p273
    $region46: #{rgcn_forward_pallas.1} parent=5 // pred_check_branch
      %276 = sbr.rel (%p274) target = $region48
    $region47: #{rgcn_forward_pallas.1} parent=5 // pred_region
      _
    $region48: #{rgcn_forward_pallas.1} parent=5 // pred_fallthru
      _
    %p277 = scmp.le.s32.totalorder 1, %s14
    %p278 = scmp.lt.s32.totalorder %s14, 3
    %p279 = pnand %p277, %p278
    %p280 = pneg %p279
    // Predicated region
    $region49: #{rgcn_forward_pallas.1} parent=5 // pred_check
      _
    $region50: #{rgcn_forward_pallas.1} parent=5 // pred_check_branch
      %282 = sbr.rel (%p279) target = $region52
    $region51: #{rgcn_forward_pallas.1} parent=5 // pred_region
      %s283 = ssub.s32 %s14, 1
      %s284 = smul.u32 16, %s24
      %p285 = scmp.lt.s32.totalorder %s284, 15
      %s286 = scalar_select %p285, %s284, 15
      %s287 = smul.addr %s286, 4
      %s288 = smul.addr %s287, 4
      %s289 = scalar_lea.vmem %s0, %s288
      %p290 = pneg %p52
      %p291 = pneg %p49
      %p292 = pneg %p73
      %p293 = pneg %p70
      %p294 = pneg %p94
      %p295 = pneg %p91
      %p296 = pneg %p115
      %p297 = pneg %p112
      %p298 = pneg %p136
      %p299 = pneg %p133
      %p300 = pneg %p157
      %p301 = pneg %p154
      %p302 = pneg %p178
      %p303 = pneg %p175
      %p304 = pneg %p199
      %p305 = pneg %p196
      %p306 = pneg %p227
      %p307 = pneg %p224
      %s308 = smul.u32 16, %s24
      %p309 = scmp.lt.s32.totalorder %s23, 1
      %s310 = scalar_select %p309, %s23, 1
      %p311 = scmp.lt.s32.totalorder %s308, 15
      %s312 = scalar_select %p311, %s308, 15
      %s313 = smul.addr %s310, 16
      %s314 = sadd.s32 %s312, %s313
      %s315 = smul.addr %s314, 8
      %s316 = scalar_lea.vmem %s8, %s315
      %s317 = smul.u32 16, %s24
      %p318 = scmp.lt.s32.totalorder %s317, 15
      %s319 = scalar_select %p318, %s317, 15
      %s320 = smul.addr %s319, 4
      %s321 = smul.addr %s320, 4
      %s322 = scalar_lea.vmem %s0, %s321
      %s323 = smul.u32 16, %s24
      %s324 = smul.u32 16, %s24
      %p325 = scmp.lt.s32.totalorder %s23, 1
      %s326 = scalar_select %p325, %s23, 1
      %p327 = scmp.lt.s32.totalorder %s324, 15
      %s328 = scalar_select %p327, %s324, 15
      %s329 = smul.addr %s326, 16
      %s330 = sadd.s32 %s328, %s329
      %s331 = smul.addr %s330, 8
      %s332 = scalar_lea.vmem %s8, %s331
      %s333 = smul.u32 16, %s24
      %s334 = smul.u32 %s24, 128
      %p335 = scmp.eq.s32.totalorder %s23, 0
      %p336 = scmp.eq.s32.totalorder %s24, 0
      %p337 = pnand %p335, %p336
      %p338 = pneg %p337
      // Predicated region
      $region53: #{rgcn_forward_pallas.1} parent=51 // pred_check
        _
      $region54: #{rgcn_forward_pallas.1} parent=51 // pred_check_branch
        %340 = sbr.rel (%p337) target = $region56
      $region55: #{rgcn_forward_pallas.1} parent=51 // pred_region
        %v341 = vld [vmem:[%s1] sm:$0xf]
        %v342 = vld [vmem:[%s1 + $0x4] sm:$0xf]
        %v343 = vld [vmem:[%s1 + $0x8] sm:$0xf]
        %v344 = vld [vmem:[%s1 + $0xc] sm:$0xf]
        %v345 = vld [vmem:[%s1 + $0x10] sm:$0xf]
        %v346 = vld [vmem:[%s1 + $0x14] sm:$0xf]
        %v347 = vld [vmem:[%s1 + $0x18] sm:$0xf]
        %v348 = vld [vmem:[%s1 + $0x1c] sm:$0xf]
        %v349 = vld [vmem:[%s1 + $0x20] sm:$0xf]
        %v350 = vld [vmem:[%s1 + $0x24] sm:$0xf]
        %v351 = vld [vmem:[%s1 + $0x28] sm:$0xf]
        %v352 = vld [vmem:[%s1 + $0x2c] sm:$0xf]
        %v353 = vld [vmem:[%s1 + $0x30] sm:$0xf]
        %v354 = vld [vmem:[%s1 + $0x34] sm:$0xf]
        %v355 = vld [vmem:[%s1 + $0x38] sm:$0xf]
        %v356 = vld [vmem:[%s1 + $0x3c] sm:$0xf]
        %v357 = vld [vmem:[%s2] sm:$0xf]
        %v358 = vld [vmem:[%s2 + $0x4] sm:$0xf]
        %v359 = vld [vmem:[%s2 + $0x8] sm:$0xf]
        %v360 = vld [vmem:[%s2 + $0xc] sm:$0xf]
        %v361 = vld [vmem:[%s2 + $0x10] sm:$0xf]
        %v362 = vld [vmem:[%s2 + $0x14] sm:$0xf]
        %v363 = vld [vmem:[%s2 + $0x18] sm:$0xf]
        %v364 = vld [vmem:[%s2 + $0x1c] sm:$0xf]
        %v365 = vld [vmem:[%s2 + $0x20] sm:$0xf]
        %v366 = vld [vmem:[%s2 + $0x24] sm:$0xf]
        %v367 = vld [vmem:[%s2 + $0x28] sm:$0xf]
        %v368 = vld [vmem:[%s2 + $0x2c] sm:$0xf]
        %v369 = vld [vmem:[%s2 + $0x30] sm:$0xf]
        %v370 = vld [vmem:[%s2 + $0x34] sm:$0xf]
        %v371 = vld [vmem:[%s2 + $0x38] sm:$0xf]
        %v372 = vld [vmem:[%s2 + $0x3c] sm:$0xf]
        %v389 = vunpack.c.l.b16 %v341
        %v390 = vunpack.c.l.b16 %v342
        %v391 = vunpack.c.l.b16 %v343
        %v392 = vunpack.c.l.b16 %v344
        %v393 = vunpack.c.l.b16 %v345
        %v394 = vunpack.c.l.b16 %v346
        %v395 = vunpack.c.l.b16 %v347
        %v396 = vunpack.c.l.b16 %v348
        %v397 = vunpack.c.l.b16 %v349
        %v398 = vunpack.c.l.b16 %v350
        %v399 = vunpack.c.l.b16 %v351
        %v400 = vunpack.c.l.b16 %v352
        %v401 = vunpack.c.l.b16 %v353
        %v402 = vunpack.c.l.b16 %v354
        %v403 = vunpack.c.l.b16 %v355
        %v404 = vunpack.c.l.b16 %v356
        %v405 = vpack.c.b16 %v390, %v389
        %v406 = vpack.c.b16 %v392, %v391
        %v407 = vpack.c.b16 %v394, %v393
        %v408 = vpack.c.b16 %v396, %v395
        %v409 = vpack.c.b16 %v398, %v397
        %v410 = vpack.c.b16 %v400, %v399
        %v411 = vpack.c.b16 %v402, %v401
        %v412 = vpack.c.b16 %v404, %v403
        %v437 = vunpack.c.l.b16 %v357
        %v438 = vunpack.c.l.b16 %v358
        %v439 = vunpack.c.l.b16 %v359
        %v440 = vunpack.c.l.b16 %v360
        %v441 = vunpack.c.l.b16 %v361
        %v442 = vunpack.c.l.b16 %v362
        %v443 = vunpack.c.l.b16 %v363
        %v444 = vunpack.c.l.b16 %v364
        %v445 = vunpack.c.l.b16 %v365
        %v446 = vunpack.c.l.b16 %v366
        %v447 = vunpack.c.l.b16 %v367
        %v448 = vunpack.c.l.b16 %v368
        %v449 = vunpack.c.l.b16 %v369
        %v450 = vunpack.c.l.b16 %v370
        %v451 = vunpack.c.l.b16 %v371
        %v452 = vunpack.c.l.b16 %v372
        %v453 = vpack.c.b16 %v438, %v437
        %v454 = vpack.c.b16 %v440, %v439
        %v455 = vpack.c.b16 %v442, %v441
        %v456 = vpack.c.b16 %v444, %v443
        %v457 = vpack.c.b16 %v446, %v445
        %v458 = vpack.c.b16 %v448, %v447
        %v459 = vpack.c.b16 %v450, %v449
        %v460 = vpack.c.b16 %v452, %v451
        %469 = vmatpush.bf16.msra.mxu0 %v460
        %470 = vmatpush.bf16.msra.mxu0 %v459
        %471 = vmatpush.bf16.msra.mxu0 %v458
        %472 = vmatpush.bf16.msra.mxu0 %v457
        %473 = vmatpush.bf16.msra.mxu0 %v456
        %474 = vmatpush.bf16.msra.mxu0 %v455
        %475 = vmatpush.bf16.msra.mxu0 %v454
        %476 = vmatpush.bf16.msra.mxu0 %v453
        %477 = vmatmul.bf16.gmra.mxu0 %v405
        %v478 = vpop.f32.mrf.mxu0
        %v479 = vadd.f32 0.0, %v478
        %v480 = vpop.f32.mrf.mxu0
        %v481 = vadd.f32 0.0, %v480
        %482 = vmatmul.bf16.gmra.mxu0 %v406
        %v483 = vpop.f32.mrf.mxu0
        %v484 = vadd.f32 0.0, %v483
        %v485 = vpop.f32.mrf.mxu0
        %v486 = vadd.f32 0.0, %v485
        %487 = vmatmul.bf16.gmra.mxu0 %v407
        %v488 = vpop.f32.mrf.mxu0
        %v489 = vadd.f32 0.0, %v488
        %v490 = vpop.f32.mrf.mxu0
        %v491 = vadd.f32 0.0, %v490
        %492 = vmatmul.bf16.gmra.mxu0 %v408
        %v493 = vpop.f32.mrf.mxu0
        %v494 = vadd.f32 0.0, %v493
        %v495 = vpop.f32.mrf.mxu0
        %v496 = vadd.f32 0.0, %v495
        %497 = vmatmul.bf16.gmra.mxu0 %v409
        %v498 = vpop.f32.mrf.mxu0
        %v499 = vadd.f32 0.0, %v498
        %v500 = vpop.f32.mrf.mxu0
        %v501 = vadd.f32 0.0, %v500
        %502 = vmatmul.bf16.gmra.mxu0 %v410
        %v503 = vpop.f32.mrf.mxu0
        %v504 = vadd.f32 0.0, %v503
        %v505 = vpop.f32.mrf.mxu0
        %v506 = vadd.f32 0.0, %v505
        %507 = vmatmul.bf16.gmra.mxu0 %v411
        %v508 = vpop.f32.mrf.mxu0
        %v509 = vadd.f32 0.0, %v508
        %v510 = vpop.f32.mrf.mxu0
        %v511 = vadd.f32 0.0, %v510
        %512 = vmatmul.bf16.gmra.mxu0 %v412
        %v513 = vpop.f32.mrf.mxu0
        %v514 = vadd.f32 0.0, %v513
        %v515 = vpop.f32.mrf.mxu0
        %v516 = vadd.f32 0.0, %v515
        %517 = vdwg.mxu0
        %v518 = vpack.c.bf16 %v479, %v479
        %v519 = vpack.c.bf16 %v481, %v481
        %v520 = vpack.c.bf16 %v484, %v484
        %v521 = vpack.c.bf16 %v486, %v486
        %v522 = vpack.c.bf16 %v489, %v489
        %v523 = vpack.c.bf16 %v491, %v491
        %v524 = vpack.c.bf16 %v494, %v494
        %v525 = vpack.c.bf16 %v496, %v496
        %v526 = vpack.c.bf16 %v499, %v499
        %v527 = vpack.c.bf16 %v501, %v501
        %v528 = vpack.c.bf16 %v504, %v504
        %v529 = vpack.c.bf16 %v506, %v506
        %v530 = vpack.c.bf16 %v509, %v509
        %v531 = vpack.c.bf16 %v511, %v511
        %v532 = vpack.c.bf16 %v514, %v514
        %v533 = vpack.c.bf16 %v516, %v516
        %534 = vst [vmem:[#allocation2] sm:$0xf] %v518
        %535 = vst [vmem:[#allocation2 + $0x4] sm:$0xf] %v519
        %536 = vst [vmem:[#allocation2 + $0x8] sm:$0xf] %v520
        %537 = vst [vmem:[#allocation2 + $0xc] sm:$0xf] %v521
        %538 = vst [vmem:[#allocation2 + $0x10] sm:$0xf] %v522
        %539 = vst [vmem:[#allocation2 + $0x14] sm:$0xf] %v523
        %540 = vst [vmem:[#allocation2 + $0x18] sm:$0xf] %v524
        %541 = vst [vmem:[#allocation2 + $0x1c] sm:$0xf] %v525
        %542 = vst [vmem:[#allocation2 + $0x20] sm:$0xf] %v526
        %543 = vst [vmem:[#allocation2 + $0x24] sm:$0xf] %v527
        %544 = vst [vmem:[#allocation2 + $0x28] sm:$0xf] %v528
        %545 = vst [vmem:[#allocation2 + $0x2c] sm:$0xf] %v529
        %546 = vst [vmem:[#allocation2 + $0x30] sm:$0xf] %v530
        %547 = vst [vmem:[#allocation2 + $0x34] sm:$0xf] %v531
        %548 = vst [vmem:[#allocation2 + $0x38] sm:$0xf] %v532
        %549 = vst [vmem:[#allocation2 + $0x3c] sm:$0xf] %v533
        %s550 = scalar_lea.vmem %s2, 64
        %v551 = vld [vmem:[%s550] sm:$0xf]
        %v552 = vld [vmem:[%s550 + $0x4] sm:$0xf]
        %v553 = vld [vmem:[%s550 + $0x8] sm:$0xf]
        %v554 = vld [vmem:[%s550 + $0xc] sm:$0xf]
        %v555 = vld [vmem:[%s550 + $0x10] sm:$0xf]
        %v556 = vld [vmem:[%s550 + $0x14] sm:$0xf]
        %v557 = vld [vmem:[%s550 + $0x18] sm:$0xf]
        %v558 = vld [vmem:[%s550 + $0x1c] sm:$0xf]
        %v559 = vld [vmem:[%s550 + $0x20] sm:$0xf]
        %v560 = vld [vmem:[%s550 + $0x24] sm:$0xf]
        %v561 = vld [vmem:[%s550 + $0x28] sm:$0xf]
        %v562 = vld [vmem:[%s550 + $0x2c] sm:$0xf]
        %v563 = vld [vmem:[%s550 + $0x30] sm:$0xf]
        %v564 = vld [vmem:[%s550 + $0x34] sm:$0xf]
        %v565 = vld [vmem:[%s550 + $0x38] sm:$0xf]
        %v566 = vld [vmem:[%s550 + $0x3c] sm:$0xf]
        %v583 = vunpack.c.l.b16 %v551
        %v584 = vunpack.c.l.b16 %v552
        %v585 = vunpack.c.l.b16 %v553
        %v586 = vunpack.c.l.b16 %v554
        %v587 = vunpack.c.l.b16 %v555
        %v588 = vunpack.c.l.b16 %v556
        %v589 = vunpack.c.l.b16 %v557
        %v590 = vunpack.c.l.b16 %v558
        %v591 = vunpack.c.l.b16 %v559
        %v592 = vunpack.c.l.b16 %v560
        %v593 = vunpack.c.l.b16 %v561
        %v594 = vunpack.c.l.b16 %v562
        %v595 = vunpack.c.l.b16 %v563
        %v596 = vunpack.c.l.b16 %v564
        %v597 = vunpack.c.l.b16 %v565
        %v598 = vunpack.c.l.b16 %v566
        %v599 = vpack.c.b16 %v584, %v583
        %v600 = vpack.c.b16 %v586, %v585
        %v601 = vpack.c.b16 %v588, %v587
        %v602 = vpack.c.b16 %v590, %v589
        %v603 = vpack.c.b16 %v592, %v591
        %v604 = vpack.c.b16 %v594, %v593
        %v605 = vpack.c.b16 %v596, %v595
        %v606 = vpack.c.b16 %v598, %v597
        %615 = vmatpush.bf16.msra.mxu0 %v606
        %616 = vmatpush.bf16.msra.mxu0 %v605
        %617 = vmatpush.bf16.msra.mxu0 %v604
        %618 = vmatpush.bf16.msra.mxu0 %v603
        %619 = vmatpush.bf16.msra.mxu0 %v602
        %620 = vmatpush.bf16.msra.mxu0 %v601
        %621 = vmatpush.bf16.msra.mxu0 %v600
        %622 = vmatpush.bf16.msra.mxu0 %v599
        %623 = vmatmul.bf16.gmra.mxu0 %v405
        %v624 = vpop.f32.mrf.mxu0
        %v625 = vadd.f32 0.0, %v624
        %v626 = vpop.f32.mrf.mxu0
        %v627 = vadd.f32 0.0, %v626
        %628 = vmatmul.bf16.gmra.mxu0 %v406
        %v629 = vpop.f32.mrf.mxu0
        %v630 = vadd.f32 0.0, %v629
        %v631 = vpop.f32.mrf.mxu0
        %v632 = vadd.f32 0.0, %v631
        %633 = vmatmul.bf16.gmra.mxu0 %v407
        %v634 = vpop.f32.mrf.mxu0
        %v635 = vadd.f32 0.0, %v634
        %v636 = vpop.f32.mrf.mxu0
        %v637 = vadd.f32 0.0, %v636
        %638 = vmatmul.bf16.gmra.mxu0 %v408
        %v639 = vpop.f32.mrf.mxu0
        %v640 = vadd.f32 0.0, %v639
        %v641 = vpop.f32.mrf.mxu0
        %v642 = vadd.f32 0.0, %v641
        %643 = vmatmul.bf16.gmra.mxu0 %v409
        %v644 = vpop.f32.mrf.mxu0
        %v645 = vadd.f32 0.0, %v644
        %v646 = vpop.f32.mrf.mxu0
        %v647 = vadd.f32 0.0, %v646
        %648 = vmatmul.bf16.gmra.mxu0 %v410
        %v649 = vpop.f32.mrf.mxu0
        %v650 = vadd.f32 0.0, %v649
        %v651 = vpop.f32.mrf.mxu0
        %v652 = vadd.f32 0.0, %v651
        %653 = vmatmul.bf16.gmra.mxu0 %v411
        %v654 = vpop.f32.mrf.mxu0
        %v655 = vadd.f32 0.0, %v654
        %v656 = vpop.f32.mrf.mxu0
        %v657 = vadd.f32 0.0, %v656
        %658 = vmatmul.bf16.gmra.mxu0 %v412
        %v659 = vpop.f32.mrf.mxu0
        %v660 = vadd.f32 0.0, %v659
        %v661 = vpop.f32.mrf.mxu0
        %v662 = vadd.f32 0.0, %v661
        %663 = vdwg.mxu0
        %v664 = vpack.c.bf16 %v625, %v625
        %v665 = vpack.c.bf16 %v627, %v627
        %v666 = vpack.c.bf16 %v630, %v630
        %v667 = vpack.c.bf16 %v632, %v632
        %v668 = vpack.c.bf16 %v635, %v635
        %v669 = vpack.c.bf16 %v637, %v637
        %v670 = vpack.c.bf16 %v640, %v640
        %v671 = vpack.c.bf16 %v642, %v642
        %v672 = vpack.c.bf16 %v645, %v645
        %v673 = vpack.c.bf16 %v647, %v647
        %v674 = vpack.c.bf16 %v650, %v650
        %v675 = vpack.c.bf16 %v652, %v652
        %v676 = vpack.c.bf16 %v655, %v655
        %v677 = vpack.c.bf16 %v657, %v657
        %v678 = vpack.c.bf16 %v660, %v660
        %v679 = vpack.c.bf16 %v662, %v662
        %680 = vst [vmem:[#allocation2 + $0x40] sm:$0xf] %v664
        %681 = vst [vmem:[#allocation2 + $0x44] sm:$0xf] %v665
        %682 = vst [vmem:[#allocation2 + $0x48] sm:$0xf] %v666
        %683 = vst [vmem:[#allocation2 + $0x4c] sm:$0xf] %v667
        %684 = vst [vmem:[#allocation2 + $0x50] sm:$0xf] %v668
        %685 = vst [vmem:[#allocation2 + $0x54] sm:$0xf] %v669
        %686 = vst [vmem:[#allocation2 + $0x58] sm:$0xf] %v670
        %687 = vst [vmem:[#allocation2 + $0x5c] sm:$0xf] %v671
        %688 = vst [vmem:[#allocation2 + $0x60] sm:$0xf] %v672
        %689 = vst [vmem:[#allocation2 + $0x64] sm:$0xf] %v673
        %690 = vst [vmem:[#allocation2 + $0x68] sm:$0xf] %v674
        %691 = vst [vmem:[#allocation2 + $0x6c] sm:$0xf] %v675
        %692 = vst [vmem:[#allocation2 + $0x70] sm:$0xf] %v676
        %693 = vst [vmem:[#allocation2 + $0x74] sm:$0xf] %v677
        %694 = vst [vmem:[#allocation2 + $0x78] sm:$0xf] %v678
        %695 = vst [vmem:[#allocation2 + $0x7c] sm:$0xf] %v679
        %s696 = scalar_lea.vmem %s2, 128
        %v697 = vld [vmem:[%s696] sm:$0xf]
        %v698 = vld [vmem:[%s696 + $0x4] sm:$0xf]
        %v699 = vld [vmem:[%s696 + $0x8] sm:$0xf]
        %v700 = vld [vmem:[%s696 + $0xc] sm:$0xf]
        %v701 = vld [vmem:[%s696 + $0x10] sm:$0xf]
        %v702 = vld [vmem:[%s696 + $0x14] sm:$0xf]
        %v703 = vld [vmem:[%s696 + $0x18] sm:$0xf]
        %v704 = vld [vmem:[%s696 + $0x1c] sm:$0xf]
        %v705 = vld [vmem:[%s696 + $0x20] sm:$0xf]
        %v706 = vld [vmem:[%s696 + $0x24] sm:$0xf]
        %v707 = vld [vmem:[%s696 + $0x28] sm:$0xf]
        %v708 = vld [vmem:[%s696 + $0x2c] sm:$0xf]
        %v709 = vld [vmem:[%s696 + $0x30] sm:$0xf]
        %v710 = vld [vmem:[%s696 + $0x34] sm:$0xf]
        %v711 = vld [vmem:[%s696 + $0x38] sm:$0xf]
        %v712 = vld [vmem:[%s696 + $0x3c] sm:$0xf]
        %v729 = vunpack.c.l.b16 %v697
        %v730 = vunpack.c.l.b16 %v698
        %v731 = vunpack.c.l.b16 %v699
        %v732 = vunpack.c.l.b16 %v700
        %v733 = vunpack.c.l.b16 %v701
        %v734 = vunpack.c.l.b16 %v702
        %v735 = vunpack.c.l.b16 %v703
        %v736 = vunpack.c.l.b16 %v704
        %v737 = vunpack.c.l.b16 %v705
        %v738 = vunpack.c.l.b16 %v706
        %v739 = vunpack.c.l.b16 %v707
        %v740 = vunpack.c.l.b16 %v708
        %v741 = vunpack.c.l.b16 %v709
        %v742 = vunpack.c.l.b16 %v710
        %v743 = vunpack.c.l.b16 %v711
        %v744 = vunpack.c.l.b16 %v712
        %v745 = vpack.c.b16 %v730, %v729
        %v746 = vpack.c.b16 %v732, %v731
        %v747 = vpack.c.b16 %v734, %v733
        %v748 = vpack.c.b16 %v736, %v735
        %v749 = vpack.c.b16 %v738, %v737
        %v750 = vpack.c.b16 %v740, %v739
        %v751 = vpack.c.b16 %v742, %v741
        %v752 = vpack.c.b16 %v744, %v743
        %761 = vmatpush.bf16.msra.mxu0 %v752
        %762 = vmatpush.bf16.msra.mxu0 %v751
        %763 = vmatpush.bf16.msra.mxu0 %v750
        %764 = vmatpush.bf16.msra.mxu0 %v749
        %765 = vmatpush.bf16.msra.mxu0 %v748
        %766 = vmatpush.bf16.msra.mxu0 %v747
        %767 = vmatpush.bf16.msra.mxu0 %v746
        %768 = vmatpush.bf16.msra.mxu0 %v745
        %769 = vmatmul.bf16.gmra.mxu0 %v405
        %v770 = vpop.f32.mrf.mxu0
        %v771 = vadd.f32 0.0, %v770
        %v772 = vpop.f32.mrf.mxu0
        %v773 = vadd.f32 0.0, %v772
        %774 = vmatmul.bf16.gmra.mxu0 %v406
        %v775 = vpop.f32.mrf.mxu0
        %v776 = vadd.f32 0.0, %v775
        %v777 = vpop.f32.mrf.mxu0
        %v778 = vadd.f32 0.0, %v777
        %779 = vmatmul.bf16.gmra.mxu0 %v407
        %v780 = vpop.f32.mrf.mxu0
        %v781 = vadd.f32 0.0, %v780
        %v782 = vpop.f32.mrf.mxu0
        %v783 = vadd.f32 0.0, %v782
        %784 = vmatmul.bf16.gmra.mxu0 %v408
        %v785 = vpop.f32.mrf.mxu0
        %v786 = vadd.f32 0.0, %v785
        %v787 = vpop.f32.mrf.mxu0
        %v788 = vadd.f32 0.0, %v787
        %789 = vmatmul.bf16.gmra.mxu0 %v409
        %v790 = vpop.f32.mrf.mxu0
        %v791 = vadd.f32 0.0, %v790
        %v792 = vpop.f32.mrf.mxu0
        %v793 = vadd.f32 0.0, %v792
        %794 = vmatmul.bf16.gmra.mxu0 %v410
        %v795 = vpop.f32.mrf.mxu0
        %v796 = vadd.f32 0.0, %v795
        %v797 = vpop.f32.mrf.mxu0
        %v798 = vadd.f32 0.0, %v797
        %799 = vmatmul.bf16.gmra.mxu0 %v411
        %v800 = vpop.f32.mrf.mxu0
        %v801 = vadd.f32 0.0, %v800
        %v802 = vpop.f32.mrf.mxu0
        %v803 = vadd.f32 0.0, %v802
        %804 = vmatmul.bf16.gmra.mxu0 %v412
        %v805 = vpop.f32.mrf.mxu0
        %v806 = vadd.f32 0.0, %v805
        %v807 = vpop.f32.mrf.mxu0
        %v808 = vadd.f32 0.0, %v807
        %809 = vdwg.mxu0
        %v810 = vpack.c.bf16 %v771, %v771
        %v811 = vpack.c.bf16 %v773, %v773
        %v812 = vpack.c.bf16 %v776, %v776
        %v813 = vpack.c.bf16 %v778, %v778
        %v814 = vpack.c.bf16 %v781, %v781
        %v815 = vpack.c.bf16 %v783, %v783
        %v816 = vpack.c.bf16 %v786, %v786
        %v817 = vpack.c.bf16 %v788, %v788
        %v818 = vpack.c.bf16 %v791, %v791
        %v819 = vpack.c.bf16 %v793, %v793
        %v820 = vpack.c.bf16 %v796, %v796
        %v821 = vpack.c.bf16 %v798, %v798
        %v822 = vpack.c.bf16 %v801, %v801
        %v823 = vpack.c.bf16 %v803, %v803
        %v824 = vpack.c.bf16 %v806, %v806
        %v825 = vpack.c.bf16 %v808, %v808
        %826 = vst [vmem:[#allocation2 + $0x80] sm:$0xf] %v810
        %827 = vst [vmem:[#allocation2 + $0x84] sm:$0xf] %v811
        %828 = vst [vmem:[#allocation2 + $0x88] sm:$0xf] %v812
        %829 = vst [vmem:[#allocation2 + $0x8c] sm:$0xf] %v813
        %830 = vst [vmem:[#allocation2 + $0x90] sm:$0xf] %v814
        %831 = vst [vmem:[#allocation2 + $0x94] sm:$0xf] %v815
        %832 = vst [vmem:[#allocation2 + $0x98] sm:$0xf] %v816
        %833 = vst [vmem:[#allocation2 + $0x9c] sm:$0xf] %v817
        %834 = vst [vmem:[#allocation2 + $0xa0] sm:$0xf] %v818
        %835 = vst [vmem:[#allocation2 + $0xa4] sm:$0xf] %v819
        %836 = vst [vmem:[#allocation2 + $0xa8] sm:$0xf] %v820
        %837 = vst [vmem:[#allocation2 + $0xac] sm:$0xf] %v821
        %838 = vst [vmem:[#allocation2 + $0xb0] sm:$0xf] %v822
        %839 = vst [vmem:[#allocation2 + $0xb4] sm:$0xf] %v823
        %840 = vst [vmem:[#allocation2 + $0xb8] sm:$0xf] %v824
        %841 = vst [vmem:[#allocation2 + $0xbc] sm:$0xf] %v825
        %s842 = scalar_lea.vmem %s2, 192
        %v843 = vld [vmem:[%s842] sm:$0xf]
        %v844 = vld [vmem:[%s842 + $0x4] sm:$0xf]
        %v845 = vld [vmem:[%s842 + $0x8] sm:$0xf]
        %v846 = vld [vmem:[%s842 + $0xc] sm:$0xf]
        %v847 = vld [vmem:[%s842 + $0x10] sm:$0xf]
        %v848 = vld [vmem:[%s842 + $0x14] sm:$0xf]
        %v849 = vld [vmem:[%s842 + $0x18] sm:$0xf]
        %v850 = vld [vmem:[%s842 + $0x1c] sm:$0xf]
        %v851 = vld [vmem:[%s842 + $0x20] sm:$0xf]
        %v852 = vld [vmem:[%s842 + $0x24] sm:$0xf]
        %v853 = vld [vmem:[%s842 + $0x28] sm:$0xf]
        %v854 = vld [vmem:[%s842 + $0x2c] sm:$0xf]
        %v855 = vld [vmem:[%s842 + $0x30] sm:$0xf]
        %v856 = vld [vmem:[%s842 + $0x34] sm:$0xf]
        %v857 = vld [vmem:[%s842 + $0x38] sm:$0xf]
        %v858 = vld [vmem:[%s842 + $0x3c] sm:$0xf]
        %v875 = vunpack.c.l.b16 %v843
        %v876 = vunpack.c.l.b16 %v844
        %v877 = vunpack.c.l.b16 %v845
        %v878 = vunpack.c.l.b16 %v846
        %v879 = vunpack.c.l.b16 %v847
        %v880 = vunpack.c.l.b16 %v848
        %v881 = vunpack.c.l.b16 %v849
        %v882 = vunpack.c.l.b16 %v850
        %v883 = vunpack.c.l.b16 %v851
        %v884 = vunpack.c.l.b16 %v852
        %v885 = vunpack.c.l.b16 %v853
        %v886 = vunpack.c.l.b16 %v854
        %v887 = vunpack.c.l.b16 %v855
        %v888 = vunpack.c.l.b16 %v856
        %v889 = vunpack.c.l.b16 %v857
        %v890 = vunpack.c.l.b16 %v858
        %v891 = vpack.c.b16 %v876, %v875
        %v892 = vpack.c.b16 %v878, %v877
        %v893 = vpack.c.b16 %v880, %v879
        %v894 = vpack.c.b16 %v882, %v881
        %v895 = vpack.c.b16 %v884, %v883
        %v896 = vpack.c.b16 %v886, %v885
        %v897 = vpack.c.b16 %v888, %v887
        %v898 = vpack.c.b16 %v890, %v889
        %907 = vmatpush.bf16.msra.mxu0 %v898
        %908 = vmatpush.bf16.msra.mxu0 %v897
        %909 = vmatpush.bf16.msra.mxu0 %v896
        %910 = vmatpush.bf16.msra.mxu0 %v895
        %911 = vmatpush.bf16.msra.mxu0 %v894
        %912 = vmatpush.bf16.msra.mxu0 %v893
        %913 = vmatpush.bf16.msra.mxu0 %v892
        %914 = vmatpush.bf16.msra.mxu0 %v891
        %915 = vmatmul.bf16.gmra.mxu0 %v405
        %v916 = vpop.f32.mrf.mxu0
        %v917 = vadd.f32 0.0, %v916
        %v918 = vpop.f32.mrf.mxu0
        %v919 = vadd.f32 0.0, %v918
        %920 = vmatmul.bf16.gmra.mxu0 %v406
        %v921 = vpop.f32.mrf.mxu0
        %v922 = vadd.f32 0.0, %v921
        %v923 = vpop.f32.mrf.mxu0
        %v924 = vadd.f32 0.0, %v923
        %925 = vmatmul.bf16.gmra.mxu0 %v407
        %v926 = vpop.f32.mrf.mxu0
        %v927 = vadd.f32 0.0, %v926
        %v928 = vpop.f32.mrf.mxu0
        %v929 = vadd.f32 0.0, %v928
        %930 = vmatmul.bf16.gmra.mxu0 %v408
        %v931 = vpop.f32.mrf.mxu0
        %v932 = vadd.f32 0.0, %v931
        %v933 = vpop.f32.mrf.mxu0
        %v934 = vadd.f32 0.0, %v933
        %935 = vmatmul.bf16.gmra.mxu0 %v409
        %v936 = vpop.f32.mrf.mxu0
        %v937 = vadd.f32 0.0, %v936
        %v938 = vpop.f32.mrf.mxu0
        %v939 = vadd.f32 0.0, %v938
        %940 = vmatmul.bf16.gmra.mxu0 %v410
        %v941 = vpop.f32.mrf.mxu0
        %v942 = vadd.f32 0.0, %v941
        %v943 = vpop.f32.mrf.mxu0
        %v944 = vadd.f32 0.0, %v943
        %945 = vmatmul.bf16.gmra.mxu0 %v411
        %v946 = vpop.f32.mrf.mxu0
        %v947 = vadd.f32 0.0, %v946
        %v948 = vpop.f32.mrf.mxu0
        %v949 = vadd.f32 0.0, %v948
        %950 = vmatmul.bf16.gmra.mxu0 %v412
        %v951 = vpop.f32.mrf.mxu0
        %v952 = vadd.f32 0.0, %v951
        %v953 = vpop.f32.mrf.mxu0
        %v954 = vadd.f32 0.0, %v953
        %955 = vdwg.mxu0
        %v956 = vpack.c.bf16 %v917, %v917
        %v957 = vpack.c.bf16 %v919, %v919
        %v958 = vpack.c.bf16 %v922, %v922
        %v959 = vpack.c.bf16 %v924, %v924
        %v960 = vpack.c.bf16 %v927, %v927
        %v961 = vpack.c.bf16 %v929, %v929
        %v962 = vpack.c.bf16 %v932, %v932
        %v963 = vpack.c.bf16 %v934, %v934
        %v964 = vpack.c.bf16 %v937, %v937
        %v965 = vpack.c.bf16 %v939, %v939
        %v966 = vpack.c.bf16 %v942, %v942
        %v967 = vpack.c.bf16 %v944, %v944
        %v968 = vpack.c.bf16 %v947, %v947
        %v969 = vpack.c.bf16 %v949, %v949
        %v970 = vpack.c.bf16 %v952, %v952
        %v971 = vpack.c.bf16 %v954, %v954
        %972 = vst [vmem:[#allocation2 + $0xc0] sm:$0xf] %v956
        %973 = vst [vmem:[#allocation2 + $0xc4] sm:$0xf] %v957
        %974 = vst [vmem:[#allocation2 + $0xc8] sm:$0xf] %v958
        %975 = vst [vmem:[#allocation2 + $0xcc] sm:$0xf] %v959
        %976 = vst [vmem:[#allocation2 + $0xd0] sm:$0xf] %v960
        %977 = vst [vmem:[#allocation2 + $0xd4] sm:$0xf] %v961
        %978 = vst [vmem:[#allocation2 + $0xd8] sm:$0xf] %v962
        %979 = vst [vmem:[#allocation2 + $0xdc] sm:$0xf] %v963
        %980 = vst [vmem:[#allocation2 + $0xe0] sm:$0xf] %v964
        %981 = vst [vmem:[#allocation2 + $0xe4] sm:$0xf] %v965
        %982 = vst [vmem:[#allocation2 + $0xe8] sm:$0xf] %v966
        %983 = vst [vmem:[#allocation2 + $0xec] sm:$0xf] %v967
        %984 = vst [vmem:[#allocation2 + $0xf0] sm:$0xf] %v968
        %985 = vst [vmem:[#allocation2 + $0xf4] sm:$0xf] %v969
        %986 = vst [vmem:[#allocation2 + $0xf8] sm:$0xf] %v970
        %987 = vst [vmem:[#allocation2 + $0xfc] sm:$0xf] %v971
      $region56: #{rgcn_forward_pallas.1} parent=51 // pred_fallthru
        _
      %p988 = scmp.eq.s32.totalorder %s23, 1
      %p989 = pnand %p988, %p336
      %p990 = pneg %p989
      // Predicated region
      $region57: #{rgcn_forward_pallas.1} parent=51 // pred_check
        _
      $region58: #{rgcn_forward_pallas.1} parent=51 // pred_check_branch
        %992 = sbr.rel (%p989) target = $region60
      $region59: #{rgcn_forward_pallas.1} parent=51 // pred_region
        %v993 = vld [vmem:[#allocation3] sm:$0xf]
        %v994 = vld [vmem:[#allocation3 + $0x4] sm:$0xf]
        %v995 = vld [vmem:[#allocation3 + $0x8] sm:$0xf]
        %v996 = vld [vmem:[#allocation3 + $0xc] sm:$0xf]
        %v997 = vld [vmem:[#allocation3 + $0x10] sm:$0xf]
        %v998 = vld [vmem:[#allocation3 + $0x14] sm:$0xf]
        %v999 = vld [vmem:[#allocation3 + $0x18] sm:$0xf]
        %v1000 = vld [vmem:[#allocation3 + $0x1c] sm:$0xf]
        %v1001 = vld [vmem:[#allocation3 + $0x20] sm:$0xf]
        %v1002 = vld [vmem:[#allocation3 + $0x24] sm:$0xf]
        %v1003 = vld [vmem:[#allocation3 + $0x28] sm:$0xf]
        %v1004 = vld [vmem:[#allocation3 + $0x2c] sm:$0xf]
        %v1005 = vld [vmem:[#allocation3 + $0x30] sm:$0xf]
        %v1006 = vld [vmem:[#allocation3 + $0x34] sm:$0xf]
        %v1007 = vld [vmem:[#allocation3 + $0x38] sm:$0xf]
        %v1008 = vld [vmem:[#allocation3 + $0x3c] sm:$0xf]
        %v1009 = vld [vmem:[%s5] sm:$0xf]
        %v1010 = vld [vmem:[%s5 + $0x4] sm:$0xf]
        %v1011 = vld [vmem:[%s5 + $0x8] sm:$0xf]
        %v1012 = vld [vmem:[%s5 + $0xc] sm:$0xf]
        %v1013 = vld [vmem:[%s5 + $0x10] sm:$0xf]
        %v1014 = vld [vmem:[%s5 + $0x14] sm:$0xf]
        %v1015 = vld [vmem:[%s5 + $0x18] sm:$0xf]
        %v1016 = vld [vmem:[%s5 + $0x1c] sm:$0xf]
        %v1017 = vld [vmem:[%s5 + $0x20] sm:$0xf]
        %v1018 = vld [vmem:[%s5 + $0x24] sm:$0xf]
        %v1019 = vld [vmem:[%s5 + $0x28] sm:$0xf]
        %v1020 = vld [vmem:[%s5 + $0x2c] sm:$0xf]
        %v1021 = vld [vmem:[%s5 + $0x30] sm:$0xf]
        %v1022 = vld [vmem:[%s5 + $0x34] sm:$0xf]
        %v1023 = vld [vmem:[%s5 + $0x38] sm:$0xf]
        %v1024 = vld [vmem:[%s5 + $0x3c] sm:$0xf]
        %v1041 = vunpack.c.l.b16 %v993
        %v1042 = vunpack.c.l.b16 %v994
        %v1043 = vunpack.c.l.b16 %v995
        %v1044 = vunpack.c.l.b16 %v996
        %v1045 = vunpack.c.l.b16 %v997
        %v1046 = vunpack.c.l.b16 %v998
        %v1047 = vunpack.c.l.b16 %v999
        %v1048 = vunpack.c.l.b16 %v1000
        %v1049 = vunpack.c.l.b16 %v1001
        %v1050 = vunpack.c.l.b16 %v1002
        %v1051 = vunpack.c.l.b16 %v1003
        %v1052 = vunpack.c.l.b16 %v1004
        %v1053 = vunpack.c.l.b16 %v1005
        %v1054 = vunpack.c.l.b16 %v1006
        %v1055 = vunpack.c.l.b16 %v1007
        %v1056 = vunpack.c.l.b16 %v1008
        %v1057 = vpack.c.b16 %v1042, %v1041
        %v1058 = vpack.c.b16 %v1044, %v1043
        %v1059 = vpack.c.b16 %v1046, %v1045
        %v1060 = vpack.c.b16 %v1048, %v1047
        %v1061 = vpack.c.b16 %v1050, %v1049
        %v1062 = vpack.c.b16 %v1052, %v1051
        %v1063 = vpack.c.b16 %v1054, %v1053
        %v1064 = vpack.c.b16 %v1056, %v1055
        %v1089 = vunpack.c.l.b16 %v1009
        %v1090 = vunpack.c.l.b16 %v1010
        %v1091 = vunpack.c.l.b16 %v1011
        %v1092 = vunpack.c.l.b16 %v1012
        %v1093 = vunpack.c.l.b16 %v1013
        %v1094 = vunpack.c.l.b16 %v1014
        %v1095 = vunpack.c.l.b16 %v1015
        %v1096 = vunpack.c.l.b16 %v1016
        %v1097 = vunpack.c.l.b16 %v1017
        %v1098 = vunpack.c.l.b16 %v1018
        %v1099 = vunpack.c.l.b16 %v1019
        %v1100 = vunpack.c.l.b16 %v1020
        %v1101 = vunpack.c.l.b16 %v1021
        %v1102 = vunpack.c.l.b16 %v1022
        %v1103 = vunpack.c.l.b16 %v1023
        %v1104 = vunpack.c.l.b16 %v1024
        %v1105 = vpack.c.b16 %v1090, %v1089
        %v1106 = vpack.c.b16 %v1092, %v1091
        %v1107 = vpack.c.b16 %v1094, %v1093
        %v1108 = vpack.c.b16 %v1096, %v1095
        %v1109 = vpack.c.b16 %v1098, %v1097
        %v1110 = vpack.c.b16 %v1100, %v1099
        %v1111 = vpack.c.b16 %v1102, %v1101
        %v1112 = vpack.c.b16 %v1104, %v1103
        %1121 = vmatpush.bf16.msra.mxu0 %v1112
        %1122 = vmatpush.bf16.msra.mxu0 %v1111
        %1123 = vmatpush.bf16.msra.mxu0 %v1110
        %1124 = vmatpush.bf16.msra.mxu0 %v1109
        %1125 = vmatpush.bf16.msra.mxu0 %v1108
        %1126 = vmatpush.bf16.msra.mxu0 %v1107
        %1127 = vmatpush.bf16.msra.mxu0 %v1106
        %1128 = vmatpush.bf16.msra.mxu0 %v1105
        %1129 = vmatmul.bf16.gmra.mxu0 %v1057
        %v1130 = vpop.f32.mrf.mxu0
        %v1131 = vadd.f32 0.0, %v1130
        %v1132 = vpop.f32.mrf.mxu0
        %v1133 = vadd.f32 0.0, %v1132
        %1134 = vmatmul.bf16.gmra.mxu0 %v1058
        %v1135 = vpop.f32.mrf.mxu0
        %v1136 = vadd.f32 0.0, %v1135
        %v1137 = vpop.f32.mrf.mxu0
        %v1138 = vadd.f32 0.0, %v1137
        %1139 = vmatmul.bf16.gmra.mxu0 %v1059
        %v1140 = vpop.f32.mrf.mxu0
        %v1141 = vadd.f32 0.0, %v1140
        %v1142 = vpop.f32.mrf.mxu0
        %v1143 = vadd.f32 0.0, %v1142
        %1144 = vmatmul.bf16.gmra.mxu0 %v1060
        %v1145 = vpop.f32.mrf.mxu0
        %v1146 = vadd.f32 0.0, %v1145
        %v1147 = vpop.f32.mrf.mxu0
        %v1148 = vadd.f32 0.0, %v1147
        %1149 = vmatmul.bf16.gmra.mxu0 %v1061
        %v1150 = vpop.f32.mrf.mxu0
        %v1151 = vadd.f32 0.0, %v1150
        %v1152 = vpop.f32.mrf.mxu0
        %v1153 = vadd.f32 0.0, %v1152
        %1154 = vmatmul.bf16.gmra.mxu0 %v1062
        %v1155 = vpop.f32.mrf.mxu0
        %v1156 = vadd.f32 0.0, %v1155
        %v1157 = vpop.f32.mrf.mxu0
        %v1158 = vadd.f32 0.0, %v1157
        %1159 = vmatmul.bf16.gmra.mxu0 %v1063
        %v1160 = vpop.f32.mrf.mxu0
        %v1161 = vadd.f32 0.0, %v1160
        %v1162 = vpop.f32.mrf.mxu0
        %v1163 = vadd.f32 0.0, %v1162
        %1164 = vmatmul.bf16.gmra.mxu0 %v1064
        %v1165 = vpop.f32.mrf.mxu0
        %v1166 = vadd.f32 0.0, %v1165
        %v1167 = vpop.f32.mrf.mxu0
        %v1168 = vadd.f32 0.0, %v1167
        %1169 = vdwg.mxu0
        %v1170 = vpack.c.bf16 %v1131, %v1131
        %v1171 = vpack.c.bf16 %v1133, %v1133
        %v1172 = vpack.c.bf16 %v1136, %v1136
        %v1173 = vpack.c.bf16 %v1138, %v1138
        %v1174 = vpack.c.bf16 %v1141, %v1141
        %v1175 = vpack.c.bf16 %v1143, %v1143
        %v1176 = vpack.c.bf16 %v1146, %v1146
        %v1177 = vpack.c.bf16 %v1148, %v1148
        %v1178 = vpack.c.bf16 %v1151, %v1151
        %v1179 = vpack.c.bf16 %v1153, %v1153
        %v1180 = vpack.c.bf16 %v1156, %v1156
        %v1181 = vpack.c.bf16 %v1158, %v1158
        %v1182 = vpack.c.bf16 %v1161, %v1161
        %v1183 = vpack.c.bf16 %v1163, %v1163
        %v1184 = vpack.c.bf16 %v1166, %v1166
        %v1185 = vpack.c.bf16 %v1168, %v1168
        %1186 = vst [vmem:[#allocation2] sm:$0xf] %v1170
        %1187 = vst [vmem:[#allocation2 + $0x4] sm:$0xf] %v1171
        %1188 = vst [vmem:[#allocation2 + $0x8] sm:$0xf] %v1172
        %1189 = vst [vmem:[#allocation2 + $0xc] sm:$0xf] %v1173
        %1190 = vst [vmem:[#allocation2 + $0x10] sm:$0xf] %v1174
        %1191 = vst [vmem:[#allocation2 + $0x14] sm:$0xf] %v1175
        %1192 = vst [vmem:[#allocation2 + $0x18] sm:$0xf] %v1176
        %1193 = vst [vmem:[#allocation2 + $0x1c] sm:$0xf] %v1177
        %1194 = vst [vmem:[#allocation2 + $0x20] sm:$0xf] %v1178
        %1195 = vst [vmem:[#allocation2 + $0x24] sm:$0xf] %v1179
        %1196 = vst [vmem:[#allocation2 + $0x28] sm:$0xf] %v1180
        %1197 = vst [vmem:[#allocation2 + $0x2c] sm:$0xf] %v1181
        %1198 = vst [vmem:[#allocation2 + $0x30] sm:$0xf] %v1182
        %1199 = vst [vmem:[#allocation2 + $0x34] sm:$0xf] %v1183
        %1200 = vst [vmem:[#allocation2 + $0x38] sm:$0xf] %v1184
        %1201 = vst [vmem:[#allocation2 + $0x3c] sm:$0xf] %v1185
        %s1202 = scalar_lea.vmem %s5, 64
        %v1203 = vld [vmem:[%s1202] sm:$0xf]
        %v1204 = vld [vmem:[%s1202 + $0x4] sm:$0xf]
        %v1205 = vld [vmem:[%s1202 + $0x8] sm:$0xf]
        %v1206 = vld [vmem:[%s1202 + $0xc] sm:$0xf]
        %v1207 = vld [vmem:[%s1202 + $0x10] sm:$0xf]
        %v1208 = vld [vmem:[%s1202 + $0x14] sm:$0xf]
        %v1209 = vld [vmem:[%s1202 + $0x18] sm:$0xf]
        %v1210 = vld [vmem:[%s1202 + $0x1c] sm:$0xf]
        %v1211 = vld [vmem:[%s1202 + $0x20] sm:$0xf]
        %v1212 = vld [vmem:[%s1202 + $0x24] sm:$0xf]
        %v1213 = vld [vmem:[%s1202 + $0x28] sm:$0xf]
        %v1214 = vld [vmem:[%s1202 + $0x2c] sm:$0xf]
        %v1215 = vld [vmem:[%s1202 + $0x30] sm:$0xf]
        %v1216 = vld [vmem:[%s1202 + $0x34] sm:$0xf]
        %v1217 = vld [vmem:[%s1202 + $0x38] sm:$0xf]
        %v1218 = vld [vmem:[%s1202 + $0x3c] sm:$0xf]
        %v1235 = vunpack.c.l.b16 %v1203
        %v1236 = vunpack.c.l.b16 %v1204
        %v1237 = vunpack.c.l.b16 %v1205
        %v1238 = vunpack.c.l.b16 %v1206
        %v1239 = vunpack.c.l.b16 %v1207
        %v1240 = vunpack.c.l.b16 %v1208
        %v1241 = vunpack.c.l.b16 %v1209
        %v1242 = vunpack.c.l.b16 %v1210
        %v1243 = vunpack.c.l.b16 %v1211
        %v1244 = vunpack.c.l.b16 %v1212
        %v1245 = vunpack.c.l.b16 %v1213
        %v1246 = vunpack.c.l.b16 %v1214
        %v1247 = vunpack.c.l.b16 %v1215
        %v1248 = vunpack.c.l.b16 %v1216
        %v1249 = vunpack.c.l.b16 %v1217
        %v1250 = vunpack.c.l.b16 %v1218
        %v1251 = vpack.c.b16 %v1236, %v1235
        %v1252 = vpack.c.b16 %v1238, %v1237
        %v1253 = vpack.c.b16 %v1240, %v1239
        %v1254 = vpack.c.b16 %v1242, %v1241
        %v1255 = vpack.c.b16 %v1244, %v1243
        %v1256 = vpack.c.b16 %v1246, %v1245
        %v1257 = vpack.c.b16 %v1248, %v1247
        %v1258 = vpack.c.b16 %v1250, %v1249
        %1267 = vmatpush.bf16.msra.mxu0 %v1258
        %1268 = vmatpush.bf16.msra.mxu0 %v1257
        %1269 = vmatpush.bf16.msra.mxu0 %v1256
        %1270 = vmatpush.bf16.msra.mxu0 %v1255
        %1271 = vmatpush.bf16.msra.mxu0 %v1254
        %1272 = vmatpush.bf16.msra.mxu0 %v1253
        %1273 = vmatpush.bf16.msra.mxu0 %v1252
        %1274 = vmatpush.bf16.msra.mxu0 %v1251
        %1275 = vmatmul.bf16.gmra.mxu0 %v1057
        %v1276 = vpop.f32.mrf.mxu0
        %v1277 = vadd.f32 0.0, %v1276
        %v1278 = vpop.f32.mrf.mxu0
        %v1279 = vadd.f32 0.0, %v1278
        %1280 = vmatmul.bf16.gmra.mxu0 %v1058
        %v1281 = vpop.f32.mrf.mxu0
        %v1282 = vadd.f32 0.0, %v1281
        %v1283 = vpop.f32.mrf.mxu0
        %v1284 = vadd.f32 0.0, %v1283
        %1285 = vmatmul.bf16.gmra.mxu0 %v1059
        %v1286 = vpop.f32.mrf.mxu0
        %v1287 = vadd.f32 0.0, %v1286
        %v1288 = vpop.f32.mrf.mxu0
        %v1289 = vadd.f32 0.0, %v1288
        %1290 = vmatmul.bf16.gmra.mxu0 %v1060
        %v1291 = vpop.f32.mrf.mxu0
        %v1292 = vadd.f32 0.0, %v1291
        %v1293 = vpop.f32.mrf.mxu0
        %v1294 = vadd.f32 0.0, %v1293
        %1295 = vmatmul.bf16.gmra.mxu0 %v1061
        %v1296 = vpop.f32.mrf.mxu0
        %v1297 = vadd.f32 0.0, %v1296
        %v1298 = vpop.f32.mrf.mxu0
        %v1299 = vadd.f32 0.0, %v1298
        %1300 = vmatmul.bf16.gmra.mxu0 %v1062
        %v1301 = vpop.f32.mrf.mxu0
        %v1302 = vadd.f32 0.0, %v1301
        %v1303 = vpop.f32.mrf.mxu0
        %v1304 = vadd.f32 0.0, %v1303
        %1305 = vmatmul.bf16.gmra.mxu0 %v1063
        %v1306 = vpop.f32.mrf.mxu0
        %v1307 = vadd.f32 0.0, %v1306
        %v1308 = vpop.f32.mrf.mxu0
        %v1309 = vadd.f32 0.0, %v1308
        %1310 = vmatmul.bf16.gmra.mxu0 %v1064
        %v1311 = vpop.f32.mrf.mxu0
        %v1312 = vadd.f32 0.0, %v1311
        %v1313 = vpop.f32.mrf.mxu0
        %v1314 = vadd.f32 0.0, %v1313
        %1315 = vdwg.mxu0
        %v1316 = vpack.c.bf16 %v1277, %v1277
        %v1317 = vpack.c.bf16 %v1279, %v1279
        %v1318 = vpack.c.bf16 %v1282, %v1282
        %v1319 = vpack.c.bf16 %v1284, %v1284
        %v1320 = vpack.c.bf16 %v1287, %v1287
        %v1321 = vpack.c.bf16 %v1289, %v1289
        %v1322 = vpack.c.bf16 %v1292, %v1292
        %v1323 = vpack.c.bf16 %v1294, %v1294
        %v1324 = vpack.c.bf16 %v1297, %v1297
        %v1325 = vpack.c.bf16 %v1299, %v1299
        %v1326 = vpack.c.bf16 %v1302, %v1302
        %v1327 = vpack.c.bf16 %v1304, %v1304
        %v1328 = vpack.c.bf16 %v1307, %v1307
        %v1329 = vpack.c.bf16 %v1309, %v1309
        %v1330 = vpack.c.bf16 %v1312, %v1312
        %v1331 = vpack.c.bf16 %v1314, %v1314
        %1332 = vst [vmem:[#allocation2 + $0x40] sm:$0xf] %v1316
        %1333 = vst [vmem:[#allocation2 + $0x44] sm:$0xf] %v1317
        %1334 = vst [vmem:[#allocation2 + $0x48] sm:$0xf] %v1318
        %1335 = vst [vmem:[#allocation2 + $0x4c] sm:$0xf] %v1319
        %1336 = vst [vmem:[#allocation2 + $0x50] sm:$0xf] %v1320
        %1337 = vst [vmem:[#allocation2 + $0x54] sm:$0xf] %v1321
        %1338 = vst [vmem:[#allocation2 + $0x58] sm:$0xf] %v1322
        %1339 = vst [vmem:[#allocation2 + $0x5c] sm:$0xf] %v1323
        %1340 = vst [vmem:[#allocation2 + $0x60] sm:$0xf] %v1324
        %1341 = vst [vmem:[#allocation2 + $0x64] sm:$0xf] %v1325
        %1342 = vst [vmem:[#allocation2 + $0x68] sm:$0xf] %v1326
        %1343 = vst [vmem:[#allocation2 + $0x6c] sm:$0xf] %v1327
        %1344 = vst [vmem:[#allocation2 + $0x70] sm:$0xf] %v1328
        %1345 = vst [vmem:[#allocation2 + $0x74] sm:$0xf] %v1329
        %1346 = vst [vmem:[#allocation2 + $0x78] sm:$0xf] %v1330
        %1347 = vst [vmem:[#allocation2 + $0x7c] sm:$0xf] %v1331
        %s1348 = scalar_lea.vmem %s5, 128
        %v1349 = vld [vmem:[%s1348] sm:$0xf]
        %v1350 = vld [vmem:[%s1348 + $0x4] sm:$0xf]
        %v1351 = vld [vmem:[%s1348 + $0x8] sm:$0xf]
        %v1352 = vld [vmem:[%s1348 + $0xc] sm:$0xf]
        %v1353 = vld [vmem:[%s1348 + $0x10] sm:$0xf]
        %v1354 = vld [vmem:[%s1348 + $0x14] sm:$0xf]
        %v1355 = vld [vmem:[%s1348 + $0x18] sm:$0xf]
        %v1356 = vld [vmem:[%s1348 + $0x1c] sm:$0xf]
        %v1357 = vld [vmem:[%s1348 + $0x20] sm:$0xf]
        %v1358 = vld [vmem:[%s1348 + $0x24] sm:$0xf]
        %v1359 = vld [vmem:[%s1348 + $0x28] sm:$0xf]
        %v1360 = vld [vmem:[%s1348 + $0x2c] sm:$0xf]
        %v1361 = vld [vmem:[%s1348 + $0x30] sm:$0xf]
        %v1362 = vld [vmem:[%s1348 + $0x34] sm:$0xf]
        %v1363 = vld [vmem:[%s1348 + $0x38] sm:$0xf]
        %v1364 = vld [vmem:[%s1348 + $0x3c] sm:$0xf]
        %v1381 = vunpack.c.l.b16 %v1349
        %v1382 = vunpack.c.l.b16 %v1350
        %v1383 = vunpack.c.l.b16 %v1351
        %v1384 = vunpack.c.l.b16 %v1352
        %v1385 = vunpack.c.l.b16 %v1353
        %v1386 = vunpack.c.l.b16 %v1354
        %v1387 = vunpack.c.l.b16 %v1355
        %v1388 = vunpack.c.l.b16 %v1356
        %v1389 = vunpack.c.l.b16 %v1357
        %v1390 = vunpack.c.l.b16 %v1358
        %v1391 = vunpack.c.l.b16 %v1359
        %v1392 = vunpack.c.l.b16 %v1360
        %v1393 = vunpack.c.l.b16 %v1361
        %v1394 = vunpack.c.l.b16 %v1362
        %v1395 = vunpack.c.l.b16 %v1363
        %v1396 = vunpack.c.l.b16 %v1364
        %v1397 = vpack.c.b16 %v1382, %v1381
        %v1398 = vpack.c.b16 %v1384, %v1383
        %v1399 = vpack.c.b16 %v1386, %v1385
        %v1400 = vpack.c.b16 %v1388, %v1387
        %v1401 = vpack.c.b16 %v1390, %v1389
        %v1402 = vpack.c.b16 %v1392, %v1391
        %v1403 = vpack.c.b16 %v1394, %v1393
        %v1404 = vpack.c.b16 %v1396, %v1395
        %1413 = vmatpush.bf16.msra.mxu0 %v1404
        %1414 = vmatpush.bf16.msra.mxu0 %v1403
        %1415 = vmatpush.bf16.msra.mxu0 %v1402
        %1416 = vmatpush.bf16.msra.mxu0 %v1401
        %1417 = vmatpush.bf16.msra.mxu0 %v1400
        %1418 = vmatpush.bf16.msra.mxu0 %v1399
        %1419 = vmatpush.bf16.msra.mxu0 %v1398
        %1420 = vmatpush.bf16.msra.mxu0 %v1397
        %1421 = vmatmul.bf16.gmra.mxu0 %v1057
        %v1422 = vpop.f32.mrf.mxu0
        %v1423 = vadd.f32 0.0, %v1422
        %v1424 = vpop.f32.mrf.mxu0
        %v1425 = vadd.f32 0.0, %v1424
        %1426 = vmatmul.bf16.gmra.mxu0 %v1058
        %v1427 = vpop.f32.mrf.mxu0
        %v1428 = vadd.f32 0.0, %v1427
        %v1429 = vpop.f32.mrf.mxu0
        %v1430 = vadd.f32 0.0, %v1429
        %1431 = vmatmul.bf16.gmra.mxu0 %v1059
        %v1432 = vpop.f32.mrf.mxu0
        %v1433 = vadd.f32 0.0, %v1432
        %v1434 = vpop.f32.mrf.mxu0
        %v1435 = vadd.f32 0.0, %v1434
        %1436 = vmatmul.bf16.gmra.mxu0 %v1060
        %v1437 = vpop.f32.mrf.mxu0
        %v1438 = vadd.f32 0.0, %v1437
        %v1439 = vpop.f32.mrf.mxu0
        %v1440 = vadd.f32 0.0, %v1439
        %1441 = vmatmul.bf16.gmra.mxu0 %v1061
        %v1442 = vpop.f32.mrf.mxu0
        %v1443 = vadd.f32 0.0, %v1442
        %v1444 = vpop.f32.mrf.mxu0
        %v1445 = vadd.f32 0.0, %v1444
        %1446 = vmatmul.bf16.gmra.mxu0 %v1062
        %v1447 = vpop.f32.mrf.mxu0
        %v1448 = vadd.f32 0.0, %v1447
        %v1449 = vpop.f32.mrf.mxu0
        %v1450 = vadd.f32 0.0, %v1449
        %1451 = vmatmul.bf16.gmra.mxu0 %v1063
        %v1452 = vpop.f32.mrf.mxu0
        %v1453 = vadd.f32 0.0, %v1452
        %v1454 = vpop.f32.mrf.mxu0
        %v1455 = vadd.f32 0.0, %v1454
        %1456 = vmatmul.bf16.gmra.mxu0 %v1064
        %v1457 = vpop.f32.mrf.mxu0
        %v1458 = vadd.f32 0.0, %v1457
        %v1459 = vpop.f32.mrf.mxu0
        %v1460 = vadd.f32 0.0, %v1459
        %1461 = vdwg.mxu0
        %v1462 = vpack.c.bf16 %v1423, %v1423
        %v1463 = vpack.c.bf16 %v1425, %v1425
        %v1464 = vpack.c.bf16 %v1428, %v1428
        %v1465 = vpack.c.bf16 %v1430, %v1430
        %v1466 = vpack.c.bf16 %v1433, %v1433
        %v1467 = vpack.c.bf16 %v1435, %v1435
        %v1468 = vpack.c.bf16 %v1438, %v1438
        %v1469 = vpack.c.bf16 %v1440, %v1440
        %v1470 = vpack.c.bf16 %v1443, %v1443
        %v1471 = vpack.c.bf16 %v1445, %v1445
        %v1472 = vpack.c.bf16 %v1448, %v1448
        %v1473 = vpack.c.bf16 %v1450, %v1450
        %v1474 = vpack.c.bf16 %v1453, %v1453
        %v1475 = vpack.c.bf16 %v1455, %v1455
        %v1476 = vpack.c.bf16 %v1458, %v1458
        %v1477 = vpack.c.bf16 %v1460, %v1460
        %1478 = vst [vmem:[#allocation2 + $0x80] sm:$0xf] %v1462
        %1479 = vst [vmem:[#allocation2 + $0x84] sm:$0xf] %v1463
        %1480 = vst [vmem:[#allocation2 + $0x88] sm:$0xf] %v1464
        %1481 = vst [vmem:[#allocation2 + $0x8c] sm:$0xf] %v1465
        %1482 = vst [vmem:[#allocation2 + $0x90] sm:$0xf] %v1466
        %1483 = vst [vmem:[#allocation2 + $0x94] sm:$0xf] %v1467
        %1484 = vst [vmem:[#allocation2 + $0x98] sm:$0xf] %v1468
        %1485 = vst [vmem:[#allocation2 + $0x9c] sm:$0xf] %v1469
        %1486 = vst [vmem:[#allocation2 + $0xa0] sm:$0xf] %v1470
        %1487 = vst [vmem:[#allocation2 + $0xa4] sm:$0xf] %v1471
        %1488 = vst [vmem:[#allocation2 + $0xa8] sm:$0xf] %v1472
        %1489 = vst [vmem:[#allocation2 + $0xac] sm:$0xf] %v1473
        %1490 = vst [vmem:[#allocation2 + $0xb0] sm:$0xf] %v1474
        %1491 = vst [vmem:[#allocation2 + $0xb4] sm:$0xf] %v1475
        %1492 = vst [vmem:[#allocation2 + $0xb8] sm:$0xf] %v1476
        %1493 = vst [vmem:[#allocation2 + $0xbc] sm:$0xf] %v1477
        %s1494 = scalar_lea.vmem %s5, 192
        %v1495 = vld [vmem:[%s1494] sm:$0xf]
        %v1496 = vld [vmem:[%s1494 + $0x4] sm:$0xf]
        %v1497 = vld [vmem:[%s1494 + $0x8] sm:$0xf]
        %v1498 = vld [vmem:[%s1494 + $0xc] sm:$0xf]
        %v1499 = vld [vmem:[%s1494 + $0x10] sm:$0xf]
        %v1500 = vld [vmem:[%s1494 + $0x14] sm:$0xf]
        %v1501 = vld [vmem:[%s1494 + $0x18] sm:$0xf]
        %v1502 = vld [vmem:[%s1494 + $0x1c] sm:$0xf]
        %v1503 = vld [vmem:[%s1494 + $0x20] sm:$0xf]
        %v1504 = vld [vmem:[%s1494 + $0x24] sm:$0xf]
        %v1505 = vld [vmem:[%s1494 + $0x28] sm:$0xf]
        %v1506 = vld [vmem:[%s1494 + $0x2c] sm:$0xf]
        %v1507 = vld [vmem:[%s1494 + $0x30] sm:$0xf]
        %v1508 = vld [vmem:[%s1494 + $0x34] sm:$0xf]
        %v1509 = vld [vmem:[%s1494 + $0x38] sm:$0xf]
        %v1510 = vld [vmem:[%s1494 + $0x3c] sm:$0xf]
        %v1527 = vunpack.c.l.b16 %v1495
        %v1528 = vunpack.c.l.b16 %v1496
        %v1529 = vunpack.c.l.b16 %v1497
        %v1530 = vunpack.c.l.b16 %v1498
        %v1531 = vunpack.c.l.b16 %v1499
        %v1532 = vunpack.c.l.b16 %v1500
        %v1533 = vunpack.c.l.b16 %v1501
        %v1534 = vunpack.c.l.b16 %v1502
        %v1535 = vunpack.c.l.b16 %v1503
        %v1536 = vunpack.c.l.b16 %v1504
        %v1537 = vunpack.c.l.b16 %v1505
        %v1538 = vunpack.c.l.b16 %v1506
        %v1539 = vunpack.c.l.b16 %v1507
        %v1540 = vunpack.c.l.b16 %v1508
        %v1541 = vunpack.c.l.b16 %v1509
        %v1542 = vunpack.c.l.b16 %v1510
        %v1543 = vpack.c.b16 %v1528, %v1527
        %v1544 = vpack.c.b16 %v1530, %v1529
        %v1545 = vpack.c.b16 %v1532, %v1531
        %v1546 = vpack.c.b16 %v1534, %v1533
        %v1547 = vpack.c.b16 %v1536, %v1535
        %v1548 = vpack.c.b16 %v1538, %v1537
        %v1549 = vpack.c.b16 %v1540, %v1539
        %v1550 = vpack.c.b16 %v1542, %v1541
        %1559 = vmatpush.bf16.msra.mxu0 %v1550
        %1560 = vmatpush.bf16.msra.mxu0 %v1549
        %1561 = vmatpush.bf16.msra.mxu0 %v1548
        %1562 = vmatpush.bf16.msra.mxu0 %v1547
        %1563 = vmatpush.bf16.msra.mxu0 %v1546
        %1564 = vmatpush.bf16.msra.mxu0 %v1545
        %1565 = vmatpush.bf16.msra.mxu0 %v1544
        %1566 = vmatpush.bf16.msra.mxu0 %v1543
        %1567 = vmatmul.bf16.gmra.mxu0 %v1057
        %v1568 = vpop.f32.mrf.mxu0
        %v1569 = vadd.f32 0.0, %v1568
        %v1570 = vpop.f32.mrf.mxu0
        %v1571 = vadd.f32 0.0, %v1570
        %1572 = vmatmul.bf16.gmra.mxu0 %v1058
        %v1573 = vpop.f32.mrf.mxu0
        %v1574 = vadd.f32 0.0, %v1573
        %v1575 = vpop.f32.mrf.mxu0
        %v1576 = vadd.f32 0.0, %v1575
        %1577 = vmatmul.bf16.gmra.mxu0 %v1059
        %v1578 = vpop.f32.mrf.mxu0
        %v1579 = vadd.f32 0.0, %v1578
        %v1580 = vpop.f32.mrf.mxu0
        %v1581 = vadd.f32 0.0, %v1580
        %1582 = vmatmul.bf16.gmra.mxu0 %v1060
        %v1583 = vpop.f32.mrf.mxu0
        %v1584 = vadd.f32 0.0, %v1583
        %v1585 = vpop.f32.mrf.mxu0
        %v1586 = vadd.f32 0.0, %v1585
        %1587 = vmatmul.bf16.gmra.mxu0 %v1061
        %v1588 = vpop.f32.mrf.mxu0
        %v1589 = vadd.f32 0.0, %v1588
        %v1590 = vpop.f32.mrf.mxu0
        %v1591 = vadd.f32 0.0, %v1590
        %1592 = vmatmul.bf16.gmra.mxu0 %v1062
        %v1593 = vpop.f32.mrf.mxu0
        %v1594 = vadd.f32 0.0, %v1593
        %v1595 = vpop.f32.mrf.mxu0
        %v1596 = vadd.f32 0.0, %v1595
        %1597 = vmatmul.bf16.gmra.mxu0 %v1063
        %v1598 = vpop.f32.mrf.mxu0
        %v1599 = vadd.f32 0.0, %v1598
        %v1600 = vpop.f32.mrf.mxu0
        %v1601 = vadd.f32 0.0, %v1600
        %1602 = vmatmul.bf16.gmra.mxu0 %v1064
        %v1603 = vpop.f32.mrf.mxu0
        %v1604 = vadd.f32 0.0, %v1603
        %v1605 = vpop.f32.mrf.mxu0
        %v1606 = vadd.f32 0.0, %v1605
        %1607 = vdwg.mxu0
        %v1608 = vpack.c.bf16 %v1569, %v1569
        %v1609 = vpack.c.bf16 %v1571, %v1571
        %v1610 = vpack.c.bf16 %v1574, %v1574
        %v1611 = vpack.c.bf16 %v1576, %v1576
        %v1612 = vpack.c.bf16 %v1579, %v1579
        %v1613 = vpack.c.bf16 %v1581, %v1581
        %v1614 = vpack.c.bf16 %v1584, %v1584
        %v1615 = vpack.c.bf16 %v1586, %v1586
        %v1616 = vpack.c.bf16 %v1589, %v1589
        %v1617 = vpack.c.bf16 %v1591, %v1591
        %v1618 = vpack.c.bf16 %v1594, %v1594
        %v1619 = vpack.c.bf16 %v1596, %v1596
        %v1620 = vpack.c.bf16 %v1599, %v1599
        %v1621 = vpack.c.bf16 %v1601, %v1601
        %v1622 = vpack.c.bf16 %v1604, %v1604
        %v1623 = vpack.c.bf16 %v1606, %v1606
        %1624 = vst [vmem:[#allocation2 + $0xc0] sm:$0xf] %v1608
        %1625 = vst [vmem:[#allocation2 + $0xc4] sm:$0xf] %v1609
        %1626 = vst [vmem:[#allocation2 + $0xc8] sm:$0xf] %v1610
        %1627 = vst [vmem:[#allocation2 + $0xcc] sm:$0xf] %v1611
        %1628 = vst [vmem:[#allocation2 + $0xd0] sm:$0xf] %v1612
        %1629 = vst [vmem:[#allocation2 + $0xd4] sm:$0xf] %v1613
        %1630 = vst [vmem:[#allocation2 + $0xd8] sm:$0xf] %v1614
        %1631 = vst [vmem:[#allocation2 + $0xdc] sm:$0xf] %v1615
        %1632 = vst [vmem:[#allocation2 + $0xe0] sm:$0xf] %v1616
        %1633 = vst [vmem:[#allocation2 + $0xe4] sm:$0xf] %v1617
        %1634 = vst [vmem:[#allocation2 + $0xe8] sm:$0xf] %v1618
        %1635 = vst [vmem:[#allocation2 + $0xec] sm:$0xf] %v1619
        %1636 = vst [vmem:[#allocation2 + $0xf0] sm:$0xf] %v1620
        %1637 = vst [vmem:[#allocation2 + $0xf4] sm:$0xf] %v1621
        %1638 = vst [vmem:[#allocation2 + $0xf8] sm:$0xf] %v1622
        %1639 = vst [vmem:[#allocation2 + $0xfc] sm:$0xf] %v1623
      $region60: #{rgcn_forward_pallas.1} parent=51 // pred_fallthru
        _
      %v1640 = vld [vmem:[%s322] sm:$0xff]
      %v1641 = vld [vmem:[%s322 + $0x8] sm:$0xff]
      %v1642 = vld [vmem:[%s322 + $0x10] sm:$0xff]
      %v1643 = vld [vmem:[%s322 + $0x18] sm:$0xff]
      %v1644 = vld [vmem:[%s322 + $0x20] sm:$0xff]
      %v1645 = vld [vmem:[%s322 + $0x28] sm:$0xff]
      %v1646 = vld [vmem:[%s322 + $0x30] sm:$0xff]
      %v1647 = vld [vmem:[%s322 + $0x38] sm:$0xff]
      %v1648 = vld [vmem:[%s322 + $0x40] sm:$0xff]
      %v1649 = vld [vmem:[%s322 + $0x48] sm:$0xff]
      %v1650 = vld [vmem:[%s322 + $0x50] sm:$0xff]
      %v1651 = vld [vmem:[%s322 + $0x58] sm:$0xff]
      %v1652 = vld [vmem:[%s322 + $0x60] sm:$0xff]
      %v1653 = vld [vmem:[%s322 + $0x68] sm:$0xff]
      %v1654 = vld [vmem:[%s322 + $0x70] sm:$0xff]
      %v1655 = vld [vmem:[%s322 + $0x78] sm:$0xff]
      %v1656 = vld [vmem:[%s322 + $0x80] sm:$0xff]
      %v1657 = vld [vmem:[%s322 + $0x88] sm:$0xff]
      %v1658 = vld [vmem:[%s322 + $0x90] sm:$0xff]
      %v1659 = vld [vmem:[%s322 + $0x98] sm:$0xff]
      %v1660 = vld [vmem:[%s322 + $0xa0] sm:$0xff]
      %v1661 = vld [vmem:[%s322 + $0xa8] sm:$0xff]
      %v1662 = vld [vmem:[%s322 + $0xb0] sm:$0xff]
      %v1663 = vld [vmem:[%s322 + $0xb8] sm:$0xff]
      %v1664 = vld [vmem:[%s322 + $0xc0] sm:$0xff]
      %v1665 = vld [vmem:[%s322 + $0xc8] sm:$0xff]
      %v1666 = vld [vmem:[%s322 + $0xd0] sm:$0xff]
      %v1667 = vld [vmem:[%s322 + $0xd8] sm:$0xff]
      %v1668 = vld [vmem:[%s322 + $0xe0] sm:$0xff]
      %v1669 = vld [vmem:[%s322 + $0xe8] sm:$0xff]
      %v1670 = vld [vmem:[%s322 + $0xf0] sm:$0xff]
      %v1671 = vld [vmem:[%s322 + $0xf8] sm:$0xff]
      // Predicated region
      $region61: #{rgcn_forward_pallas.1} parent=51 // pred_check
        %p1672 = pneg %p335
      $region62: #{rgcn_forward_pallas.1} parent=51 // pred_check_branch
        %1674 = sbr.rel (%p1672) target = $region64
      $region63: #{rgcn_forward_pallas.1} parent=51 // pred_region
        %v1675 = vld [vmem:[#allocation2] sm:$0xf]
        %v1676 = vld [vmem:[#allocation2 + $0x4] sm:$0xf]
        %v1677 = vld [vmem:[#allocation2 + $0x8] sm:$0xf]
        %v1678 = vld [vmem:[#allocation2 + $0xc] sm:$0xf]
        %v1679 = vld [vmem:[#allocation2 + $0x10] sm:$0xf]
        %v1680 = vld [vmem:[#allocation2 + $0x14] sm:$0xf]
        %v1681 = vld [vmem:[#allocation2 + $0x18] sm:$0xf]
        %v1682 = vld [vmem:[#allocation2 + $0x1c] sm:$0xf]
        %v1683 = vld [vmem:[#allocation2 + $0x20] sm:$0xf]
        %v1684 = vld [vmem:[#allocation2 + $0x24] sm:$0xf]
        %v1685 = vld [vmem:[#allocation2 + $0x28] sm:$0xf]
        %v1686 = vld [vmem:[#allocation2 + $0x2c] sm:$0xf]
        %v1687 = vld [vmem:[#allocation2 + $0x30] sm:$0xf]
        %v1688 = vld [vmem:[#allocation2 + $0x34] sm:$0xf]
        %v1689 = vld [vmem:[#allocation2 + $0x38] sm:$0xf]
        %v1690 = vld [vmem:[#allocation2 + $0x3c] sm:$0xf]
        %v1691 = vld [vmem:[#allocation2 + $0x40] sm:$0xf]
        %v1692 = vld [vmem:[#allocation2 + $0x44] sm:$0xf]
        %v1693 = vld [vmem:[#allocation2 + $0x48] sm:$0xf]
        %v1694 = vld [vmem:[#allocation2 + $0x4c] sm:$0xf]
        %v1695 = vld [vmem:[#allocation2 + $0x50] sm:$0xf]
        %v1696 = vld [vmem:[#allocation2 + $0x54] sm:$0xf]
        %v1697 = vld [vmem:[#allocation2 + $0x58] sm:$0xf]
        %v1698 = vld [vmem:[#allocation2 + $0x5c] sm:$0xf]
        %v1699 = vld [vmem:[#allocation2 + $0x60] sm:$0xf]
        %v1700 = vld [vmem:[#allocation2 + $0x64] sm:$0xf]
        %v1701 = vld [vmem:[#allocation2 + $0x68] sm:$0xf]
        %v1702 = vld [vmem:[#allocation2 + $0x6c] sm:$0xf]
        %v1703 = vld [vmem:[#allocation2 + $0x70] sm:$0xf]
        %v1704 = vld [vmem:[#allocation2 + $0x74] sm:$0xf]
        %v1705 = vld [vmem:[#allocation2 + $0x78] sm:$0xf]
        %v1706 = vld [vmem:[#allocation2 + $0x7c] sm:$0xf]
        %v1707 = vld [vmem:[#allocation2 + $0x80] sm:$0xf]
        %v1708 = vld [vmem:[#allocation2 + $0x84] sm:$0xf]
        %v1709 = vld [vmem:[#allocation2 + $0x88] sm:$0xf]
        %v1710 = vld [vmem:[#allocation2 + $0x8c] sm:$0xf]
        %v1711 = vld [vmem:[#allocation2 + $0x90] sm:$0xf]
        %v1712 = vld [vmem:[#allocation2 + $0x94] sm:$0xf]
        %v1713 = vld [vmem:[#allocation2 + $0x98] sm:$0xf]
        %v1714 = vld [vmem:[#allocation2 + $0x9c] sm:$0xf]
        %v1715 = vld [vmem:[#allocation2 + $0xa0] sm:$0xf]
        %v1716 = vld [vmem:[#allocation2 + $0xa4] sm:$0xf]
        %v1717 = vld [vmem:[#allocation2 + $0xa8] sm:$0xf]
        %v1718 = vld [vmem:[#allocation2 + $0xac] sm:$0xf]
        %v1719 = vld [vmem:[#allocation2 + $0xb0] sm:$0xf]
        %v1720 = vld [vmem:[#allocation2 + $0xb4] sm:$0xf]
        %v1721 = vld [vmem:[#allocation2 + $0xb8] sm:$0xf]
        %v1722 = vld [vmem:[#allocation2 + $0xbc] sm:$0xf]
        %v1723 = vld [vmem:[#allocation2 + $0xc0] sm:$0xf]
        %v1724 = vld [vmem:[#allocation2 + $0xc4] sm:$0xf]
        %v1725 = vld [vmem:[#allocation2 + $0xc8] sm:$0xf]
        %v1726 = vld [vmem:[#allocation2 + $0xcc] sm:$0xf]
        %v1727 = vld [vmem:[#allocation2 + $0xd0] sm:$0xf]
        %v1728 = vld [vmem:[#allocation2 + $0xd4] sm:$0xf]
        %v1729 = vld [vmem:[#allocation2 + $0xd8] sm:$0xf]
        %v1730 = vld [vmem:[#allocation2 + $0xdc] sm:$0xf]
        %v1731 = vld [vmem:[#allocation2 + $0xe0] sm:$0xf]
        %v1732 = vld [vmem:[#allocation2 + $0xe4] sm:$0xf]
        %v1733 = vld [vmem:[#allocation2 + $0xe8] sm:$0xf]
        %v1734 = vld [vmem:[#allocation2 + $0xec] sm:$0xf]
        %v1735 = vld [vmem:[#allocation2 + $0xf0] sm:$0xf]
        %v1736 = vld [vmem:[#allocation2 + $0xf4] sm:$0xf]
        %v1737 = vld [vmem:[#allocation2 + $0xf8] sm:$0xf]
        %v1738 = vld [vmem:[#allocation2 + $0xfc] sm:$0xf]
        %s1739 = sshra.s32 %s334, 3
        %s1740 = sand.u32 %s334, 7
        %s1741 = smul.addr %s1739, 4
        %s1742 = scalar_lea.vmem %s1, %s1741
        %v1743 = vld [vmem:[%s1742] sm:$0xf]
        %v1744 = vld [vmem:[%s1742 + $0x4] sm:$0xf]
        %v1745 = vld [vmem:[%s1742 + $0x8] sm:$0xf]
        %v1746 = vld [vmem:[%s1742 + $0xc] sm:$0xf]
        %v1747 = vld [vmem:[%s1742 + $0x10] sm:$0xf]
        %v1748 = vld [vmem:[%s1742 + $0x14] sm:$0xf]
        %v1749 = vld [vmem:[%s1742 + $0x18] sm:$0xf]
        %v1750 = vld [vmem:[%s1742 + $0x1c] sm:$0xf]
        %v1751 = vld [vmem:[%s1742 + $0x20] sm:$0xf]
        %v1752 = vld [vmem:[%s1742 + $0x24] sm:$0xf]
        %v1753 = vld [vmem:[%s1742 + $0x28] sm:$0xf]
        %v1754 = vld [vmem:[%s1742 + $0x2c] sm:$0xf]
        %v1755 = vld [vmem:[%s1742 + $0x30] sm:$0xf]
        %v1756 = vld [vmem:[%s1742 + $0x34] sm:$0xf]
        %v1757 = vld [vmem:[%s1742 + $0x38] sm:$0xf]
        %v1758 = vld [vmem:[%s1742 + $0x3c] sm:$0xf]
        %v1759 = vld [vmem:[%s3] sm:$0xf]
        %v1760 = vld [vmem:[%s3 + $0x4] sm:$0xf]
        %v1761 = vld [vmem:[%s3 + $0x8] sm:$0xf]
        %v1762 = vld [vmem:[%s3 + $0xc] sm:$0xf]
        %v1763 = vld [vmem:[%s3 + $0x10] sm:$0xf]
        %v1764 = vld [vmem:[%s3 + $0x14] sm:$0xf]
        %v1765 = vld [vmem:[%s3 + $0x18] sm:$0xf]
        %v1766 = vld [vmem:[%s3 + $0x1c] sm:$0xf]
        %v1767 = vld [vmem:[%s3 + $0x20] sm:$0xf]
        %v1768 = vld [vmem:[%s3 + $0x24] sm:$0xf]
        %v1769 = vld [vmem:[%s3 + $0x28] sm:$0xf]
        %v1770 = vld [vmem:[%s3 + $0x2c] sm:$0xf]
        %v1771 = vld [vmem:[%s3 + $0x30] sm:$0xf]
        %v1772 = vld [vmem:[%s3 + $0x34] sm:$0xf]
        %v1773 = vld [vmem:[%s3 + $0x38] sm:$0xf]
        %v1774 = vld [vmem:[%s3 + $0x3c] sm:$0xf]
        %v1791 = vunpack.c.l.b16 %v1743
        %v1792 = vunpack.c.l.b16 %v1744
        %v1793 = vunpack.c.l.b16 %v1745
        %v1794 = vunpack.c.l.b16 %v1746
        %v1795 = vunpack.c.l.b16 %v1747
        %v1796 = vunpack.c.l.b16 %v1748
        %v1797 = vunpack.c.l.b16 %v1749
        %v1798 = vunpack.c.l.b16 %v1750
        %v1799 = vunpack.c.l.b16 %v1751
        %v1800 = vunpack.c.l.b16 %v1752
        %v1801 = vunpack.c.l.b16 %v1753
        %v1802 = vunpack.c.l.b16 %v1754
        %v1803 = vunpack.c.l.b16 %v1755
        %v1804 = vunpack.c.l.b16 %v1756
        %v1805 = vunpack.c.l.b16 %v1757
        %v1806 = vunpack.c.l.b16 %v1758
        %v1807 = vpack.c.b16 %v1792, %v1791
        %v1808 = vpack.c.b16 %v1794, %v1793
        %v1809 = vpack.c.b16 %v1796, %v1795
        %v1810 = vpack.c.b16 %v1798, %v1797
        %v1811 = vpack.c.b16 %v1800, %v1799
        %v1812 = vpack.c.b16 %v1802, %v1801
        %v1813 = vpack.c.b16 %v1804, %v1803
        %v1814 = vpack.c.b16 %v1806, %v1805
        %v1839 = vunpack.c.l.b16 %v1759
        %v1840 = vunpack.c.l.b16 %v1760
        %v1841 = vunpack.c.l.b16 %v1761
        %v1842 = vunpack.c.l.b16 %v1762
        %v1843 = vunpack.c.l.b16 %v1763
        %v1844 = vunpack.c.l.b16 %v1764
        %v1845 = vunpack.c.l.b16 %v1765
        %v1846 = vunpack.c.l.b16 %v1766
        %v1847 = vunpack.c.l.b16 %v1767
        %v1848 = vunpack.c.l.b16 %v1768
        %v1849 = vunpack.c.l.b16 %v1769
        %v1850 = vunpack.c.l.b16 %v1770
        %v1851 = vunpack.c.l.b16 %v1771
        %v1852 = vunpack.c.l.b16 %v1772
        %v1853 = vunpack.c.l.b16 %v1773
        %v1854 = vunpack.c.l.b16 %v1774
        %v1855 = vpack.c.b16 %v1840, %v1839
        %v1856 = vpack.c.b16 %v1842, %v1841
        %v1857 = vpack.c.b16 %v1844, %v1843
        %v1858 = vpack.c.b16 %v1846, %v1845
        %v1859 = vpack.c.b16 %v1848, %v1847
        %v1860 = vpack.c.b16 %v1850, %v1849
        %v1861 = vpack.c.b16 %v1852, %v1851
        %v1862 = vpack.c.b16 %v1854, %v1853
        %1871 = vmatpush.bf16.msra.mxu0 %v1862
        %1872 = vmatpush.bf16.msra.mxu0 %v1861
        %1873 = vmatpush.bf16.msra.mxu0 %v1860
        %1874 = vmatpush.bf16.msra.mxu0 %v1859
        %1875 = vmatpush.bf16.msra.mxu0 %v1858
        %1876 = vmatpush.bf16.msra.mxu0 %v1857
        %1877 = vmatpush.bf16.msra.mxu0 %v1856
        %1878 = vmatpush.bf16.msra.mxu0 %v1855
        %1879 = vmatmul.bf16.gmra.mxu0 %v1807
        %v1880 = vpop.f32.mrf.mxu0
        %v1881 = vadd.f32 0.0, %v1880
        %v1882 = vpop.f32.mrf.mxu0
        %v1883 = vadd.f32 0.0, %v1882
        %1884 = vmatmul.bf16.gmra.mxu0 %v1808
        %v1885 = vpop.f32.mrf.mxu0
        %v1886 = vadd.f32 0.0, %v1885
        %v1887 = vpop.f32.mrf.mxu0
        %v1888 = vadd.f32 0.0, %v1887
        %1889 = vmatmul.bf16.gmra.mxu0 %v1809
        %v1890 = vpop.f32.mrf.mxu0
        %v1891 = vadd.f32 0.0, %v1890
        %v1892 = vpop.f32.mrf.mxu0
        %v1893 = vadd.f32 0.0, %v1892
        %1894 = vmatmul.bf16.gmra.mxu0 %v1810
        %v1895 = vpop.f32.mrf.mxu0
        %v1896 = vadd.f32 0.0, %v1895
        %v1897 = vpop.f32.mrf.mxu0
        %v1898 = vadd.f32 0.0, %v1897
        %1899 = vmatmul.bf16.gmra.mxu0 %v1811
        %v1900 = vpop.f32.mrf.mxu0
        %v1901 = vadd.f32 0.0, %v1900
        %v1902 = vpop.f32.mrf.mxu0
        %v1903 = vadd.f32 0.0, %v1902
        %1904 = vmatmul.bf16.gmra.mxu0 %v1812
        %v1905 = vpop.f32.mrf.mxu0
        %v1906 = vadd.f32 0.0, %v1905
        %v1907 = vpop.f32.mrf.mxu0
        %v1908 = vadd.f32 0.0, %v1907
        %1909 = vmatmul.bf16.gmra.mxu0 %v1813
        %v1910 = vpop.f32.mrf.mxu0
        %v1911 = vadd.f32 0.0, %v1910
        %v1912 = vpop.f32.mrf.mxu0
        %v1913 = vadd.f32 0.0, %v1912
        %1914 = vmatmul.bf16.gmra.mxu0 %v1814
        %v1915 = vpop.f32.mrf.mxu0
        %v1916 = vadd.f32 0.0, %v1915
        %v1917 = vpop.f32.mrf.mxu0
        %v1918 = vadd.f32 0.0, %v1917
        %1919 = vdwg.mxu0
        %v1952 = vunpack.c.l.b16 %v1640
        %v1953 = vunpack.c.h.b16 %v1640
        %v1954 = vunpack.c.l.b16 %v1641
        %v1955 = vunpack.c.h.b16 %v1641
        %v1956 = vunpack.c.l.b16 %v1642
        %v1957 = vunpack.c.h.b16 %v1642
        %v1958 = vunpack.c.l.b16 %v1643
        %v1959 = vunpack.c.h.b16 %v1643
        %v1960 = vunpack.c.l.b16 %v1644
        %v1961 = vunpack.c.h.b16 %v1644
        %v1962 = vunpack.c.l.b16 %v1645
        %v1963 = vunpack.c.h.b16 %v1645
        %v1964 = vunpack.c.l.b16 %v1646
        %v1965 = vunpack.c.h.b16 %v1646
        %v1966 = vunpack.c.l.b16 %v1647
        %v1967 = vunpack.c.h.b16 %v1647
        %v1968 = vunpack.c.l.b16 %v1648
        %v1969 = vunpack.c.h.b16 %v1648
        %v1970 = vunpack.c.l.b16 %v1649
        %v1971 = vunpack.c.h.b16 %v1649
        %v1972 = vunpack.c.l.b16 %v1650
        %v1973 = vunpack.c.h.b16 %v1650
        %v1974 = vunpack.c.l.b16 %v1651
        %v1975 = vunpack.c.h.b16 %v1651
        %v1976 = vunpack.c.l.b16 %v1652
        %v1977 = vunpack.c.h.b16 %v1652
        %v1978 = vunpack.c.l.b16 %v1653
        %v1979 = vunpack.c.h.b16 %v1653
        %v1980 = vunpack.c.l.b16 %v1654
        %v1981 = vunpack.c.h.b16 %v1654
        %v1982 = vunpack.c.l.b16 %v1655
        %v1983 = vunpack.c.h.b16 %v1655
        %v1984 = vunpack.c.l.b16 %v1656
        %v1985 = vunpack.c.h.b16 %v1656
        %v1986 = vunpack.c.l.b16 %v1657
        %v1987 = vunpack.c.h.b16 %v1657
        %v1988 = vunpack.c.l.b16 %v1658
        %v1989 = vunpack.c.h.b16 %v1658
        %v1990 = vunpack.c.l.b16 %v1659
        %v1991 = vunpack.c.h.b16 %v1659
        %v1992 = vunpack.c.l.b16 %v1660
        %v1993 = vunpack.c.h.b16 %v1660
        %v1994 = vunpack.c.l.b16 %v1661
        %v1995 = vunpack.c.h.b16 %v1661
        %v1996 = vunpack.c.l.b16 %v1662
        %v1997 = vunpack.c.h.b16 %v1662
        %v1998 = vunpack.c.l.b16 %v1663
        %v1999 = vunpack.c.h.b16 %v1663
        %v2000 = vunpack.c.l.b16 %v1664
        %v2001 = vunpack.c.h.b16 %v1664
        %v2002 = vunpack.c.l.b16 %v1665
        %v2003 = vunpack.c.h.b16 %v1665
        %v2004 = vunpack.c.l.b16 %v1666
        %v2005 = vunpack.c.h.b16 %v1666
        %v2006 = vunpack.c.l.b16 %v1667
        %v2007 = vunpack.c.h.b16 %v1667
        %v2008 = vunpack.c.l.b16 %v1668
        %v2009 = vunpack.c.h.b16 %v1668
        %v2010 = vunpack.c.l.b16 %v1669
        %v2011 = vunpack.c.h.b16 %v1669
        %v2012 = vunpack.c.l.b16 %v1670
        %v2013 = vunpack.c.h.b16 %v1670
        %v2014 = vunpack.c.l.b16 %v1671
        %v2015 = vunpack.c.h.b16 %v1671
        %v2016 = vpack.c.b16 %v1956, %v1952
        %v2017 = vpack.c.b16 %v1957, %v1953
        %v2018 = vpack.c.b16 %v1958, %v1954
        %v2019 = vpack.c.b16 %v1959, %v1955
        %v2020 = vpack.c.b16 %v1964, %v1960
        %v2021 = vpack.c.b16 %v1965, %v1961
        %v2022 = vpack.c.b16 %v1966, %v1962
        %v2023 = vpack.c.b16 %v1967, %v1963
        %v2024 = vpack.c.b16 %v1972, %v1968
        %v2025 = vpack.c.b16 %v1973, %v1969
        %v2026 = vpack.c.b16 %v1974, %v1970
        %v2027 = vpack.c.b16 %v1975, %v1971
        %v2028 = vpack.c.b16 %v1980, %v1976
        %v2029 = vpack.c.b16 %v1981, %v1977
        %v2030 = vpack.c.b16 %v1982, %v1978
        %v2031 = vpack.c.b16 %v1983, %v1979
        %v2032 = vpack.c.b16 %v1988, %v1984
        %v2033 = vpack.c.b16 %v1989, %v1985
        %v2034 = vpack.c.b16 %v1990, %v1986
        %v2035 = vpack.c.b16 %v1991, %v1987
        %v2036 = vpack.c.b16 %v1996, %v1992
        %v2037 = vpack.c.b16 %v1997, %v1993
        %v2038 = vpack.c.b16 %v1998, %v1994
        %v2039 = vpack.c.b16 %v1999, %v1995
        %v2040 = vpack.c.b16 %v2004, %v2000
        %v2041 = vpack.c.b16 %v2005, %v2001
        %v2042 = vpack.c.b16 %v2006, %v2002
        %v2043 = vpack.c.b16 %v2007, %v2003
        %v2044 = vpack.c.b16 %v2012, %v2008
        %v2045 = vpack.c.b16 %v2013, %v2009
        %v2046 = vpack.c.b16 %v2014, %v2010
        %v2047 = vpack.c.b16 %v2015, %v2011
        %v2144 = vunpack.c.l.b16 %v1675
        %v2145 = vunpack.c.l.b16 %v1676
        %v2146 = vunpack.c.l.b16 %v1677
        %v2147 = vunpack.c.l.b16 %v1678
        %v2148 = vunpack.c.l.b16 %v1679
        %v2149 = vunpack.c.l.b16 %v1680
        %v2150 = vunpack.c.l.b16 %v1681
        %v2151 = vunpack.c.l.b16 %v1682
        %v2152 = vunpack.c.l.b16 %v1683
        %v2153 = vunpack.c.l.b16 %v1684
        %v2154 = vunpack.c.l.b16 %v1685
        %v2155 = vunpack.c.l.b16 %v1686
        %v2156 = vunpack.c.l.b16 %v1687
        %v2157 = vunpack.c.l.b16 %v1688
        %v2158 = vunpack.c.l.b16 %v1689
        %v2159 = vunpack.c.l.b16 %v1690
        %v2160 = vunpack.c.l.b16 %v1691
        %v2161 = vunpack.c.l.b16 %v1692
        %v2162 = vunpack.c.l.b16 %v1693
        %v2163 = vunpack.c.l.b16 %v1694
        %v2164 = vunpack.c.l.b16 %v1695
        %v2165 = vunpack.c.l.b16 %v1696
        %v2166 = vunpack.c.l.b16 %v1697
        %v2167 = vunpack.c.l.b16 %v1698
        %v2168 = vunpack.c.l.b16 %v1699
        %v2169 = vunpack.c.l.b16 %v1700
        %v2170 = vunpack.c.l.b16 %v1701
        %v2171 = vunpack.c.l.b16 %v1702
        %v2172 = vunpack.c.l.b16 %v1703
        %v2173 = vunpack.c.l.b16 %v1704
        %v2174 = vunpack.c.l.b16 %v1705
        %v2175 = vunpack.c.l.b16 %v1706
        %v2176 = vunpack.c.l.b16 %v1707
        %v2177 = vunpack.c.l.b16 %v1708
        %v2178 = vunpack.c.l.b16 %v1709
        %v2179 = vunpack.c.l.b16 %v1710
        %v2180 = vunpack.c.l.b16 %v1711
        %v2181 = vunpack.c.l.b16 %v1712
        %v2182 = vunpack.c.l.b16 %v1713
        %v2183 = vunpack.c.l.b16 %v1714
        %v2184 = vunpack.c.l.b16 %v1715
        %v2185 = vunpack.c.l.b16 %v1716
        %v2186 = vunpack.c.l.b16 %v1717
        %v2187 = vunpack.c.l.b16 %v1718
        %v2188 = vunpack.c.l.b16 %v1719
        %v2189 = vunpack.c.l.b16 %v1720
        %v2190 = vunpack.c.l.b16 %v1721
        %v2191 = vunpack.c.l.b16 %v1722
        %v2192 = vunpack.c.l.b16 %v1723
        %v2193 = vunpack.c.l.b16 %v1724
        %v2194 = vunpack.c.l.b16 %v1725
        %v2195 = vunpack.c.l.b16 %v1726
        %v2196 = vunpack.c.l.b16 %v1727
        %v2197 = vunpack.c.l.b16 %v1728
        %v2198 = vunpack.c.l.b16 %v1729
        %v2199 = vunpack.c.l.b16 %v1730
        %v2200 = vunpack.c.l.b16 %v1731
        %v2201 = vunpack.c.l.b16 %v1732
        %v2202 = vunpack.c.l.b16 %v1733
        %v2203 = vunpack.c.l.b16 %v1734
        %v2204 = vunpack.c.l.b16 %v1735
        %v2205 = vunpack.c.l.b16 %v1736
        %v2206 = vunpack.c.l.b16 %v1737
        %v2207 = vunpack.c.l.b16 %v1738
        %v2208 = vpack.c.b16 %v2145, %v2144
        %v2209 = vpack.c.b16 %v2147, %v2146
        %v2210 = vpack.c.b16 %v2149, %v2148
        %v2211 = vpack.c.b16 %v2151, %v2150
        %v2212 = vpack.c.b16 %v2153, %v2152
        %v2213 = vpack.c.b16 %v2155, %v2154
        %v2214 = vpack.c.b16 %v2157, %v2156
        %v2215 = vpack.c.b16 %v2159, %v2158
        %v2216 = vpack.c.b16 %v2161, %v2160
        %v2217 = vpack.c.b16 %v2163, %v2162
        %v2218 = vpack.c.b16 %v2165, %v2164
        %v2219 = vpack.c.b16 %v2167, %v2166
        %v2220 = vpack.c.b16 %v2169, %v2168
        %v2221 = vpack.c.b16 %v2171, %v2170
        %v2222 = vpack.c.b16 %v2173, %v2172
        %v2223 = vpack.c.b16 %v2175, %v2174
        %v2224 = vpack.c.b16 %v2177, %v2176
        %v2225 = vpack.c.b16 %v2179, %v2178
        %v2226 = vpack.c.b16 %v2181, %v2180
        %v2227 = vpack.c.b16 %v2183, %v2182
        %v2228 = vpack.c.b16 %v2185, %v2184
        %v2229 = vpack.c.b16 %v2187, %v2186
        %v2230 = vpack.c.b16 %v2189, %v2188
        %v2231 = vpack.c.b16 %v2191, %v2190
        %v2232 = vpack.c.b16 %v2193, %v2192
        %v2233 = vpack.c.b16 %v2195, %v2194
        %v2234 = vpack.c.b16 %v2197, %v2196
        %v2235 = vpack.c.b16 %v2199, %v2198
        %v2236 = vpack.c.b16 %v2201, %v2200
        %v2237 = vpack.c.b16 %v2203, %v2202
        %v2238 = vpack.c.b16 %v2205, %v2204
        %v2239 = vpack.c.b16 %v2207, %v2206
        %2272 = vmatpush.bf16.msra.mxu0 %v2215
        %2273 = vmatpush.bf16.msra.mxu0 %v2214
        %2274 = vmatpush.bf16.msra.mxu0 %v2213
        %2275 = vmatpush.bf16.msra.mxu0 %v2212
        %2276 = vmatpush.bf16.msra.mxu0 %v2211
        %2277 = vmatpush.bf16.msra.mxu0 %v2210
        %2278 = vmatpush.bf16.msra.mxu0 %v2209
        %2279 = vmatpush.bf16.msra.mxu0 %v2208
        %2280 = vmatmul.bf16.gmra.mxu0 %v2016
        %v2281 = vpop.f32.mrf.mxu0
        %v2282 = vadd.f32 %v1881, %v2281
        %v2283 = vpop.f32.mrf.mxu0
        %v2284 = vadd.f32 %v1883, %v2283
        %2285 = vmatmul.bf16.gmra.mxu0 %v2020
        %v2286 = vpop.f32.mrf.mxu0
        %v2287 = vadd.f32 %v1886, %v2286
        %v2288 = vpop.f32.mrf.mxu0
        %v2289 = vadd.f32 %v1888, %v2288
        %2290 = vmatmul.bf16.gmra.mxu0 %v2024
        %v2291 = vpop.f32.mrf.mxu0
        %v2292 = vadd.f32 %v1891, %v2291
        %v2293 = vpop.f32.mrf.mxu0
        %v2294 = vadd.f32 %v1893, %v2293
        %2295 = vmatmul.bf16.gmra.mxu0 %v2028
        %v2296 = vpop.f32.mrf.mxu0
        %v2297 = vadd.f32 %v1896, %v2296
        %v2298 = vpop.f32.mrf.mxu0
        %v2299 = vadd.f32 %v1898, %v2298
        %2300 = vmatmul.bf16.gmra.mxu0 %v2032
        %v2301 = vpop.f32.mrf.mxu0
        %v2302 = vadd.f32 %v1901, %v2301
        %v2303 = vpop.f32.mrf.mxu0
        %v2304 = vadd.f32 %v1903, %v2303
        %2305 = vmatmul.bf16.gmra.mxu0 %v2036
        %v2306 = vpop.f32.mrf.mxu0
        %v2307 = vadd.f32 %v1906, %v2306
        %v2308 = vpop.f32.mrf.mxu0
        %v2309 = vadd.f32 %v1908, %v2308
        %2310 = vmatmul.bf16.gmra.mxu0 %v2040
        %v2311 = vpop.f32.mrf.mxu0
        %v2312 = vadd.f32 %v1911, %v2311
        %v2313 = vpop.f32.mrf.mxu0
        %v2314 = vadd.f32 %v1913, %v2313
        %2315 = vmatmul.bf16.gmra.mxu0 %v2044
        %v2316 = vpop.f32.mrf.mxu0
        %v2317 = vadd.f32 %v1916, %v2316
        %v2318 = vpop.f32.mrf.mxu0
        %v2319 = vadd.f32 %v1918, %v2318
        %2320 = vdwg.mxu0
        %2321 = vmatpush.bf16.msra.mxu0 %v2223
        %2322 = vmatpush.bf16.msra.mxu0 %v2222
        %2323 = vmatpush.bf16.msra.mxu0 %v2221
        %2324 = vmatpush.bf16.msra.mxu0 %v2220
        %2325 = vmatpush.bf16.msra.mxu0 %v2219
        %2326 = vmatpush.bf16.msra.mxu0 %v2218
        %2327 = vmatpush.bf16.msra.mxu0 %v2217
        %2328 = vmatpush.bf16.msra.mxu0 %v2216
        %2329 = vmatmul.bf16.gmra.mxu0 %v2017
        %v2330 = vpop.f32.mrf.mxu0
        %v2331 = vadd.f32 %v2282, %v2330
        %v2332 = vpop.f32.mrf.mxu0
        %v2333 = vadd.f32 %v2284, %v2332
        %2334 = vmatmul.bf16.gmra.mxu0 %v2021
        %v2335 = vpop.f32.mrf.mxu0
        %v2336 = vadd.f32 %v2287, %v2335
        %v2337 = vpop.f32.mrf.mxu0
        %v2338 = vadd.f32 %v2289, %v2337
        %2339 = vmatmul.bf16.gmra.mxu0 %v2025
        %v2340 = vpop.f32.mrf.mxu0
        %v2341 = vadd.f32 %v2292, %v2340
        %v2342 = vpop.f32.mrf.mxu0
        %v2343 = vadd.f32 %v2294, %v2342
        %2344 = vmatmul.bf16.gmra.mxu0 %v2029
        %v2345 = vpop.f32.mrf.mxu0
        %v2346 = vadd.f32 %v2297, %v2345
        %v2347 = vpop.f32.mrf.mxu0
        %v2348 = vadd.f32 %v2299, %v2347
        %2349 = vmatmul.bf16.gmra.mxu0 %v2033
        %v2350 = vpop.f32.mrf.mxu0
        %v2351 = vadd.f32 %v2302, %v2350
        %v2352 = vpop.f32.mrf.mxu0
        %v2353 = vadd.f32 %v2304, %v2352
        %2354 = vmatmul.bf16.gmra.mxu0 %v2037
        %v2355 = vpop.f32.mrf.mxu0
        %v2356 = vadd.f32 %v2307, %v2355
        %v2357 = vpop.f32.mrf.mxu0
        %v2358 = vadd.f32 %v2309, %v2357
        %2359 = vmatmul.bf16.gmra.mxu0 %v2041
        %v2360 = vpop.f32.mrf.mxu0
        %v2361 = vadd.f32 %v2312, %v2360
        %v2362 = vpop.f32.mrf.mxu0
        %v2363 = vadd.f32 %v2314, %v2362
        %2364 = vmatmul.bf16.gmra.mxu0 %v2045
        %v2365 = vpop.f32.mrf.mxu0
        %v2366 = vadd.f32 %v2317, %v2365
        %v2367 = vpop.f32.mrf.mxu0
        %v2368 = vadd.f32 %v2319, %v2367
        %2369 = vdwg.mxu0
        %2370 = vmatpush.bf16.msra.mxu0 %v2231
        %2371 = vmatpush.bf16.msra.mxu0 %v2230
        %2372 = vmatpush.bf16.msra.mxu0 %v2229
        %2373 = vmatpush.bf16.msra.mxu0 %v2228
        %2374 = vmatpush.bf16.msra.mxu0 %v2227
        %2375 = vmatpush.bf16.msra.mxu0 %v2226
        %2376 = vmatpush.bf16.msra.mxu0 %v2225
        %2377 = vmatpush.bf16.msra.mxu0 %v2224
        %2378 = vmatmul.bf16.gmra.mxu0 %v2018
        %v2379 = vpop.f32.mrf.mxu0
        %v2380 = vadd.f32 %v2331, %v2379
        %v2381 = vpop.f32.mrf.mxu0
        %v2382 = vadd.f32 %v2333, %v2381
        %2383 = vmatmul.bf16.gmra.mxu0 %v2022
        %v2384 = vpop.f32.mrf.mxu0
        %v2385 = vadd.f32 %v2336, %v2384
        %v2386 = vpop.f32.mrf.mxu0
        %v2387 = vadd.f32 %v2338, %v2386
        %2388 = vmatmul.bf16.gmra.mxu0 %v2026
        %v2389 = vpop.f32.mrf.mxu0
        %v2390 = vadd.f32 %v2341, %v2389
        %v2391 = vpop.f32.mrf.mxu0
        %v2392 = vadd.f32 %v2343, %v2391
        %2393 = vmatmul.bf16.gmra.mxu0 %v2030
        %v2394 = vpop.f32.mrf.mxu0
        %v2395 = vadd.f32 %v2346, %v2394
        %v2396 = vpop.f32.mrf.mxu0
        %v2397 = vadd.f32 %v2348, %v2396
        %2398 = vmatmul.bf16.gmra.mxu0 %v2034
        %v2399 = vpop.f32.mrf.mxu0
        %v2400 = vadd.f32 %v2351, %v2399
        %v2401 = vpop.f32.mrf.mxu0
        %v2402 = vadd.f32 %v2353, %v2401
        %2403 = vmatmul.bf16.gmra.mxu0 %v2038
        %v2404 = vpop.f32.mrf.mxu0
        %v2405 = vadd.f32 %v2356, %v2404
        %v2406 = vpop.f32.mrf.mxu0
        %v2407 = vadd.f32 %v2358, %v2406
        %2408 = vmatmul.bf16.gmra.mxu0 %v2042
        %v2409 = vpop.f32.mrf.mxu0
        %v2410 = vadd.f32 %v2361, %v2409
        %v2411 = vpop.f32.mrf.mxu0
        %v2412 = vadd.f32 %v2363, %v2411
        %2413 = vmatmul.bf16.gmra.mxu0 %v2046
        %v2414 = vpop.f32.mrf.mxu0
        %v2415 = vadd.f32 %v2366, %v2414
        %v2416 = vpop.f32.mrf.mxu0
        %v2417 = vadd.f32 %v2368, %v2416
        %2418 = vdwg.mxu0
        %2419 = vmatpush.bf16.msra.mxu0 %v2239
        %2420 = vmatpush.bf16.msra.mxu0 %v2238
        %2421 = vmatpush.bf16.msra.mxu0 %v2237
        %2422 = vmatpush.bf16.msra.mxu0 %v2236
        %2423 = vmatpush.bf16.msra.mxu0 %v2235
        %2424 = vmatpush.bf16.msra.mxu0 %v2234
        %2425 = vmatpush.bf16.msra.mxu0 %v2233
        %2426 = vmatpush.bf16.msra.mxu0 %v2232
        %2427 = vmatmul.bf16.gmra.mxu0 %v2019
        %v2428 = vpop.f32.mrf.mxu0
        %v2429 = vadd.f32 %v2380, %v2428
        %v2430 = vpop.f32.mrf.mxu0
        %v2431 = vadd.f32 %v2382, %v2430
        %2432 = vmatmul.bf16.gmra.mxu0 %v2023
        %v2433 = vpop.f32.mrf.mxu0
        %v2434 = vadd.f32 %v2385, %v2433
        %v2435 = vpop.f32.mrf.mxu0
        %v2436 = vadd.f32 %v2387, %v2435
        %2437 = vmatmul.bf16.gmra.mxu0 %v2027
        %v2438 = vpop.f32.mrf.mxu0
        %v2439 = vadd.f32 %v2390, %v2438
        %v2440 = vpop.f32.mrf.mxu0
        %v2441 = vadd.f32 %v2392, %v2440
        %2442 = vmatmul.bf16.gmra.mxu0 %v2031
        %v2443 = vpop.f32.mrf.mxu0
        %v2444 = vadd.f32 %v2395, %v2443
        %v2445 = vpop.f32.mrf.mxu0
        %v2446 = vadd.f32 %v2397, %v2445
        %2447 = vmatmul.bf16.gmra.mxu0 %v2035
        %v2448 = vpop.f32.mrf.mxu0
        %v2449 = vadd.f32 %v2400, %v2448
        %v2450 = vpop.f32.mrf.mxu0
        %v2451 = vadd.f32 %v2402, %v2450
        %2452 = vmatmul.bf16.gmra.mxu0 %v2039
        %v2453 = vpop.f32.mrf.mxu0
        %v2454 = vadd.f32 %v2405, %v2453
        %v2455 = vpop.f32.mrf.mxu0
        %v2456 = vadd.f32 %v2407, %v2455
        %2457 = vmatmul.bf16.gmra.mxu0 %v2043
        %v2458 = vpop.f32.mrf.mxu0
        %v2459 = vadd.f32 %v2410, %v2458
        %v2460 = vpop.f32.mrf.mxu0
        %v2461 = vadd.f32 %v2412, %v2460
        %2462 = vmatmul.bf16.gmra.mxu0 %v2047
        %v2463 = vpop.f32.mrf.mxu0
        %v2464 = vadd.f32 %v2415, %v2463
        %v2465 = vpop.f32.mrf.mxu0
        %v2466 = vadd.f32 %v2417, %v2465
        %2467 = vdwg.mxu0
        %v2468 = vld [vmem:[%s4] sm:$0x1]
        %v2470 = vperm.slane %v2468, 0
        %v2472 = vadd.f32 %v2429, %v2470
        %v2473 = vadd.f32 %v2431, %v2470
        %v2474 = vadd.f32 %v2434, %v2470
        %v2475 = vadd.f32 %v2436, %v2470
        %v2476 = vadd.f32 %v2439, %v2470
        %v2477 = vadd.f32 %v2441, %v2470
        %v2478 = vadd.f32 %v2444, %v2470
        %v2479 = vadd.f32 %v2446, %v2470
        %v2480 = vadd.f32 %v2449, %v2470
        %v2481 = vadd.f32 %v2451, %v2470
        %v2482 = vadd.f32 %v2454, %v2470
        %v2483 = vadd.f32 %v2456, %v2470
        %v2484 = vadd.f32 %v2459, %v2470
        %v2485 = vadd.f32 %v2461, %v2470
        %v2486 = vadd.f32 %v2464, %v2470
        %v2487 = vadd.f32 %v2466, %v2470
        %v2488 = vmax.f32 %v2472, 0.0
        %v2489 = vmax.f32 %v2473, 0.0
        %v2490 = vmax.f32 %v2474, 0.0
        %v2491 = vmax.f32 %v2475, 0.0
        %v2492 = vmax.f32 %v2476, 0.0
        %v2493 = vmax.f32 %v2477, 0.0
        %v2494 = vmax.f32 %v2478, 0.0
        %v2495 = vmax.f32 %v2479, 0.0
        %v2496 = vmax.f32 %v2480, 0.0
        %v2497 = vmax.f32 %v2481, 0.0
        %v2498 = vmax.f32 %v2482, 0.0
        %v2499 = vmax.f32 %v2483, 0.0
        %v2500 = vmax.f32 %v2484, 0.0
        %v2501 = vmax.f32 %v2485, 0.0
        %v2502 = vmax.f32 %v2486, 0.0
        %v2503 = vmax.f32 %v2487, 0.0
        %v2504 = vpack.c.bf16 %v2488, %v2488
        %v2505 = vpack.c.bf16 %v2489, %v2489
        %v2506 = vpack.c.bf16 %v2490, %v2490
        %v2507 = vpack.c.bf16 %v2491, %v2491
        %v2508 = vpack.c.bf16 %v2492, %v2492
        %v2509 = vpack.c.bf16 %v2493, %v2493
        %v2510 = vpack.c.bf16 %v2494, %v2494
        %v2511 = vpack.c.bf16 %v2495, %v2495
        %v2512 = vpack.c.bf16 %v2496, %v2496
        %v2513 = vpack.c.bf16 %v2497, %v2497
        %v2514 = vpack.c.bf16 %v2498, %v2498
        %v2515 = vpack.c.bf16 %v2499, %v2499
        %v2516 = vpack.c.bf16 %v2500, %v2500
        %v2517 = vpack.c.bf16 %v2501, %v2501
        %v2518 = vpack.c.bf16 %v2502, %v2502
        %v2519 = vpack.c.bf16 %v2503, %v2503
        %s2520 = smul.addr %s1739, 4
        %s2521 = scalar_lea.vmem [#allocation3], %s2520
        %2522 = vst [vmem:[%s2521] sm:$0xf] %v2504
        %2523 = vst [vmem:[%s2521 + $0x4] sm:$0xf] %v2505
        %2524 = vst [vmem:[%s2521 + $0x8] sm:$0xf] %v2506
        %2525 = vst [vmem:[%s2521 + $0xc] sm:$0xf] %v2507
        %2526 = vst [vmem:[%s2521 + $0x10] sm:$0xf] %v2508
        %2527 = vst [vmem:[%s2521 + $0x14] sm:$0xf] %v2509
        %2528 = vst [vmem:[%s2521 + $0x18] sm:$0xf] %v2510
        %2529 = vst [vmem:[%s2521 + $0x1c] sm:$0xf] %v2511
        %2530 = vst [vmem:[%s2521 + $0x20] sm:$0xf] %v2512
        %2531 = vst [vmem:[%s2521 + $0x24] sm:$0xf] %v2513
        %2532 = vst [vmem:[%s2521 + $0x28] sm:$0xf] %v2514
        %2533 = vst [vmem:[%s2521 + $0x2c] sm:$0xf] %v2515
        %2534 = vst [vmem:[%s2521 + $0x30] sm:$0xf] %v2516
        %2535 = vst [vmem:[%s2521 + $0x34] sm:$0xf] %v2517
        %2536 = vst [vmem:[%s2521 + $0x38] sm:$0xf] %v2518
        %2537 = vst [vmem:[%s2521 + $0x3c] sm:$0xf] %v2519
        %2538 = vst [vmem:[%s332] sm:$0xff] 0.0
        %2539 = vst [vmem:[%s332 + $0x8] sm:$0xff] 0.0
        %2540 = vst [vmem:[%s332 + $0x10] sm:$0xff] 0.0
        %2541 = vst [vmem:[%s332 + $0x18] sm:$0xff] 0.0
        %2542 = vst [vmem:[%s332 + $0x20] sm:$0xff] 0.0
        %2543 = vst [vmem:[%s332 + $0x28] sm:$0xff] 0.0
        %2544 = vst [vmem:[%s332 + $0x30] sm:$0xff] 0.0
        %2545 = vst [vmem:[%s332 + $0x38] sm:$0xff] 0.0
        %2546 = vst [vmem:[%s332 + $0x40] sm:$0xff] 0.0
        %2547 = vst [vmem:[%s332 + $0x48] sm:$0xff] 0.0
        %2548 = vst [vmem:[%s332 + $0x50] sm:$0xff] 0.0
        %2549 = vst [vmem:[%s332 + $0x58] sm:$0xff] 0.0
        %2550 = vst [vmem:[%s332 + $0x60] sm:$0xff] 0.0
        %2551 = vst [vmem:[%s332 + $0x68] sm:$0xff] 0.0
        %2552 = vst [vmem:[%s332 + $0x70] sm:$0xff] 0.0
        %2553 = vst [vmem:[%s332 + $0x78] sm:$0xff] 0.0
      $region64: #{rgcn_forward_pallas.1} parent=51 // pred_fallthru
        _
      // Predicated region
      $region65: #{rgcn_forward_pallas.1} parent=51 // pred_check
        %p2554 = pneg %p988
      $region66: #{rgcn_forward_pallas.1} parent=51 // pred_check_branch
        %2556 = sbr.rel (%p2554) target = $region68
      $region67: #{rgcn_forward_pallas.1} parent=51 // pred_region
        %v2557 = vld [vmem:[#allocation2] sm:$0xf]
        %v2558 = vld [vmem:[#allocation2 + $0x4] sm:$0xf]
        %v2559 = vld [vmem:[#allocation2 + $0x8] sm:$0xf]
        %v2560 = vld [vmem:[#allocation2 + $0xc] sm:$0xf]
        %v2561 = vld [vmem:[#allocation2 + $0x10] sm:$0xf]
        %v2562 = vld [vmem:[#allocation2 + $0x14] sm:$0xf]
        %v2563 = vld [vmem:[#allocation2 + $0x18] sm:$0xf]
        %v2564 = vld [vmem:[#allocation2 + $0x1c] sm:$0xf]
        %v2565 = vld [vmem:[#allocation2 + $0x20] sm:$0xf]
        %v2566 = vld [vmem:[#allocation2 + $0x24] sm:$0xf]
        %v2567 = vld [vmem:[#allocation2 + $0x28] sm:$0xf]
        %v2568 = vld [vmem:[#allocation2 + $0x2c] sm:$0xf]
        %v2569 = vld [vmem:[#allocation2 + $0x30] sm:$0xf]
        %v2570 = vld [vmem:[#allocation2 + $0x34] sm:$0xf]
        %v2571 = vld [vmem:[#allocation2 + $0x38] sm:$0xf]
        %v2572 = vld [vmem:[#allocation2 + $0x3c] sm:$0xf]
        %v2573 = vld [vmem:[#allocation2 + $0x40] sm:$0xf]
        %v2574 = vld [vmem:[#allocation2 + $0x44] sm:$0xf]
        %v2575 = vld [vmem:[#allocation2 + $0x48] sm:$0xf]
        %v2576 = vld [vmem:[#allocation2 + $0x4c] sm:$0xf]
        %v2577 = vld [vmem:[#allocation2 + $0x50] sm:$0xf]
        %v2578 = vld [vmem:[#allocation2 + $0x54] sm:$0xf]
        %v2579 = vld [vmem:[#allocation2 + $0x58] sm:$0xf]
        %v2580 = vld [vmem:[#allocation2 + $0x5c] sm:$0xf]
        %v2581 = vld [vmem:[#allocation2 + $0x60] sm:$0xf]
        %v2582 = vld [vmem:[#allocation2 + $0x64] sm:$0xf]
        %v2583 = vld [vmem:[#allocation2 + $0x68] sm:$0xf]
        %v2584 = vld [vmem:[#allocation2 + $0x6c] sm:$0xf]
        %v2585 = vld [vmem:[#allocation2 + $0x70] sm:$0xf]
        %v2586 = vld [vmem:[#allocation2 + $0x74] sm:$0xf]
        %v2587 = vld [vmem:[#allocation2 + $0x78] sm:$0xf]
        %v2588 = vld [vmem:[#allocation2 + $0x7c] sm:$0xf]
        %v2589 = vld [vmem:[#allocation2 + $0x80] sm:$0xf]
        %v2590 = vld [vmem:[#allocation2 + $0x84] sm:$0xf]
        %v2591 = vld [vmem:[#allocation2 + $0x88] sm:$0xf]
        %v2592 = vld [vmem:[#allocation2 + $0x8c] sm:$0xf]
        %v2593 = vld [vmem:[#allocation2 + $0x90] sm:$0xf]
        %v2594 = vld [vmem:[#allocation2 + $0x94] sm:$0xf]
        %v2595 = vld [vmem:[#allocation2 + $0x98] sm:$0xf]
        %v2596 = vld [vmem:[#allocation2 + $0x9c] sm:$0xf]
        %v2597 = vld [vmem:[#allocation2 + $0xa0] sm:$0xf]
        %v2598 = vld [vmem:[#allocation2 + $0xa4] sm:$0xf]
        %v2599 = vld [vmem:[#allocation2 + $0xa8] sm:$0xf]
        %v2600 = vld [vmem:[#allocation2 + $0xac] sm:$0xf]
        %v2601 = vld [vmem:[#allocation2 + $0xb0] sm:$0xf]
        %v2602 = vld [vmem:[#allocation2 + $0xb4] sm:$0xf]
        %v2603 = vld [vmem:[#allocation2 + $0xb8] sm:$0xf]
        %v2604 = vld [vmem:[#allocation2 + $0xbc] sm:$0xf]
        %v2605 = vld [vmem:[#allocation2 + $0xc0] sm:$0xf]
        %v2606 = vld [vmem:[#allocation2 + $0xc4] sm:$0xf]
        %v2607 = vld [vmem:[#allocation2 + $0xc8] sm:$0xf]
        %v2608 = vld [vmem:[#allocation2 + $0xcc] sm:$0xf]
        %v2609 = vld [vmem:[#allocation2 + $0xd0] sm:$0xf]
        %v2610 = vld [vmem:[#allocation2 + $0xd4] sm:$0xf]
        %v2611 = vld [vmem:[#allocation2 + $0xd8] sm:$0xf]
        %v2612 = vld [vmem:[#allocation2 + $0xdc] sm:$0xf]
        %v2613 = vld [vmem:[#allocation2 + $0xe0] sm:$0xf]
        %v2614 = vld [vmem:[#allocation2 + $0xe4] sm:$0xf]
        %v2615 = vld [vmem:[#allocation2 + $0xe8] sm:$0xf]
        %v2616 = vld [vmem:[#allocation2 + $0xec] sm:$0xf]
        %v2617 = vld [vmem:[#allocation2 + $0xf0] sm:$0xf]
        %v2618 = vld [vmem:[#allocation2 + $0xf4] sm:$0xf]
        %v2619 = vld [vmem:[#allocation2 + $0xf8] sm:$0xf]
        %v2620 = vld [vmem:[#allocation2 + $0xfc] sm:$0xf]
        %s2621 = sshra.s32 %s334, 3
        %s2622 = sand.u32 %s334, 7
        %s2623 = smul.addr %s2621, 4
        %s2624 = scalar_lea.vmem [#allocation3], %s2623
        %v2625 = vld [vmem:[%s2624] sm:$0xf]
        %v2626 = vld [vmem:[%s2624 + $0x4] sm:$0xf]
        %v2627 = vld [vmem:[%s2624 + $0x8] sm:$0xf]
        %v2628 = vld [vmem:[%s2624 + $0xc] sm:$0xf]
        %v2629 = vld [vmem:[%s2624 + $0x10] sm:$0xf]
        %v2630 = vld [vmem:[%s2624 + $0x14] sm:$0xf]
        %v2631 = vld [vmem:[%s2624 + $0x18] sm:$0xf]
        %v2632 = vld [vmem:[%s2624 + $0x1c] sm:$0xf]
        %v2633 = vld [vmem:[%s2624 + $0x20] sm:$0xf]
        %v2634 = vld [vmem:[%s2624 + $0x24] sm:$0xf]
        %v2635 = vld [vmem:[%s2624 + $0x28] sm:$0xf]
        %v2636 = vld [vmem:[%s2624 + $0x2c] sm:$0xf]
        %v2637 = vld [vmem:[%s2624 + $0x30] sm:$0xf]
        %v2638 = vld [vmem:[%s2624 + $0x34] sm:$0xf]
        %v2639 = vld [vmem:[%s2624 + $0x38] sm:$0xf]
        %v2640 = vld [vmem:[%s2624 + $0x3c] sm:$0xf]
        %v2641 = vld [vmem:[%s6] sm:$0xf]
        %v2642 = vld [vmem:[%s6 + $0x4] sm:$0xf]
        %v2643 = vld [vmem:[%s6 + $0x8] sm:$0xf]
        %v2644 = vld [vmem:[%s6 + $0xc] sm:$0xf]
        %v2645 = vld [vmem:[%s6 + $0x10] sm:$0xf]
        %v2646 = vld [vmem:[%s6 + $0x14] sm:$0xf]
        %v2647 = vld [vmem:[%s6 + $0x18] sm:$0xf]
        %v2648 = vld [vmem:[%s6 + $0x1c] sm:$0xf]
        %v2649 = vld [vmem:[%s6 + $0x20] sm:$0xf]
        %v2650 = vld [vmem:[%s6 + $0x24] sm:$0xf]
        %v2651 = vld [vmem:[%s6 + $0x28] sm:$0xf]
        %v2652 = vld [vmem:[%s6 + $0x2c] sm:$0xf]
        %v2653 = vld [vmem:[%s6 + $0x30] sm:$0xf]
        %v2654 = vld [vmem:[%s6 + $0x34] sm:$0xf]
        %v2655 = vld [vmem:[%s6 + $0x38] sm:$0xf]
        %v2656 = vld [vmem:[%s6 + $0x3c] sm:$0xf]
        %v2673 = vunpack.c.l.b16 %v2625
        %v2674 = vunpack.c.l.b16 %v2626
        %v2675 = vunpack.c.l.b16 %v2627
        %v2676 = vunpack.c.l.b16 %v2628
        %v2677 = vunpack.c.l.b16 %v2629
        %v2678 = vunpack.c.l.b16 %v2630
        %v2679 = vunpack.c.l.b16 %v2631
        %v2680 = vunpack.c.l.b16 %v2632
        %v2681 = vunpack.c.l.b16 %v2633
        %v2682 = vunpack.c.l.b16 %v2634
        %v2683 = vunpack.c.l.b16 %v2635
        %v2684 = vunpack.c.l.b16 %v2636
        %v2685 = vunpack.c.l.b16 %v2637
        %v2686 = vunpack.c.l.b16 %v2638
        %v2687 = vunpack.c.l.b16 %v2639
        %v2688 = vunpack.c.l.b16 %v2640
        %v2689 = vpack.c.b16 %v2674, %v2673
        %v2690 = vpack.c.b16 %v2676, %v2675
        %v2691 = vpack.c.b16 %v2678, %v2677
        %v2692 = vpack.c.b16 %v2680, %v2679
        %v2693 = vpack.c.b16 %v2682, %v2681
        %v2694 = vpack.c.b16 %v2684, %v2683
        %v2695 = vpack.c.b16 %v2686, %v2685
        %v2696 = vpack.c.b16 %v2688, %v2687
        %v2721 = vunpack.c.l.b16 %v2641
        %v2722 = vunpack.c.l.b16 %v2642
        %v2723 = vunpack.c.l.b16 %v2643
        %v2724 = vunpack.c.l.b16 %v2644
        %v2725 = vunpack.c.l.b16 %v2645
        %v2726 = vunpack.c.l.b16 %v2646
        %v2727 = vunpack.c.l.b16 %v2647
        %v2728 = vunpack.c.l.b16 %v2648
        %v2729 = vunpack.c.l.b16 %v2649
        %v2730 = vunpack.c.l.b16 %v2650
        %v2731 = vunpack.c.l.b16 %v2651
        %v2732 = vunpack.c.l.b16 %v2652
        %v2733 = vunpack.c.l.b16 %v2653
        %v2734 = vunpack.c.l.b16 %v2654
        %v2735 = vunpack.c.l.b16 %v2655
        %v2736 = vunpack.c.l.b16 %v2656
        %v2737 = vpack.c.b16 %v2722, %v2721
        %v2738 = vpack.c.b16 %v2724, %v2723
        %v2739 = vpack.c.b16 %v2726, %v2725
        %v2740 = vpack.c.b16 %v2728, %v2727
        %v2741 = vpack.c.b16 %v2730, %v2729
        %v2742 = vpack.c.b16 %v2732, %v2731
        %v2743 = vpack.c.b16 %v2734, %v2733
        %v2744 = vpack.c.b16 %v2736, %v2735
        %2753 = vmatpush.bf16.msra.mxu0 %v2744
        %2754 = vmatpush.bf16.msra.mxu0 %v2743
        %2755 = vmatpush.bf16.msra.mxu0 %v2742
        %2756 = vmatpush.bf16.msra.mxu0 %v2741
        %2757 = vmatpush.bf16.msra.mxu0 %v2740
        %2758 = vmatpush.bf16.msra.mxu0 %v2739
        %2759 = vmatpush.bf16.msra.mxu0 %v2738
        %2760 = vmatpush.bf16.msra.mxu0 %v2737
        %2761 = vmatmul.bf16.gmra.mxu0 %v2689
        %v2762 = vpop.f32.mrf.mxu0
        %v2763 = vadd.f32 0.0, %v2762
        %v2764 = vpop.f32.mrf.mxu0
        %v2765 = vadd.f32 0.0, %v2764
        %2766 = vmatmul.bf16.gmra.mxu0 %v2690
        %v2767 = vpop.f32.mrf.mxu0
        %v2768 = vadd.f32 0.0, %v2767
        %v2769 = vpop.f32.mrf.mxu0
        %v2770 = vadd.f32 0.0, %v2769
        %2771 = vmatmul.bf16.gmra.mxu0 %v2691
        %v2772 = vpop.f32.mrf.mxu0
        %v2773 = vadd.f32 0.0, %v2772
        %v2774 = vpop.f32.mrf.mxu0
        %v2775 = vadd.f32 0.0, %v2774
        %2776 = vmatmul.bf16.gmra.mxu0 %v2692
        %v2777 = vpop.f32.mrf.mxu0
        %v2778 = vadd.f32 0.0, %v2777
        %v2779 = vpop.f32.mrf.mxu0
        %v2780 = vadd.f32 0.0, %v2779
        %2781 = vmatmul.bf16.gmra.mxu0 %v2693
        %v2782 = vpop.f32.mrf.mxu0
        %v2783 = vadd.f32 0.0, %v2782
        %v2784 = vpop.f32.mrf.mxu0
        %v2785 = vadd.f32 0.0, %v2784
        %2786 = vmatmul.bf16.gmra.mxu0 %v2694
        %v2787 = vpop.f32.mrf.mxu0
        %v2788 = vadd.f32 0.0, %v2787
        %v2789 = vpop.f32.mrf.mxu0
        %v2790 = vadd.f32 0.0, %v2789
        %2791 = vmatmul.bf16.gmra.mxu0 %v2695
        %v2792 = vpop.f32.mrf.mxu0
        %v2793 = vadd.f32 0.0, %v2792
        %v2794 = vpop.f32.mrf.mxu0
        %v2795 = vadd.f32 0.0, %v2794
        %2796 = vmatmul.bf16.gmra.mxu0 %v2696
        %v2797 = vpop.f32.mrf.mxu0
        %v2798 = vadd.f32 0.0, %v2797
        %v2799 = vpop.f32.mrf.mxu0
        %v2800 = vadd.f32 0.0, %v2799
        %2801 = vdwg.mxu0
        %v2834 = vunpack.c.l.b16 %v1640
        %v2835 = vunpack.c.h.b16 %v1640
        %v2836 = vunpack.c.l.b16 %v1641
        %v2837 = vunpack.c.h.b16 %v1641
        %v2838 = vunpack.c.l.b16 %v1642
        %v2839 = vunpack.c.h.b16 %v1642
        %v2840 = vunpack.c.l.b16 %v1643
        %v2841 = vunpack.c.h.b16 %v1643
        %v2842 = vunpack.c.l.b16 %v1644
        %v2843 = vunpack.c.h.b16 %v1644
        %v2844 = vunpack.c.l.b16 %v1645
        %v2845 = vunpack.c.h.b16 %v1645
        %v2846 = vunpack.c.l.b16 %v1646
        %v2847 = vunpack.c.h.b16 %v1646
        %v2848 = vunpack.c.l.b16 %v1647
        %v2849 = vunpack.c.h.b16 %v1647
        %v2850 = vunpack.c.l.b16 %v1648
        %v2851 = vunpack.c.h.b16 %v1648
        %v2852 = vunpack.c.l.b16 %v1649
        %v2853 = vunpack.c.h.b16 %v1649
        %v2854 = vunpack.c.l.b16 %v1650
        %v2855 = vunpack.c.h.b16 %v1650
        %v2856 = vunpack.c.l.b16 %v1651
        %v2857 = vunpack.c.h.b16 %v1651
        %v2858 = vunpack.c.l.b16 %v1652
        %v2859 = vunpack.c.h.b16 %v1652
        %v2860 = vunpack.c.l.b16 %v1653
        %v2861 = vunpack.c.h.b16 %v1653
        %v2862 = vunpack.c.l.b16 %v1654
        %v2863 = vunpack.c.h.b16 %v1654
        %v2864 = vunpack.c.l.b16 %v1655
        %v2865 = vunpack.c.h.b16 %v1655
        %v2866 = vunpack.c.l.b16 %v1656
        %v2867 = vunpack.c.h.b16 %v1656
        %v2868 = vunpack.c.l.b16 %v1657
        %v2869 = vunpack.c.h.b16 %v1657
        %v2870 = vunpack.c.l.b16 %v1658
        %v2871 = vunpack.c.h.b16 %v1658
        %v2872 = vunpack.c.l.b16 %v1659
        %v2873 = vunpack.c.h.b16 %v1659
        %v2874 = vunpack.c.l.b16 %v1660
        %v2875 = vunpack.c.h.b16 %v1660
        %v2876 = vunpack.c.l.b16 %v1661
        %v2877 = vunpack.c.h.b16 %v1661
        %v2878 = vunpack.c.l.b16 %v1662
        %v2879 = vunpack.c.h.b16 %v1662
        %v2880 = vunpack.c.l.b16 %v1663
        %v2881 = vunpack.c.h.b16 %v1663
        %v2882 = vunpack.c.l.b16 %v1664
        %v2883 = vunpack.c.h.b16 %v1664
        %v2884 = vunpack.c.l.b16 %v1665
        %v2885 = vunpack.c.h.b16 %v1665
        %v2886 = vunpack.c.l.b16 %v1666
        %v2887 = vunpack.c.h.b16 %v1666
        %v2888 = vunpack.c.l.b16 %v1667
        %v2889 = vunpack.c.h.b16 %v1667
        %v2890 = vunpack.c.l.b16 %v1668
        %v2891 = vunpack.c.h.b16 %v1668
        %v2892 = vunpack.c.l.b16 %v1669
        %v2893 = vunpack.c.h.b16 %v1669
        %v2894 = vunpack.c.l.b16 %v1670
        %v2895 = vunpack.c.h.b16 %v1670
        %v2896 = vunpack.c.l.b16 %v1671
        %v2897 = vunpack.c.h.b16 %v1671
        %v2898 = vpack.c.b16 %v2838, %v2834
        %v2899 = vpack.c.b16 %v2839, %v2835
        %v2900 = vpack.c.b16 %v2840, %v2836
        %v2901 = vpack.c.b16 %v2841, %v2837
        %v2902 = vpack.c.b16 %v2846, %v2842
        %v2903 = vpack.c.b16 %v2847, %v2843
        %v2904 = vpack.c.b16 %v2848, %v2844
        %v2905 = vpack.c.b16 %v2849, %v2845
        %v2906 = vpack.c.b16 %v2854, %v2850
        %v2907 = vpack.c.b16 %v2855, %v2851
        %v2908 = vpack.c.b16 %v2856, %v2852
        %v2909 = vpack.c.b16 %v2857, %v2853
        %v2910 = vpack.c.b16 %v2862, %v2858
        %v2911 = vpack.c.b16 %v2863, %v2859
        %v2912 = vpack.c.b16 %v2864, %v2860
        %v2913 = vpack.c.b16 %v2865, %v2861
        %v2914 = vpack.c.b16 %v2870, %v2866
        %v2915 = vpack.c.b16 %v2871, %v2867
        %v2916 = vpack.c.b16 %v2872, %v2868
        %v2917 = vpack.c.b16 %v2873, %v2869
        %v2918 = vpack.c.b16 %v2878, %v2874
        %v2919 = vpack.c.b16 %v2879, %v2875
        %v2920 = vpack.c.b16 %v2880, %v2876
        %v2921 = vpack.c.b16 %v2881, %v2877
        %v2922 = vpack.c.b16 %v2886, %v2882
        %v2923 = vpack.c.b16 %v2887, %v2883
        %v2924 = vpack.c.b16 %v2888, %v2884
        %v2925 = vpack.c.b16 %v2889, %v2885
        %v2926 = vpack.c.b16 %v2894, %v2890
        %v2927 = vpack.c.b16 %v2895, %v2891
        %v2928 = vpack.c.b16 %v2896, %v2892
        %v2929 = vpack.c.b16 %v2897, %v2893
        %v3026 = vunpack.c.l.b16 %v2557
        %v3027 = vunpack.c.l.b16 %v2558
        %v3028 = vunpack.c.l.b16 %v2559
        %v3029 = vunpack.c.l.b16 %v2560
        %v3030 = vunpack.c.l.b16 %v2561
        %v3031 = vunpack.c.l.b16 %v2562
        %v3032 = vunpack.c.l.b16 %v2563
        %v3033 = vunpack.c.l.b16 %v2564
        %v3034 = vunpack.c.l.b16 %v2565
        %v3035 = vunpack.c.l.b16 %v2566
        %v3036 = vunpack.c.l.b16 %v2567
        %v3037 = vunpack.c.l.b16 %v2568
        %v3038 = vunpack.c.l.b16 %v2569
        %v3039 = vunpack.c.l.b16 %v2570
        %v3040 = vunpack.c.l.b16 %v2571
        %v3041 = vunpack.c.l.b16 %v2572
        %v3042 = vunpack.c.l.b16 %v2573
        %v3043 = vunpack.c.l.b16 %v2574
        %v3044 = vunpack.c.l.b16 %v2575
        %v3045 = vunpack.c.l.b16 %v2576
        %v3046 = vunpack.c.l.b16 %v2577
        %v3047 = vunpack.c.l.b16 %v2578
        %v3048 = vunpack.c.l.b16 %v2579
        %v3049 = vunpack.c.l.b16 %v2580
        %v3050 = vunpack.c.l.b16 %v2581
        %v3051 = vunpack.c.l.b16 %v2582
        %v3052 = vunpack.c.l.b16 %v2583
        %v3053 = vunpack.c.l.b16 %v2584
        %v3054 = vunpack.c.l.b16 %v2585
        %v3055 = vunpack.c.l.b16 %v2586
        %v3056 = vunpack.c.l.b16 %v2587
        %v3057 = vunpack.c.l.b16 %v2588
        %v3058 = vunpack.c.l.b16 %v2589
        %v3059 = vunpack.c.l.b16 %v2590
        %v3060 = vunpack.c.l.b16 %v2591
        %v3061 = vunpack.c.l.b16 %v2592
        %v3062 = vunpack.c.l.b16 %v2593
        %v3063 = vunpack.c.l.b16 %v2594
        %v3064 = vunpack.c.l.b16 %v2595
        %v3065 = vunpack.c.l.b16 %v2596
        %v3066 = vunpack.c.l.b16 %v2597
        %v3067 = vunpack.c.l.b16 %v2598
        %v3068 = vunpack.c.l.b16 %v2599
        %v3069 = vunpack.c.l.b16 %v2600
        %v3070 = vunpack.c.l.b16 %v2601
        %v3071 = vunpack.c.l.b16 %v2602
        %v3072 = vunpack.c.l.b16 %v2603
        %v3073 = vunpack.c.l.b16 %v2604
        %v3074 = vunpack.c.l.b16 %v2605
        %v3075 = vunpack.c.l.b16 %v2606
        %v3076 = vunpack.c.l.b16 %v2607
        %v3077 = vunpack.c.l.b16 %v2608
        %v3078 = vunpack.c.l.b16 %v2609
        %v3079 = vunpack.c.l.b16 %v2610
        %v3080 = vunpack.c.l.b16 %v2611
        %v3081 = vunpack.c.l.b16 %v2612
        %v3082 = vunpack.c.l.b16 %v2613
        %v3083 = vunpack.c.l.b16 %v2614
        %v3084 = vunpack.c.l.b16 %v2615
        %v3085 = vunpack.c.l.b16 %v2616
        %v3086 = vunpack.c.l.b16 %v2617
        %v3087 = vunpack.c.l.b16 %v2618
        %v3088 = vunpack.c.l.b16 %v2619
        %v3089 = vunpack.c.l.b16 %v2620
        %v3090 = vpack.c.b16 %v3027, %v3026
        %v3091 = vpack.c.b16 %v3029, %v3028
        %v3092 = vpack.c.b16 %v3031, %v3030
        %v3093 = vpack.c.b16 %v3033, %v3032
        %v3094 = vpack.c.b16 %v3035, %v3034
        %v3095 = vpack.c.b16 %v3037, %v3036
        %v3096 = vpack.c.b16 %v3039, %v3038
        %v3097 = vpack.c.b16 %v3041, %v3040
        %v3098 = vpack.c.b16 %v3043, %v3042
        %v3099 = vpack.c.b16 %v3045, %v3044
        %v3100 = vpack.c.b16 %v3047, %v3046
        %v3101 = vpack.c.b16 %v3049, %v3048
        %v3102 = vpack.c.b16 %v3051, %v3050
        %v3103 = vpack.c.b16 %v3053, %v3052
        %v3104 = vpack.c.b16 %v3055, %v3054
        %v3105 = vpack.c.b16 %v3057, %v3056
        %v3106 = vpack.c.b16 %v3059, %v3058
        %v3107 = vpack.c.b16 %v3061, %v3060
        %v3108 = vpack.c.b16 %v3063, %v3062
        %v3109 = vpack.c.b16 %v3065, %v3064
        %v3110 = vpack.c.b16 %v3067, %v3066
        %v3111 = vpack.c.b16 %v3069, %v3068
        %v3112 = vpack.c.b16 %v3071, %v3070
        %v3113 = vpack.c.b16 %v3073, %v3072
        %v3114 = vpack.c.b16 %v3075, %v3074
        %v3115 = vpack.c.b16 %v3077, %v3076
        %v3116 = vpack.c.b16 %v3079, %v3078
        %v3117 = vpack.c.b16 %v3081, %v3080
        %v3118 = vpack.c.b16 %v3083, %v3082
        %v3119 = vpack.c.b16 %v3085, %v3084
        %v3120 = vpack.c.b16 %v3087, %v3086
        %v3121 = vpack.c.b16 %v3089, %v3088
        %3154 = vmatpush.bf16.msra.mxu0 %v3097
        %3155 = vmatpush.bf16.msra.mxu0 %v3096
        %3156 = vmatpush.bf16.msra.mxu0 %v3095
        %3157 = vmatpush.bf16.msra.mxu0 %v3094
        %3158 = vmatpush.bf16.msra.mxu0 %v3093
        %3159 = vmatpush.bf16.msra.mxu0 %v3092
        %3160 = vmatpush.bf16.msra.mxu0 %v3091
        %3161 = vmatpush.bf16.msra.mxu0 %v3090
        %3162 = vmatmul.bf16.gmra.mxu0 %v2898
        %v3163 = vpop.f32.mrf.mxu0
        %v3164 = vadd.f32 %v2763, %v3163
        %v3165 = vpop.f32.mrf.mxu0
        %v3166 = vadd.f32 %v2765, %v3165
        %3167 = vmatmul.bf16.gmra.mxu0 %v2902
        %v3168 = vpop.f32.mrf.mxu0
        %v3169 = vadd.f32 %v2768, %v3168
        %v3170 = vpop.f32.mrf.mxu0
        %v3171 = vadd.f32 %v2770, %v3170
        %3172 = vmatmul.bf16.gmra.mxu0 %v2906
        %v3173 = vpop.f32.mrf.mxu0
        %v3174 = vadd.f32 %v2773, %v3173
        %v3175 = vpop.f32.mrf.mxu0
        %v3176 = vadd.f32 %v2775, %v3175
        %3177 = vmatmul.bf16.gmra.mxu0 %v2910
        %v3178 = vpop.f32.mrf.mxu0
        %v3179 = vadd.f32 %v2778, %v3178
        %v3180 = vpop.f32.mrf.mxu0
        %v3181 = vadd.f32 %v2780, %v3180
        %3182 = vmatmul.bf16.gmra.mxu0 %v2914
        %v3183 = vpop.f32.mrf.mxu0
        %v3184 = vadd.f32 %v2783, %v3183
        %v3185 = vpop.f32.mrf.mxu0
        %v3186 = vadd.f32 %v2785, %v3185
        %3187 = vmatmul.bf16.gmra.mxu0 %v2918
        %v3188 = vpop.f32.mrf.mxu0
        %v3189 = vadd.f32 %v2788, %v3188
        %v3190 = vpop.f32.mrf.mxu0
        %v3191 = vadd.f32 %v2790, %v3190
        %3192 = vmatmul.bf16.gmra.mxu0 %v2922
        %v3193 = vpop.f32.mrf.mxu0
        %v3194 = vadd.f32 %v2793, %v3193
        %v3195 = vpop.f32.mrf.mxu0
        %v3196 = vadd.f32 %v2795, %v3195
        %3197 = vmatmul.bf16.gmra.mxu0 %v2926
        %v3198 = vpop.f32.mrf.mxu0
        %v3199 = vadd.f32 %v2798, %v3198
        %v3200 = vpop.f32.mrf.mxu0
        %v3201 = vadd.f32 %v2800, %v3200
        %3202 = vdwg.mxu0
        %3203 = vmatpush.bf16.msra.mxu0 %v3105
        %3204 = vmatpush.bf16.msra.mxu0 %v3104
        %3205 = vmatpush.bf16.msra.mxu0 %v3103
        %3206 = vmatpush.bf16.msra.mxu0 %v3102
        %3207 = vmatpush.bf16.msra.mxu0 %v3101
        %3208 = vmatpush.bf16.msra.mxu0 %v3100
        %3209 = vmatpush.bf16.msra.mxu0 %v3099
        %3210 = vmatpush.bf16.msra.mxu0 %v3098
        %3211 = vmatmul.bf16.gmra.mxu0 %v2899
        %v3212 = vpop.f32.mrf.mxu0
        %v3213 = vadd.f32 %v3164, %v3212
        %v3214 = vpop.f32.mrf.mxu0
        %v3215 = vadd.f32 %v3166, %v3214
        %3216 = vmatmul.bf16.gmra.mxu0 %v2903
        %v3217 = vpop.f32.mrf.mxu0
        %v3218 = vadd.f32 %v3169, %v3217
        %v3219 = vpop.f32.mrf.mxu0
        %v3220 = vadd.f32 %v3171, %v3219
        %3221 = vmatmul.bf16.gmra.mxu0 %v2907
        %v3222 = vpop.f32.mrf.mxu0
        %v3223 = vadd.f32 %v3174, %v3222
        %v3224 = vpop.f32.mrf.mxu0
        %v3225 = vadd.f32 %v3176, %v3224
        %3226 = vmatmul.bf16.gmra.mxu0 %v2911
        %v3227 = vpop.f32.mrf.mxu0
        %v3228 = vadd.f32 %v3179, %v3227
        %v3229 = vpop.f32.mrf.mxu0
        %v3230 = vadd.f32 %v3181, %v3229
        %3231 = vmatmul.bf16.gmra.mxu0 %v2915
        %v3232 = vpop.f32.mrf.mxu0
        %v3233 = vadd.f32 %v3184, %v3232
        %v3234 = vpop.f32.mrf.mxu0
        %v3235 = vadd.f32 %v3186, %v3234
        %3236 = vmatmul.bf16.gmra.mxu0 %v2919
        %v3237 = vpop.f32.mrf.mxu0
        %v3238 = vadd.f32 %v3189, %v3237
        %v3239 = vpop.f32.mrf.mxu0
        %v3240 = vadd.f32 %v3191, %v3239
        %3241 = vmatmul.bf16.gmra.mxu0 %v2923
        %v3242 = vpop.f32.mrf.mxu0
        %v3243 = vadd.f32 %v3194, %v3242
        %v3244 = vpop.f32.mrf.mxu0
        %v3245 = vadd.f32 %v3196, %v3244
        %3246 = vmatmul.bf16.gmra.mxu0 %v2927
        %v3247 = vpop.f32.mrf.mxu0
        %v3248 = vadd.f32 %v3199, %v3247
        %v3249 = vpop.f32.mrf.mxu0
        %v3250 = vadd.f32 %v3201, %v3249
        %3251 = vdwg.mxu0
        %3252 = vmatpush.bf16.msra.mxu0 %v3113
        %3253 = vmatpush.bf16.msra.mxu0 %v3112
        %3254 = vmatpush.bf16.msra.mxu0 %v3111
        %3255 = vmatpush.bf16.msra.mxu0 %v3110
        %3256 = vmatpush.bf16.msra.mxu0 %v3109
        %3257 = vmatpush.bf16.msra.mxu0 %v3108
        %3258 = vmatpush.bf16.msra.mxu0 %v3107
        %3259 = vmatpush.bf16.msra.mxu0 %v3106
        %3260 = vmatmul.bf16.gmra.mxu0 %v2900
        %v3261 = vpop.f32.mrf.mxu0
        %v3262 = vadd.f32 %v3213, %v3261
        %v3263 = vpop.f32.mrf.mxu0
        %v3264 = vadd.f32 %v3215, %v3263
        %3265 = vmatmul.bf16.gmra.mxu0 %v2904
        %v3266 = vpop.f32.mrf.mxu0
        %v3267 = vadd.f32 %v3218, %v3266
        %v3268 = vpop.f32.mrf.mxu0
        %v3269 = vadd.f32 %v3220, %v3268
        %3270 = vmatmul.bf16.gmra.mxu0 %v2908
        %v3271 = vpop.f32.mrf.mxu0
        %v3272 = vadd.f32 %v3223, %v3271
        %v3273 = vpop.f32.mrf.mxu0
        %v3274 = vadd.f32 %v3225, %v3273
        %3275 = vmatmul.bf16.gmra.mxu0 %v2912
        %v3276 = vpop.f32.mrf.mxu0
        %v3277 = vadd.f32 %v3228, %v3276
        %v3278 = vpop.f32.mrf.mxu0
        %v3279 = vadd.f32 %v3230, %v3278
        %3280 = vmatmul.bf16.gmra.mxu0 %v2916
        %v3281 = vpop.f32.mrf.mxu0
        %v3282 = vadd.f32 %v3233, %v3281
        %v3283 = vpop.f32.mrf.mxu0
        %v3284 = vadd.f32 %v3235, %v3283
        %3285 = vmatmul.bf16.gmra.mxu0 %v2920
        %v3286 = vpop.f32.mrf.mxu0
        %v3287 = vadd.f32 %v3238, %v3286
        %v3288 = vpop.f32.mrf.mxu0
        %v3289 = vadd.f32 %v3240, %v3288
        %3290 = vmatmul.bf16.gmra.mxu0 %v2924
        %v3291 = vpop.f32.mrf.mxu0
        %v3292 = vadd.f32 %v3243, %v3291
        %v3293 = vpop.f32.mrf.mxu0
        %v3294 = vadd.f32 %v3245, %v3293
        %3295 = vmatmul.bf16.gmra.mxu0 %v2928
        %v3296 = vpop.f32.mrf.mxu0
        %v3297 = vadd.f32 %v3248, %v3296
        %v3298 = vpop.f32.mrf.mxu0
        %v3299 = vadd.f32 %v3250, %v3298
        %3300 = vdwg.mxu0
        %3301 = vmatpush.bf16.msra.mxu0 %v3121
        %3302 = vmatpush.bf16.msra.mxu0 %v3120
        %3303 = vmatpush.bf16.msra.mxu0 %v3119
        %3304 = vmatpush.bf16.msra.mxu0 %v3118
        %3305 = vmatpush.bf16.msra.mxu0 %v3117
        %3306 = vmatpush.bf16.msra.mxu0 %v3116
        %3307 = vmatpush.bf16.msra.mxu0 %v3115
        %3308 = vmatpush.bf16.msra.mxu0 %v3114
        %3309 = vmatmul.bf16.gmra.mxu0 %v2901
        %v3310 = vpop.f32.mrf.mxu0
        %v3311 = vadd.f32 %v3262, %v3310
        %v3312 = vpop.f32.mrf.mxu0
        %v3313 = vadd.f32 %v3264, %v3312
        %3314 = vmatmul.bf16.gmra.mxu0 %v2905
        %v3315 = vpop.f32.mrf.mxu0
        %v3316 = vadd.f32 %v3267, %v3315
        %v3317 = vpop.f32.mrf.mxu0
        %v3318 = vadd.f32 %v3269, %v3317
        %3319 = vmatmul.bf16.gmra.mxu0 %v2909
        %v3320 = vpop.f32.mrf.mxu0
        %v3321 = vadd.f32 %v3272, %v3320
        %v3322 = vpop.f32.mrf.mxu0
        %v3323 = vadd.f32 %v3274, %v3322
        %3324 = vmatmul.bf16.gmra.mxu0 %v2913
        %v3325 = vpop.f32.mrf.mxu0
        %v3326 = vadd.f32 %v3277, %v3325
        %v3327 = vpop.f32.mrf.mxu0
        %v3328 = vadd.f32 %v3279, %v3327
        %3329 = vmatmul.bf16.gmra.mxu0 %v2917
        %v3330 = vpop.f32.mrf.mxu0
        %v3331 = vadd.f32 %v3282, %v3330
        %v3332 = vpop.f32.mrf.mxu0
        %v3333 = vadd.f32 %v3284, %v3332
        %3334 = vmatmul.bf16.gmra.mxu0 %v2921
        %v3335 = vpop.f32.mrf.mxu0
        %v3336 = vadd.f32 %v3287, %v3335
        %v3337 = vpop.f32.mrf.mxu0
        %v3338 = vadd.f32 %v3289, %v3337
        %3339 = vmatmul.bf16.gmra.mxu0 %v2925
        %v3340 = vpop.f32.mrf.mxu0
        %v3341 = vadd.f32 %v3292, %v3340
        %v3342 = vpop.f32.mrf.mxu0
        %v3343 = vadd.f32 %v3294, %v3342
        %3344 = vmatmul.bf16.gmra.mxu0 %v2929
        %v3345 = vpop.f32.mrf.mxu0
        %v3346 = vadd.f32 %v3297, %v3345
        %v3347 = vpop.f32.mrf.mxu0
        %v3348 = vadd.f32 %v3299, %v3347
        %3349 = vdwg.mxu0
        %v3350 = vld [vmem:[%s7] sm:$0x1]
        %v3352 = vperm.slane %v3350, 0
        %v3354 = vadd.f32 %v3311, %v3352
        %v3355 = vadd.f32 %v3313, %v3352
        %v3356 = vadd.f32 %v3316, %v3352
        %v3357 = vadd.f32 %v3318, %v3352
        %v3358 = vadd.f32 %v3321, %v3352
        %v3359 = vadd.f32 %v3323, %v3352
        %v3360 = vadd.f32 %v3326, %v3352
        %v3361 = vadd.f32 %v3328, %v3352
        %v3362 = vadd.f32 %v3331, %v3352
        %v3363 = vadd.f32 %v3333, %v3352
        %v3364 = vadd.f32 %v3336, %v3352
        %v3365 = vadd.f32 %v3338, %v3352
        %v3366 = vadd.f32 %v3341, %v3352
        %v3367 = vadd.f32 %v3343, %v3352
        %v3368 = vadd.f32 %v3346, %v3352
        %v3369 = vadd.f32 %v3348, %v3352
        %3370 = vst [vmem:[%s332] sm:$0xff] %v3354
        %3371 = vst [vmem:[%s332 + $0x8] sm:$0xff] %v3355
        %3372 = vst [vmem:[%s332 + $0x10] sm:$0xff] %v3356
        %3373 = vst [vmem:[%s332 + $0x18] sm:$0xff] %v3357
        %3374 = vst [vmem:[%s332 + $0x20] sm:$0xff] %v3358
        %3375 = vst [vmem:[%s332 + $0x28] sm:$0xff] %v3359
        %3376 = vst [vmem:[%s332 + $0x30] sm:$0xff] %v3360
        %3377 = vst [vmem:[%s332 + $0x38] sm:$0xff] %v3361
        %3378 = vst [vmem:[%s332 + $0x40] sm:$0xff] %v3362
        %3379 = vst [vmem:[%s332 + $0x48] sm:$0xff] %v3363
        %3380 = vst [vmem:[%s332 + $0x50] sm:$0xff] %v3364
        %3381 = vst [vmem:[%s332 + $0x58] sm:$0xff] %v3365
        %3382 = vst [vmem:[%s332 + $0x60] sm:$0xff] %v3366
        %3383 = vst [vmem:[%s332 + $0x68] sm:$0xff] %v3367
        %3384 = vst [vmem:[%s332 + $0x70] sm:$0xff] %v3368
        %3385 = vst [vmem:[%s332 + $0x78] sm:$0xff] %v3369
      $region68: #{rgcn_forward_pallas.1} parent=51 // pred_fallthru
        _
      %s3386 = smul.u32 16, %s24
      %p3387 = scmp.lt.s32.totalorder %s23, 1
      %s3388 = scalar_select %p3387, %s23, 1
      %p3389 = scmp.lt.s32.totalorder %s3386, 15
      %s3390 = scalar_select %p3389, %s3386, 15
      %s3391 = smul.addr %s3388, 16
      %s3392 = sadd.s32 %s3390, %s3391
      %s3393 = smul.addr %s3392, 8
      %s3394 = scalar_lea.vmem %s8, %s3393
      // Predicated region
      $region69: #{rgcn_forward_pallas.1} parent=51 // pred_check
        %p3395 = pneg %p224
      $region70: #{rgcn_forward_pallas.1} parent=51 // pred_check_branch
        %3397 = sbr.rel (%p3395) target = $region72
      $region71: #{rgcn_forward_pallas.1} parent=51 // pred_region
        %s3398 = smul.u32 16, %s24
      $region72: #{rgcn_forward_pallas.1} parent=51 // pred_fallthru
        _
    $region52: #{rgcn_forward_pallas.1} parent=5 // pred_fallthru
      _
    %p3399 = scmp.le.s32.totalorder 2, %s14
    // Predicated region
    $region73: #{rgcn_forward_pallas.1} parent=5 // pred_check
      %p3400 = pneg %p3399
    $region74: #{rgcn_forward_pallas.1} parent=5 // pred_check_branch
      %3402 = sbr.rel (%p3400) target = $region76
    $region75: #{rgcn_forward_pallas.1} parent=5 // pred_region
      %s3403 = ssub.s32 %s14, 2
      // Predicated region
      $region77: #{rgcn_forward_pallas.1} parent=75 // pred_check
        %p3404 = pneg %p230
      $region78: #{rgcn_forward_pallas.1} parent=75 // pred_check_branch
        %3406 = sbr.rel (%p3404) target = $region80
      $region79: #{rgcn_forward_pallas.1} parent=75 // pred_region
        %s3407 = smul.u32 16, %s26
        %p3408 = scmp.lt.s32.totalorder %s25, 1
        %s3409 = scalar_select %p3408, %s25, 1
        %p3410 = scmp.lt.s32.totalorder %s3407, 15
        %s3411 = scalar_select %p3410, %s3407, 15
        %s3412 = smul.addr %s3409, 16
        %s3413 = sadd.s32 %s3411, %s3412
        %s3414 = smul.addr %s3413, 8
        %s3415 = scalar_lea.vmem %s8, %s3414
      $region80: #{rgcn_forward_pallas.1} parent=75 // pred_fallthru
        _
    $region76: #{rgcn_forward_pallas.1} parent=5 // pred_fallthru
      _
  $region6: #{rgcn_forward_pallas.1} parent=0 // loop_footer
    %s18 = sadd.s32 1, %s14
  $region7: #{rgcn_forward_pallas.1} parent=0 // loop_footer_branch
    %13 = sbr.rel target = $region3
  $region8: #{rgcn_forward_pallas.1} parent=0 // loop_exit
    _

</llo_original>
